<compile_context>
chip_gen: v7x
topology: tpu7x:2x2x1
jax: 0.10.0
libtpu: 0.0.40
codegen_flags: <defaults>
</compile_context>

<pallas_src>
import functools
import math

import jax
import jax.numpy as jnp
import numpy as np
from jax.experimental import pallas as pl
from jax.experimental.pallas import tpu as pltpu

_NEG_LARGE = -1e30  # finite masked-fill value (torch uses -inf; finite keeps
                    # fully-masked rows NaN-free; identical softmax otherwise)
_LN_EPS = 1e-5      # torch nn.LayerNorm default


# ---------------------------------------------------------------------------
# Math shared by the Pallas kernel and the pure-JAX oracle.
# ---------------------------------------------------------------------------
def _layer_norm(x, gamma, beta):
    x = x.astype(jnp.float32)
    mean = jnp.mean(x, axis=-1, keepdims=True)
    var = jnp.mean((x - mean) ** 2, axis=-1, keepdims=True)
    return (x - mean) * jax.lax.rsqrt(var + _LN_EPS) * gamma + beta


def _softmax_last(s, *, in_kernel, approx):
    s = s - jnp.max(s, axis=-1, keepdims=True)
    e = jnp.exp(s)
    denom = jnp.sum(e, axis=-1, keepdims=True)
    if in_kernel:
        # reciprocal-multiply; approx=True lowers to the (idle) EUP vrcp slot.
        return e * pl.reciprocal(denom, approx=approx)
    return e / denom


def _mha_block(xq, xkv, wq, bq, wk, bk, wv, bv, wo, bo, *,
               num_heads, d_k, bias, in_kernel, approx):
    """Multi-head attention for ONE batch element.

    xq: (S_q, D), xkv: (S_kv, D).  Heads are batched inside a single
    dot_general (no per-head loop, no concat, no materialized K^T).
    """
    dtype = xq.dtype
    s_q, s_kv = xq.shape[0], xkv.shape[0]
    q = (jnp.dot(xq, wq, preferred_element_type=jnp.float32) + bq).astype(dtype)
    k = (jnp.dot(xkv, wk, preferred_element_type=jnp.float32) + bk).astype(dtype)
    v = (jnp.dot(xkv, wv, preferred_element_type=jnp.float32) + bv).astype(dtype)
    qh = q.reshape(s_q, num_heads, d_k).transpose(1, 0, 2)    # (H, Sq, dk)
    kh = k.reshape(s_kv, num_heads, d_k).transpose(1, 0, 2)   # (H, Skv, dk)
    vh = v.reshape(s_kv, num_heads, d_k).transpose(1, 0, 2)   # (H, Skv, dk)
    # Reference: K.permute(0,1,3,2) makes K.shape[-2] == d_k, so divide by d_k.
    scores = jnp.einsum("hqd,hkd->hqk", qh, kh,
                        preferred_element_type=jnp.float32) * (1.0 / d_k)
    if bias is not None:
        scores = scores + bias[None, :, :]   # additive mask bias (0 / -1e30)
    attn = _softmax_last(scores, in_kernel=in_kernel, approx=approx)
    ctx = jnp.einsum("hqk,hkd->hqd", attn.astype(dtype), vh,
                     preferred_element_type=jnp.float32)       # (H, Sq, dk)
    ctx = ctx.transpose(1, 0, 2).reshape(s_q, num_heads * d_k).astype(dtype)
    return jnp.dot(ctx, wo, preferred_element_type=jnp.float32) + bo


def _decoder_block(x, enc, bias, params, *, num_heads, d_k, in_kernel, approx):
    (wq1, bq1, wk1, bk1, wv1, bv1, wo1, bo1, g1, be1,
     wq2, bq2, wk2, bk2, wv2, bv2, wo2, bo2, g2, be2,
     wf1, bf1, wf2, bf2, g3, be3) = params
    dtype = x.dtype
    # masked self-attention + residual + LN
    mmha = _mha_block(x, x, wq1, bq1, wk1, bk1, wv1, bv1, wo1, bo1,
                      num_heads=num_heads, d_k=d_k, bias=bias,
                      in_kernel=in_kernel, approx=approx)
    h = _layer_norm(x.astype(jnp.float32) + mmha, g1, be1).astype(dtype)
    # cross-attention (reference passes no mask) + residual + LN
    cmha = _mha_block(h, enc, wq2, bq2, wk2, bk2, wv2, bv2, wo2, bo2,
                      num_heads=num_heads, d_k=d_k, bias=None,
                      in_kernel=in_kernel, approx=approx)
    h = _layer_norm(h.astype(jnp.float32) + cmha, g2, be2).astype(dtype)
    # position-wise FFN + residual + LN
    f = jnp.maximum(jnp.dot(h, wf1, preferred_element_type=jnp.float32) + bf1,
                    0.0).astype(dtype)
    ffn = jnp.dot(f, wf2, preferred_element_type=jnp.float32) + bf2
    return _layer_norm(h.astype(jnp.float32) + ffn, g3, be3)   # f32


# ---------------------------------------------------------------------------
# Pallas kernel: one grid step == one batch element, fully in VMEM.
# ---------------------------------------------------------------------------
def _decoder_kernel(*refs, s_q, d_model, d_pad, num_heads, d_k,
                    has_mask, approx):
    if has_mask:
        x_ref, enc_ref, bias_ref, *rest = refs
        bias = bias_ref[0]                       # (S, S) f32 additive bias
    else:
        x_ref, enc_ref, *rest = refs
        bias = None
    *param_refs, out_ref = rest
    params = tuple(r[...] for r in param_refs)

    out = _decoder_block(x_ref[0], enc_ref[0], bias, params,
                         num_heads=num_heads, d_k=d_k,
                         in_kernel=True, approx=approx)          # (S, D) f32
    if d_pad > d_model:
        # pad to a lane-dense (multiple-of-128) slab -> unmasked vector stores
        pad = jnp.zeros((s_q, d_pad - d_model), dtype=out.dtype)
        out = jnp.concatenate([out, pad], axis=-1)
    out_ref[0] = out.astype(out_ref.dtype)


def decoder_layer(x, encoder_output, params, num_heads, mask=None, *,
                  compute_dtype=jnp.float32,
                  approx_reciprocal=False,
                  vmem_limit_bytes=None):
    B, S, D = x.shape
    Be, S_enc, De = encoder_output.shape
    assert Be == B and De == D
    assert D % num_heads == 0
    d_k = D // num_heads
    d_pad = ((D + 127) // 128) * 128            # lane-dense output width

    xq = x.astype(compute_dtype)
    enc = encoder_output.astype(compute_dtype)
    params = tuple(jnp.asarray(p).astype(compute_dtype) for p in params)

    has_mask = mask is not None
    inputs = [xq, enc]
    in_specs = [
        pl.BlockSpec((1, S, D), lambda b: (b, 0, 0)),
        pl.BlockSpec((1, S_enc, D), lambda b: (b, 0, 0)),
    ]
    if has_mask:
        m = jnp.asarray(mask).reshape((-1, S, S))
        mb = m.shape[0]
        assert mb in (1, B), "mask must broadcast over batch"
        bias = jnp.where(m != 0, _NEG_LARGE, 0.0).astype(jnp.float32)
        inputs.append(bias)
        if mb == 1:
            in_specs.append(pl.BlockSpec((1, S, S), lambda b: (0, 0, 0)))
        else:
            in_specs.append(pl.BlockSpec((1, S, S), lambda b: (b, 0, 0)))
    # Weights: full-shape blocks with a constant index_map -> VMEM-resident,
    # DMA'd once, reused across every grid step.
    for p in params:
        in_specs.append(pl.BlockSpec(p.shape, lambda b, _nd=p.ndim: (0,) * _nd))
        inputs.append(p)

    if vmem_limit_bytes is None:
        db = jnp.dtype(compute_dtype).itemsize
        weight_bytes = sum(int(np.prod(p.shape)) * db for p in params)
        act_bytes = 2 * (S * D + S_enc * D) * db              # double-buffered blocks
        score_bytes = num_heads * S * max(S, S_enc) * 4       # one f32 score block live
        ffn_bytes = S * params[20].shape[1] * 4               # ReLU activation (S, d_ff)
        out_bytes = 2 * S * d_pad * 4
        est = weight_bytes + act_bytes + score_bytes + ffn_bytes + out_bytes
        # 2x headroom for temporaries/relayouts; clamp under the v7x 64 MiB
        # physical ceiling (v5e/v6e have 128 MiB, so this is always safe).
        vmem_limit_bytes = int(min(max(2 * est, 16 * 1024 * 1024),
                                   64 * 1024 * 1024))

    kernel = functools.partial(
        _decoder_kernel, s_q=S, d_model=D, d_pad=d_pad,
        num_heads=num_heads, d_k=d_k, has_mask=has_mask,
        approx=approx_reciprocal)

    out = pl.pallas_call(
        kernel,
        grid=(B,),
        out_shape=jax.ShapeDtypeStruct((B, S, d_pad), jnp.float32),
        in_specs=in_specs,
        out_specs=pl.BlockSpec((1, S, d_pad), lambda b: (b, 0, 0)),
        compiler_params=pltpu.CompilerParams(
            dimension_semantics=("parallel",),
            vmem_limit_bytes=vmem_limit_bytes),
    )(*inputs)
    return out[:, :, :D]


# ---------------------------------------------------------------------------
# Pure-JAX oracle (f32), mirroring the PyTorch forward op-for-op.
# ---------------------------------------------------------------------------
def _reference_decoder(x, enc, mask, params, num_heads):
    B, S, D = x.shape
    d_k = D // num_heads
    outs = []
    for b in range(B):
        if mask is None:
            bias = None
        else:
            m = jnp.asarray(mask).reshape((-1, S, S))
            mb = m[b] if m.shape[0] > 1 else m[0]
            bias = jnp.where(mb != 0, _NEG_LARGE, 0.0).astype(jnp.float32)
        outs.append(_decoder_block(
            x[b].astype(jnp.float32), enc[b].astype(jnp.float32), bias,
            tuple(p.astype(jnp.float32) for p in params),
            num_heads=num_heads, d_k=d_k, in_kernel=False, approx=False))
    return jnp.stack(outs, axis=0)


# ---------------------------------------------------------------------------
# Deterministic parameter construction (torch nn.Linear-style uniform init,
# LayerNorm gamma=1 / beta=0).  Weights stored as (in, out); biases as (1, out).
# ---------------------------------------------------------------------------
def init_params(key, d_model, d_ff):
    def linear(k, din, dout):
        k1, k2 = jax.random.split(k)
        bound = 1.0 / math.sqrt(din)
        w = jax.random.uniform(k1, (din, dout), jnp.float32, -bound, bound)
        b = jax.random.uniform(k2, (1, dout), jnp.float32, -bound, bound)
        return w, b

    keys = jax.random.split(key, 10)
    wq1, bq1 = linear(keys[0], d_model, d_model)
    wk1, bk1 = linear(keys[1], d_model, d_model)
    wv1, bv1 = linear(keys[2], d_model, d_model)
    wo1, bo1 = linear(keys[3], d_model, d_model)
    g1, be1 = jnp.ones((1, d_model), jnp.float32), jnp.zeros((1, d_model), jnp.float32)
    wq2, bq2 = linear(keys[4], d_model, d_model)
    wk2, bk2 = linear(keys[5], d_model, d_model)
    wv2, bv2 = linear(keys[6], d_model, d_model)
    wo2, bo2 = linear(keys[7], d_model, d_model)
    g2, be2 = jnp.ones((1, d_model), jnp.float32), jnp.zeros((1, d_model), jnp.float32)
    wf1, bf1 = linear(keys[8], d_model, d_ff)
    wf2, bf2 = linear(keys[9], d_ff, d_model)
    g3, be3 = jnp.ones((1, d_model), jnp.float32), jnp.zeros((1, d_model), jnp.float32)
    return (wq1, bq1, wk1, bk1, wv1, bv1, wo1, bo1, g1, be1,
            wq2, bq2, wk2, bk2, wv2, bv2, wo2, bo2, g2, be2,
            wf1, bf1, wf2, bf2, g3, be3)


if __name__ == "__main__":
    B, S, D, H, DFF = 2, 8, 32, 4, 64
    key = jax.random.PRNGKey(0)
    kx, kenc, kp = jax.random.split(key, 3)
    x = jax.random.normal(kx, (B, S, D), jnp.float32)
    enc_out = jax.random.normal(kenc, (B, S, D), jnp.float32)
    params = init_params(kp, D, DFF)

    # --- no mask (mask path statically removed from the kernel) ---
    out = decoder_layer(x, enc_out, params, num_heads=H, mask=None)
    out = jax.block_until_ready(out)
    ref = _reference_decoder(x, enc_out, None, params, H)
    np.testing.assert_allclose(np.asarray(out), np.asarray(ref),
                               rtol=1e-4, atol=1e-4)

    # --- causal mask (exercises the masked self-attention bias path) ---
    causal = jnp.triu(jnp.ones((S, S), jnp.int32), k=1)
    out_m = decoder_layer(x, enc_out, params, num_heads=H, mask=causal)
    out_m = jax.block_until_ready(out_m)
    ref_m = _reference_decoder(x, enc_out, causal, params, H)
    np.testing.assert_allclose(np.asarray(out_m), np.asarray(ref_m),
                               rtol=1e-4, atol=1e-4)

    print("KERNEL_OK")
</pallas_src>

<mosaic_0001>
module attributes {stable_mosaic.version = 11 : i64} {
  func.func @_decoder_kernel(%arg0: i32, %arg1: memref<1x8x32xf32, #tpu.memory_space<vmem>>, %arg2: memref<1x8x32xf32, #tpu.memory_space<vmem>>, %arg3: memref<32x32xf32, #tpu.memory_space<vmem>>, %arg4: memref<1x32xf32, #tpu.memory_space<vmem>>, %arg5: memref<32x32xf32, #tpu.memory_space<vmem>>, %arg6: memref<1x32xf32, #tpu.memory_space<vmem>>, %arg7: memref<32x32xf32, #tpu.memory_space<vmem>>, %arg8: memref<1x32xf32, #tpu.memory_space<vmem>>, %arg9: memref<32x32xf32, #tpu.memory_space<vmem>>, %arg10: memref<1x32xf32, #tpu.memory_space<vmem>>, %arg11: memref<1x32xf32, #tpu.memory_space<vmem>>, %arg12: memref<1x32xf32, #tpu.memory_space<vmem>>, %arg13: memref<32x32xf32, #tpu.memory_space<vmem>>, %arg14: memref<1x32xf32, #tpu.memory_space<vmem>>, %arg15: memref<32x32xf32, #tpu.memory_space<vmem>>, %arg16: memref<1x32xf32, #tpu.memory_space<vmem>>, %arg17: memref<32x32xf32, #tpu.memory_space<vmem>>, %arg18: memref<1x32xf32, #tpu.memory_space<vmem>>, %arg19: memref<32x32xf32, #tpu.memory_space<vmem>>, %arg20: memref<1x32xf32, #tpu.memory_space<vmem>>, %arg21: memref<1x32xf32, #tpu.memory_space<vmem>>, %arg22: memref<1x32xf32, #tpu.memory_space<vmem>>, %arg23: memref<32x64xf32, #tpu.memory_space<vmem>>, %arg24: memref<1x64xf32, #tpu.memory_space<vmem>>, %arg25: memref<64x32xf32, #tpu.memory_space<vmem>>, %arg26: memref<1x32xf32, #tpu.memory_space<vmem>>, %arg27: memref<1x32xf32, #tpu.memory_space<vmem>>, %arg28: memref<1x32xf32, #tpu.memory_space<vmem>>, %arg29: memref<1x8x128xf32, #tpu.memory_space<vmem>>) attributes {dimension_semantics = [#tpu.dimension_semantics<parallel>], iteration_bounds = array<i64: 2>, scalar_prefetch = 0 : i64, scratch_operands = 0 : i64, tpu.core_type = #tpu.core_type<tc>, window_params = [{transform_indices = @transform_0, window_bounds = array<i64: 1, 8, 32>}, {transform_indices = @transform_1, window_bounds = array<i64: 1, 8, 32>}, {pipeline_mode = #tpu.pipeline_mode<synchronous>, transform_indices = @transform_2, window_bounds = array<i64: 32, 32>}, {pipeline_mode = #tpu.pipeline_mode<synchronous>, transform_indices = @transform_3, window_bounds = array<i64: 1, 32>}, {pipeline_mode = #tpu.pipeline_mode<synchronous>, transform_indices = @transform_4, window_bounds = array<i64: 32, 32>}, {pipeline_mode = #tpu.pipeline_mode<synchronous>, transform_indices = @transform_5, window_bounds = array<i64: 1, 32>}, {pipeline_mode = #tpu.pipeline_mode<synchronous>, transform_indices = @transform_6, window_bounds = array<i64: 32, 32>}, {pipeline_mode = #tpu.pipeline_mode<synchronous>, transform_indices = @transform_7, window_bounds = array<i64: 1, 32>}, {pipeline_mode = #tpu.pipeline_mode<synchronous>, transform_indices = @transform_8, window_bounds = array<i64: 32, 32>}, {pipeline_mode = #tpu.pipeline_mode<synchronous>, transform_indices = @transform_9, window_bounds = array<i64: 1, 32>}, {pipeline_mode = #tpu.pipeline_mode<synchronous>, transform_indices = @transform_10, window_bounds = array<i64: 1, 32>}, {pipeline_mode = #tpu.pipeline_mode<synchronous>, transform_indices = @transform_11, window_bounds = array<i64: 1, 32>}, {pipeline_mode = #tpu.pipeline_mode<synchronous>, transform_indices = @transform_12, window_bounds = array<i64: 32, 32>}, {pipeline_mode = #tpu.pipeline_mode<synchronous>, transform_indices = @transform_13, window_bounds = array<i64: 1, 32>}, {pipeline_mode = #tpu.pipeline_mode<synchronous>, transform_indices = @transform_14, window_bounds = array<i64: 32, 32>}, {pipeline_mode = #tpu.pipeline_mode<synchronous>, transform_indices = @transform_15, window_bounds = array<i64: 1, 32>}, {pipeline_mode = #tpu.pipeline_mode<synchronous>, transform_indices = @transform_16, window_bounds = array<i64: 32, 32>}, {pipeline_mode = #tpu.pipeline_mode<synchronous>, transform_indices = @transform_17, window_bounds = array<i64: 1, 32>}, {pipeline_mode = #tpu.pipeline_mode<synchronous>, transform_indices = @transform_18, window_bounds = array<i64: 32, 32>}, {pipeline_mode = #tpu.pipeline_mode<synchronous>, transform_indices = @transform_19, window_bounds = array<i64: 1, 32>}, {pipeline_mode = #tpu.pipeline_mode<synchronous>, transform_indices = @transform_20, window_bounds = array<i64: 1, 32>}, {pipeline_mode = #tpu.pipeline_mode<synchronous>, transform_indices = @transform_21, window_bounds = array<i64: 1, 32>}, {pipeline_mode = #tpu.pipeline_mode<synchronous>, transform_indices = @transform_22, window_bounds = array<i64: 32, 64>}, {pipeline_mode = #tpu.pipeline_mode<synchronous>, transform_indices = @transform_23, window_bounds = array<i64: 1, 64>}, {pipeline_mode = #tpu.pipeline_mode<synchronous>, transform_indices = @transform_24, window_bounds = array<i64: 64, 32>}, {pipeline_mode = #tpu.pipeline_mode<synchronous>, transform_indices = @transform_25, window_bounds = array<i64: 1, 32>}, {pipeline_mode = #tpu.pipeline_mode<synchronous>, transform_indices = @transform_26, window_bounds = array<i64: 1, 32>}, {pipeline_mode = #tpu.pipeline_mode<synchronous>, transform_indices = @transform_27, window_bounds = array<i64: 1, 32>}, {transform_indices = @transform_28, window_bounds = array<i64: 1, 8, 128>}]} {
    %c0 = arith.constant 0 : index
    %c0_0 = arith.constant 0 : index
    %0 = vector.load %arg3[%c0, %c0_0] : memref<32x32xf32, #tpu.memory_space<vmem>>, vector<32x32xf32>
    %c0_1 = arith.constant 0 : index
    %c0_2 = arith.constant 0 : index
    %1 = vector.load %arg4[%c0_1, %c0_2] : memref<1x32xf32, #tpu.memory_space<vmem>>, vector<1x32xf32>
    %c0_3 = arith.constant 0 : index
    %c0_4 = arith.constant 0 : index
    %2 = vector.load %arg5[%c0_3, %c0_4] : memref<32x32xf32, #tpu.memory_space<vmem>>, vector<32x32xf32>
    %c0_5 = arith.constant 0 : index
    %c0_6 = arith.constant 0 : index
    %3 = vector.load %arg6[%c0_5, %c0_6] : memref<1x32xf32, #tpu.memory_space<vmem>>, vector<1x32xf32>
    %c0_7 = arith.constant 0 : index
    %c0_8 = arith.constant 0 : index
    %4 = vector.load %arg7[%c0_7, %c0_8] : memref<32x32xf32, #tpu.memory_space<vmem>>, vector<32x32xf32>
    %c0_9 = arith.constant 0 : index
    %c0_10 = arith.constant 0 : index
    %5 = vector.load %arg8[%c0_9, %c0_10] : memref<1x32xf32, #tpu.memory_space<vmem>>, vector<1x32xf32>
    %c0_11 = arith.constant 0 : index
    %c0_12 = arith.constant 0 : index
    %6 = vector.load %arg9[%c0_11, %c0_12] : memref<32x32xf32, #tpu.memory_space<vmem>>, vector<32x32xf32>
    %c0_13 = arith.constant 0 : index
    %c0_14 = arith.constant 0 : index
    %7 = vector.load %arg10[%c0_13, %c0_14] : memref<1x32xf32, #tpu.memory_space<vmem>>, vector<1x32xf32>
    %c0_15 = arith.constant 0 : index
    %c0_16 = arith.constant 0 : index
    %8 = vector.load %arg11[%c0_15, %c0_16] : memref<1x32xf32, #tpu.memory_space<vmem>>, vector<1x32xf32>
    %c0_17 = arith.constant 0 : index
    %c0_18 = arith.constant 0 : index
    %9 = vector.load %arg12[%c0_17, %c0_18] : memref<1x32xf32, #tpu.memory_space<vmem>>, vector<1x32xf32>
    %c0_19 = arith.constant 0 : index
    %c0_20 = arith.constant 0 : index
    %10 = vector.load %arg13[%c0_19, %c0_20] : memref<32x32xf32, #tpu.memory_space<vmem>>, vector<32x32xf32>
    %c0_21 = arith.constant 0 : index
    %c0_22 = arith.constant 0 : index
    %11 = vector.load %arg14[%c0_21, %c0_22] : memref<1x32xf32, #tpu.memory_space<vmem>>, vector<1x32xf32>
    %c0_23 = arith.constant 0 : index
    %c0_24 = arith.constant 0 : index
    %12 = vector.load %arg15[%c0_23, %c0_24] : memref<32x32xf32, #tpu.memory_space<vmem>>, vector<32x32xf32>
    %c0_25 = arith.constant 0 : index
    %c0_26 = arith.constant 0 : index
    %13 = vector.load %arg16[%c0_25, %c0_26] : memref<1x32xf32, #tpu.memory_space<vmem>>, vector<1x32xf32>
    %c0_27 = arith.constant 0 : index
    %c0_28 = arith.constant 0 : index
    %14 = vector.load %arg17[%c0_27, %c0_28] : memref<32x32xf32, #tpu.memory_space<vmem>>, vector<32x32xf32>
    %c0_29 = arith.constant 0 : index
    %c0_30 = arith.constant 0 : index
    %15 = vector.load %arg18[%c0_29, %c0_30] : memref<1x32xf32, #tpu.memory_space<vmem>>, vector<1x32xf32>
    %c0_31 = arith.constant 0 : index
    %c0_32 = arith.constant 0 : index
    %16 = vector.load %arg19[%c0_31, %c0_32] : memref<32x32xf32, #tpu.memory_space<vmem>>, vector<32x32xf32>
    %c0_33 = arith.constant 0 : index
    %c0_34 = arith.constant 0 : index
    %17 = vector.load %arg20[%c0_33, %c0_34] : memref<1x32xf32, #tpu.memory_space<vmem>>, vector<1x32xf32>
    %c0_35 = arith.constant 0 : index
    %c0_36 = arith.constant 0 : index
    %18 = vector.load %arg21[%c0_35, %c0_36] : memref<1x32xf32, #tpu.memory_space<vmem>>, vector<1x32xf32>
    %c0_37 = arith.constant 0 : index
    %c0_38 = arith.constant 0 : index
    %19 = vector.load %arg22[%c0_37, %c0_38] : memref<1x32xf32, #tpu.memory_space<vmem>>, vector<1x32xf32>
    %c0_39 = arith.constant 0 : index
    %c0_40 = arith.constant 0 : index
    %20 = vector.load %arg23[%c0_39, %c0_40] : memref<32x64xf32, #tpu.memory_space<vmem>>, vector<32x64xf32>
    %c0_41 = arith.constant 0 : index
    %c0_42 = arith.constant 0 : index
    %21 = vector.load %arg24[%c0_41, %c0_42] : memref<1x64xf32, #tpu.memory_space<vmem>>, vector<1x64xf32>
    %c0_43 = arith.constant 0 : index
    %c0_44 = arith.constant 0 : index
    %22 = vector.load %arg25[%c0_43, %c0_44] : memref<64x32xf32, #tpu.memory_space<vmem>>, vector<64x32xf32>
    %c0_45 = arith.constant 0 : index
    %c0_46 = arith.constant 0 : index
    %23 = vector.load %arg26[%c0_45, %c0_46] : memref<1x32xf32, #tpu.memory_space<vmem>>, vector<1x32xf32>
    %c0_47 = arith.constant 0 : index
    %c0_48 = arith.constant 0 : index
    %24 = vector.load %arg27[%c0_47, %c0_48] : memref<1x32xf32, #tpu.memory_space<vmem>>, vector<1x32xf32>
    %c0_49 = arith.constant 0 : index
    %c0_50 = arith.constant 0 : index
    %25 = vector.load %arg28[%c0_49, %c0_50] : memref<1x32xf32, #tpu.memory_space<vmem>>, vector<1x32xf32>
    %c0_51 = arith.constant 0 : index
    %c0_52 = arith.constant 0 : index
    %c0_53 = arith.constant 0 : index
    %26 = vector.load %arg1[%c0_51, %c0_52, %c0_53] : memref<1x8x32xf32, #tpu.memory_space<vmem>>, vector<1x8x32xf32>
    %27 = vector.shape_cast %26 : vector<1x8x32xf32> to vector<8x32xf32>
    %c0_54 = arith.constant 0 : index
    %c0_55 = arith.constant 0 : index
    %c0_56 = arith.constant 0 : index
    %28 = vector.load %arg2[%c0_54, %c0_55, %c0_56] : memref<1x8x32xf32, #tpu.memory_space<vmem>>, vector<1x8x32xf32>
    %29 = vector.shape_cast %28 : vector<1x8x32xf32> to vector<8x32xf32>
    %cst = arith.constant dense<0.000000e+00> : vector<8x32xf32>
    %30 = tpu.matmul %27, %0, %cst {dimension_numbers = #tpu.dot_dimension_numbers<[1], [0], [0], [1], [0, 0, 1, 1], [], []>} : vector<8x32xf32>, vector<32x32xf32>, vector<8x32xf32> -> vector<8x32xf32>
    %31 = vector.broadcast %1 : vector<1x32xf32> to vector<8x32xf32>
    %32 = arith.addf %30, %31 : vector<8x32xf32>
    %cst_57 = arith.constant dense<0.000000e+00> : vector<8x32xf32>
    %33 = tpu.matmul %27, %2, %cst_57 {dimension_numbers = #tpu.dot_dimension_numbers<[1], [0], [0], [1], [0, 0, 1, 1], [], []>} : vector<8x32xf32>, vector<32x32xf32>, vector<8x32xf32> -> vector<8x32xf32>
    %34 = vector.broadcast %3 : vector<1x32xf32> to vector<8x32xf32>
    %35 = arith.addf %33, %34 : vector<8x32xf32>
    %cst_58 = arith.constant dense<0.000000e+00> : vector<8x32xf32>
    %36 = tpu.matmul %27, %4, %cst_58 {dimension_numbers = #tpu.dot_dimension_numbers<[1], [0], [0], [1], [0, 0, 1, 1], [], []>} : vector<8x32xf32>, vector<32x32xf32>, vector<8x32xf32> -> vector<8x32xf32>
    %37 = vector.broadcast %5 : vector<1x32xf32> to vector<8x32xf32>
    %38 = arith.addf %36, %37 : vector<8x32xf32>
    %39 = vector.shape_cast %32 : vector<8x32xf32> to vector<8x4x8xf32>
    %40 = tpu.transpose %39, [1, 0, 2] : vector<8x4x8xf32> -> vector<4x8x8xf32>
    %41 = vector.shape_cast %35 : vector<8x32xf32> to vector<8x4x8xf32>
    %42 = tpu.transpose %41, [1, 0, 2] : vector<8x4x8xf32> -> vector<4x8x8xf32>
    %43 = vector.shape_cast %38 : vector<8x32xf32> to vector<8x4x8xf32>
    %44 = tpu.transpose %43, [1, 0, 2] : vector<8x4x8xf32> -> vector<4x8x8xf32>
    "tpu.trace_start"() <{level = 10 : i32, message = "hqd,hkd->hqk"}> : () -> ()
    %cst_59 = arith.constant dense<0.000000e+00> : vector<4x8x8xf32>
    %45 = tpu.matmul %40, %42, %cst_59 {dimension_numbers = #tpu.dot_dimension_numbers<[2], [2], [1], [1], [0, 0, 0, 1, 1, 1], [0], [0]>} : vector<4x8x8xf32>, vector<4x8x8xf32>, vector<4x8x8xf32> -> vector<4x8x8xf32>
    "tpu.trace_stop"() : () -> ()
    %cst_60 = arith.constant 1.250000e-01 : f32
    %46 = vector.broadcast %cst_60 : f32 to vector<4x8x8xf32>
    %47 = arith.mulf %45, %46 : vector<4x8x8xf32>
    %cst_61 = arith.constant dense<0xFF800000> : vector<4x8xf32>
    %48 = vector.multi_reduction <maximumf>, %47, %cst_61 [2] : vector<4x8x8xf32> to vector<4x8xf32>
    %49 = vector.shape_cast %48 : vector<4x8xf32> to vector<4x8x1xf32>
    %50 = vector.broadcast %49 : vector<4x8x1xf32> to vector<4x8x8xf32>
    %51 = arith.subf %47, %50 : vector<4x8x8xf32>
    %52 = math.exp %51 : vector<4x8x8xf32>
    %cst_62 = arith.constant dense<0.000000e+00> : vector<4x8xf32>
    %53 = vector.multi_reduction <add>, %52, %cst_62 [2] : vector<4x8x8xf32> to vector<4x8xf32>
    %54 = vector.shape_cast %53 : vector<4x8xf32> to vector<4x8x1xf32>
    %55 = tpu.reciprocal %54 : vector<4x8x1xf32> -> vector<4x8x1xf32>
    %56 = vector.broadcast %55 : vector<4x8x1xf32> to vector<4x8x8xf32>
    %57 = arith.mulf %52, %56 : vector<4x8x8xf32>
    "tpu.trace_start"() <{level = 10 : i32, message = "hqk,hkd->hqd"}> : () -> ()
    %cst_63 = arith.constant dense<0.000000e+00> : vector<4x8x8xf32>
    %58 = tpu.matmul %57, %44, %cst_63 {dimension_numbers = #tpu.dot_dimension_numbers<[2], [1], [1], [2], [0, 0, 0, 1, 1, 2], [0], [0]>} : vector<4x8x8xf32>, vector<4x8x8xf32>, vector<4x8x8xf32> -> vector<4x8x8xf32>
    "tpu.trace_stop"() : () -> ()
    %59 = tpu.transpose %58, [1, 0, 2] : vector<4x8x8xf32> -> vector<8x4x8xf32>
    %60 = vector.shape_cast %59 : vector<8x4x8xf32> to vector<8x32xf32>
    %cst_64 = arith.constant dense<0.000000e+00> : vector<8x32xf32>
    %61 = tpu.matmul %60, %6, %cst_64 {dimension_numbers = #tpu.dot_dimension_numbers<[1], [0], [0], [1], [0, 0, 1, 1], [], []>} : vector<8x32xf32>, vector<32x32xf32>, vector<8x32xf32> -> vector<8x32xf32>
    %62 = vector.broadcast %7 : vector<1x32xf32> to vector<8x32xf32>
    %63 = arith.addf %61, %62 : vector<8x32xf32>
    %64 = arith.addf %27, %63 : vector<8x32xf32>
    %cst_65 = arith.constant dense<0.000000e+00> : vector<8xf32>
    %65 = vector.multi_reduction <add>, %64, %cst_65 [1] : vector<8x32xf32> to vector<8xf32>
    %66 = vector.shape_cast %65 : vector<8xf32> to vector<8x1xf32>
    %cst_66 = arith.constant 3.200000e+01 : f32
    %67 = vector.broadcast %cst_66 : f32 to vector<8x1xf32>
    %68 = arith.divf %66, %67 : vector<8x1xf32>
    %69 = vector.broadcast %68 : vector<8x1xf32> to vector<8x32xf32>
    %70 = arith.subf %64, %69 : vector<8x32xf32>
    %71 = arith.mulf %70, %70 : vector<8x32xf32>
    %cst_67 = arith.constant dense<0.000000e+00> : vector<8xf32>
    %72 = vector.multi_reduction <add>, %71, %cst_67 [1] : vector<8x32xf32> to vector<8xf32>
    %73 = vector.shape_cast %72 : vector<8xf32> to vector<8x1xf32>
    %cst_68 = arith.constant 3.200000e+01 : f32
    %74 = vector.broadcast %cst_68 : f32 to vector<8x1xf32>
    %75 = arith.divf %73, %74 : vector<8x1xf32>
    %76 = vector.broadcast %68 : vector<8x1xf32> to vector<8x32xf32>
    %77 = arith.subf %64, %76 : vector<8x32xf32>
    %cst_69 = arith.constant 9.99999974E-6 : f32
    %78 = vector.broadcast %cst_69 : f32 to vector<8x1xf32>
    %79 = arith.addf %75, %78 : vector<8x1xf32>
    %80 = math.rsqrt %79 : vector<8x1xf32>
    %81 = vector.broadcast %80 : vector<8x1xf32> to vector<8x32xf32>
    %82 = arith.mulf %77, %81 : vector<8x32xf32>
    %83 = vector.broadcast %8 : vector<1x32xf32> to vector<8x32xf32>
    %84 = arith.mulf %82, %83 : vector<8x32xf32>
    %85 = vector.broadcast %9 : vector<1x32xf32> to vector<8x32xf32>
    %86 = arith.addf %84, %85 : vector<8x32xf32>
    %cst_70 = arith.constant dense<0.000000e+00> : vector<8x32xf32>
    %87 = tpu.matmul %86, %10, %cst_70 {dimension_numbers = #tpu.dot_dimension_numbers<[1], [0], [0], [1], [0, 0, 1, 1], [], []>} : vector<8x32xf32>, vector<32x32xf32>, vector<8x32xf32> -> vector<8x32xf32>
    %88 = vector.broadcast %11 : vector<1x32xf32> to vector<8x32xf32>
    %89 = arith.addf %87, %88 : vector<8x32xf32>
    %cst_71 = arith.constant dense<0.000000e+00> : vector<8x32xf32>
    %90 = tpu.matmul %29, %12, %cst_71 {dimension_numbers = #tpu.dot_dimension_numbers<[1], [0], [0], [1], [0, 0, 1, 1], [], []>} : vector<8x32xf32>, vector<32x32xf32>, vector<8x32xf32> -> vector<8x32xf32>
    %91 = vector.broadcast %13 : vector<1x32xf32> to vector<8x32xf32>
    %92 = arith.addf %90, %91 : vector<8x32xf32>
    %cst_72 = arith.constant dense<0.000000e+00> : vector<8x32xf32>
    %93 = tpu.matmul %29, %14, %cst_72 {dimension_numbers = #tpu.dot_dimension_numbers<[1], [0], [0], [1], [0, 0, 1, 1], [], []>} : vector<8x32xf32>, vector<32x32xf32>, vector<8x32xf32> -> vector<8x32xf32>
    %94 = vector.broadcast %15 : vector<1x32xf32> to vector<8x32xf32>
    %95 = arith.addf %93, %94 : vector<8x32xf32>
    %96 = vector.shape_cast %89 : vector<8x32xf32> to vector<8x4x8xf32>
    %97 = tpu.transpose %96, [1, 0, 2] : vector<8x4x8xf32> -> vector<4x8x8xf32>
    %98 = vector.shape_cast %92 : vector<8x32xf32> to vector<8x4x8xf32>
    %99 = tpu.transpose %98, [1, 0, 2] : vector<8x4x8xf32> -> vector<4x8x8xf32>
    %100 = vector.shape_cast %95 : vector<8x32xf32> to vector<8x4x8xf32>
    %101 = tpu.transpose %100, [1, 0, 2] : vector<8x4x8xf32> -> vector<4x8x8xf32>
    "tpu.trace_start"() <{level = 10 : i32, message = "hqd,hkd->hqk"}> : () -> ()
    %cst_73 = arith.constant dense<0.000000e+00> : vector<4x8x8xf32>
    %102 = tpu.matmul %97, %99, %cst_73 {dimension_numbers = #tpu.dot_dimension_numbers<[2], [2], [1], [1], [0, 0, 0, 1, 1, 1], [0], [0]>} : vector<4x8x8xf32>, vector<4x8x8xf32>, vector<4x8x8xf32> -> vector<4x8x8xf32>
    "tpu.trace_stop"() : () -> ()
    %cst_74 = arith.constant 1.250000e-01 : f32
    %103 = vector.broadcast %cst_74 : f32 to vector<4x8x8xf32>
    %104 = arith.mulf %102, %103 : vector<4x8x8xf32>
    %cst_75 = arith.constant dense<0xFF800000> : vector<4x8xf32>
    %105 = vector.multi_reduction <maximumf>, %104, %cst_75 [2] : vector<4x8x8xf32> to vector<4x8xf32>
    %106 = vector.shape_cast %105 : vector<4x8xf32> to vector<4x8x1xf32>
    %107 = vector.broadcast %106 : vector<4x8x1xf32> to vector<4x8x8xf32>
    %108 = arith.subf %104, %107 : vector<4x8x8xf32>
    %109 = math.exp %108 : vector<4x8x8xf32>
    %cst_76 = arith.constant dense<0.000000e+00> : vector<4x8xf32>
    %110 = vector.multi_reduction <add>, %109, %cst_76 [2] : vector<4x8x8xf32> to vector<4x8xf32>
    %111 = vector.shape_cast %110 : vector<4x8xf32> to vector<4x8x1xf32>
    %112 = tpu.reciprocal %111 : vector<4x8x1xf32> -> vector<4x8x1xf32>
    %113 = vector.broadcast %112 : vector<4x8x1xf32> to vector<4x8x8xf32>
    %114 = arith.mulf %109, %113 : vector<4x8x8xf32>
    "tpu.trace_start"() <{level = 10 : i32, message = "hqk,hkd->hqd"}> : () -> ()
    %cst_77 = arith.constant dense<0.000000e+00> : vector<4x8x8xf32>
    %115 = tpu.matmul %114, %101, %cst_77 {dimension_numbers = #tpu.dot_dimension_numbers<[2], [1], [1], [2], [0, 0, 0, 1, 1, 2], [0], [0]>} : vector<4x8x8xf32>, vector<4x8x8xf32>, vector<4x8x8xf32> -> vector<4x8x8xf32>
    "tpu.trace_stop"() : () -> ()
    %116 = tpu.transpose %115, [1, 0, 2] : vector<4x8x8xf32> -> vector<8x4x8xf32>
    %117 = vector.shape_cast %116 : vector<8x4x8xf32> to vector<8x32xf32>
    %cst_78 = arith.constant dense<0.000000e+00> : vector<8x32xf32>
    %118 = tpu.matmul %117, %16, %cst_78 {dimension_numbers = #tpu.dot_dimension_numbers<[1], [0], [0], [1], [0, 0, 1, 1], [], []>} : vector<8x32xf32>, vector<32x32xf32>, vector<8x32xf32> -> vector<8x32xf32>
    %119 = vector.broadcast %17 : vector<1x32xf32> to vector<8x32xf32>
    %120 = arith.addf %118, %119 : vector<8x32xf32>
    %121 = arith.addf %86, %120 : vector<8x32xf32>
    %cst_79 = arith.constant dense<0.000000e+00> : vector<8xf32>
    %122 = vector.multi_reduction <add>, %121, %cst_79 [1] : vector<8x32xf32> to vector<8xf32>
    %123 = vector.shape_cast %122 : vector<8xf32> to vector<8x1xf32>
    %cst_80 = arith.constant 3.200000e+01 : f32
    %124 = vector.broadcast %cst_80 : f32 to vector<8x1xf32>
    %125 = arith.divf %123, %124 : vector<8x1xf32>
    %126 = vector.broadcast %125 : vector<8x1xf32> to vector<8x32xf32>
    %127 = arith.subf %121, %126 : vector<8x32xf32>
    %128 = arith.mulf %127, %127 : vector<8x32xf32>
    %cst_81 = arith.constant dense<0.000000e+00> : vector<8xf32>
    %129 = vector.multi_reduction <add>, %128, %cst_81 [1] : vector<8x32xf32> to vector<8xf32>
    %130 = vector.shape_cast %129 : vector<8xf32> to vector<8x1xf32>
    %cst_82 = arith.constant 3.200000e+01 : f32
    %131 = vector.broadcast %cst_82 : f32 to vector<8x1xf32>
    %132 = arith.divf %130, %131 : vector<8x1xf32>
    %133 = vector.broadcast %125 : vector<8x1xf32> to vector<8x32xf32>
    %134 = arith.subf %121, %133 : vector<8x32xf32>
    %cst_83 = arith.constant 9.99999974E-6 : f32
    %135 = vector.broadcast %cst_83 : f32 to vector<8x1xf32>
    %136 = arith.addf %132, %135 : vector<8x1xf32>
    %137 = math.rsqrt %136 : vector<8x1xf32>
    %138 = vector.broadcast %137 : vector<8x1xf32> to vector<8x32xf32>
    %139 = arith.mulf %134, %138 : vector<8x32xf32>
    %140 = vector.broadcast %18 : vector<1x32xf32> to vector<8x32xf32>
    %141 = arith.mulf %139, %140 : vector<8x32xf32>
    %142 = vector.broadcast %19 : vector<1x32xf32> to vector<8x32xf32>
    %143 = arith.addf %141, %142 : vector<8x32xf32>
    %cst_84 = arith.constant dense<0.000000e+00> : vector<8x64xf32>
    %144 = tpu.matmul %143, %20, %cst_84 {dimension_numbers = #tpu.dot_dimension_numbers<[1], [0], [0], [1], [0, 0, 1, 1], [], []>} : vector<8x32xf32>, vector<32x64xf32>, vector<8x64xf32> -> vector<8x64xf32>
    %145 = vector.broadcast %21 : vector<1x64xf32> to vector<8x64xf32>
    %146 = arith.addf %144, %145 : vector<8x64xf32>
    %cst_85 = arith.constant 0.000000e+00 : f32
    %147 = vector.broadcast %cst_85 : f32 to vector<8x64xf32>
    %148 = arith.maximumf %146, %147 : vector<8x64xf32>
    %cst_86 = arith.constant dense<0.000000e+00> : vector<8x32xf32>
    %149 = tpu.matmul %148, %22, %cst_86 {dimension_numbers = #tpu.dot_dimension_numbers<[1], [0], [0], [1], [0, 0, 1, 1], [], []>} : vector<8x64xf32>, vector<64x32xf32>, vector<8x32xf32> -> vector<8x32xf32>
    %150 = vector.broadcast %23 : vector<1x32xf32> to vector<8x32xf32>
    %151 = arith.addf %149, %150 : vector<8x32xf32>
    %152 = arith.addf %143, %151 : vector<8x32xf32>
    %cst_87 = arith.constant dense<0.000000e+00> : vector<8xf32>
    %153 = vector.multi_reduction <add>, %152, %cst_87 [1] : vector<8x32xf32> to vector<8xf32>
    %154 = vector.shape_cast %153 : vector<8xf32> to vector<8x1xf32>
    %cst_88 = arith.constant 3.200000e+01 : f32
    %155 = vector.broadcast %cst_88 : f32 to vector<8x1xf32>
    %156 = arith.divf %154, %155 : vector<8x1xf32>
    %157 = vector.broadcast %156 : vector<8x1xf32> to vector<8x32xf32>
    %158 = arith.subf %152, %157 : vector<8x32xf32>
    %159 = arith.mulf %158, %158 : vector<8x32xf32>
    %cst_89 = arith.constant dense<0.000000e+00> : vector<8xf32>
    %160 = vector.multi_reduction <add>, %159, %cst_89 [1] : vector<8x32xf32> to vector<8xf32>
    %161 = vector.shape_cast %160 : vector<8xf32> to vector<8x1xf32>
    %cst_90 = arith.constant 3.200000e+01 : f32
    %162 = vector.broadcast %cst_90 : f32 to vector<8x1xf32>
    %163 = arith.divf %161, %162 : vector<8x1xf32>
    %164 = vector.broadcast %156 : vector<8x1xf32> to vector<8x32xf32>
    %165 = arith.subf %152, %164 : vector<8x32xf32>
    %cst_91 = arith.constant 9.99999974E-6 : f32
    %166 = vector.broadcast %cst_91 : f32 to vector<8x1xf32>
    %167 = arith.addf %163, %166 : vector<8x1xf32>
    %168 = math.rsqrt %167 : vector<8x1xf32>
    %169 = vector.broadcast %168 : vector<8x1xf32> to vector<8x32xf32>
    %170 = arith.mulf %165, %169 : vector<8x32xf32>
    %171 = vector.broadcast %24 : vector<1x32xf32> to vector<8x32xf32>
    %172 = arith.mulf %170, %171 : vector<8x32xf32>
    %173 = vector.broadcast %25 : vector<1x32xf32> to vector<8x32xf32>
    %174 = arith.addf %172, %173 : vector<8x32xf32>
    %cst_92 = arith.constant 0.000000e+00 : f32
    %175 = vector.broadcast %cst_92 : f32 to vector<8x96xf32>
    %176 = tpu.concatenate %174, %175 in 1 : vector<8x32xf32>, vector<8x96xf32> -> vector<8x128xf32>
    %c0_93 = arith.constant 0 : index
    %c0_94 = arith.constant 0 : index
    %c0_95 = arith.constant 0 : index
    %177 = vector.load %arg29[%c0_93, %c0_94, %c0_95] : memref<1x8x128xf32, #tpu.memory_space<vmem>>, vector<1x8x128xf32>
    %178 = vector.shape_cast %177 : vector<1x8x128xf32> to vector<8x128xf32>
    %179 = vector.shape_cast %176 : vector<8x128xf32> to vector<1x8x128xf32>
    tpu.vector_store %arg29[%c0_93, %c0_94, %c0_95], %179 {strides = array<i32>} : memref<1x8x128xf32, #tpu.memory_space<vmem>>, vector<1x8x128xf32>,
    return
  }
  func.func @transform_0(%arg0: i32) -> (i32, i32, i32) {
    %c0_i32 = arith.constant 0 : i32
    %c0_i32_0 = arith.constant 0 : i32
    %c0_i32_1 = arith.constant 0 : i32
    return %arg0, %c0_i32, %c0_i32_0 : i32, i32, i32
  }
  func.func @transform_1(%arg0: i32) -> (i32, i32, i32) {
    %c0_i32 = arith.constant 0 : i32
    %c0_i32_0 = arith.constant 0 : i32
    %c0_i32_1 = arith.constant 0 : i32
    return %arg0, %c0_i32, %c0_i32_0 : i32, i32, i32
  }
  func.func @transform_2(%arg0: i32) -> (i32, i32) {
    %c0_i32 = arith.constant 0 : i32
    %c0_i32_0 = arith.constant 0 : i32
    %c0_i32_1 = arith.constant 0 : i32
    return %c0_i32, %c0_i32_0 : i32, i32
  }
  func.func @transform_3(%arg0: i32) -> (i32, i32) {
    %c0_i32 = arith.constant 0 : i32
    %c0_i32_0 = arith.constant 0 : i32
    %c0_i32_1 = arith.constant 0 : i32
    return %c0_i32, %c0_i32_0 : i32, i32
  }
  func.func @transform_4(%arg0: i32) -> (i32, i32) {
    %c0_i32 = arith.constant 0 : i32
    %c0_i32_0 = arith.constant 0 : i32
    %c0_i32_1 = arith.constant 0 : i32
    return %c0_i32, %c0_i32_0 : i32, i32
  }
  func.func @transform_5(%arg0: i32) -> (i32, i32) {
    %c0_i32 = arith.constant 0 : i32
    %c0_i32_0 = arith.constant 0 : i32
    %c0_i32_1 = arith.constant 0 : i32
    return %c0_i32, %c0_i32_0 : i32, i32
  }
  func.func @transform_6(%arg0: i32) -> (i32, i32) {
    %c0_i32 = arith.constant 0 : i32
    %c0_i32_0 = arith.constant 0 : i32
    %c0_i32_1 = arith.constant 0 : i32
    return %c0_i32, %c0_i32_0 : i32, i32
  }
  func.func @transform_7(%arg0: i32) -> (i32, i32) {
    %c0_i32 = arith.constant 0 : i32
    %c0_i32_0 = arith.constant 0 : i32
    %c0_i32_1 = arith.constant 0 : i32
    return %c0_i32, %c0_i32_0 : i32, i32
  }
  func.func @transform_8(%arg0: i32) -> (i32, i32) {
    %c0_i32 = arith.constant 0 : i32
    %c0_i32_0 = arith.constant 0 : i32
    %c0_i32_1 = arith.constant 0 : i32
    return %c0_i32, %c0_i32_0 : i32, i32
  }
  func.func @transform_9(%arg0: i32) -> (i32, i32) {
    %c0_i32 = arith.constant 0 : i32
    %c0_i32_0 = arith.constant 0 : i32
    %c0_i32_1 = arith.constant 0 : i32
    return %c0_i32, %c0_i32_0 : i32, i32
  }
  func.func @transform_10(%arg0: i32) -> (i32, i32) {
    %c0_i32 = arith.constant 0 : i32
    %c0_i32_0 = arith.constant 0 : i32
    %c0_i32_1 = arith.constant 0 : i32
    return %c0_i32, %c0_i32_0 : i32, i32
  }
  func.func @transform_11(%arg0: i32) -> (i32, i32) {
    %c0_i32 = arith.constant 0 : i32
    %c0_i32_0 = arith.constant 0 : i32
    %c0_i32_1 = arith.constant 0 : i32
    return %c0_i32, %c0_i32_0 : i32, i32
  }
  func.func @transform_12(%arg0: i32) -> (i32, i32) {
    %c0_i32 = arith.constant 0 : i32
    %c0_i32_0 = arith.constant 0 : i32
    %c0_i32_1 = arith.constant 0 : i32
    return %c0_i32, %c0_i32_0 : i32, i32
  }
  func.func @transform_13(%arg0: i32) -> (i32, i32) {
    %c0_i32 = arith.constant 0 : i32
    %c0_i32_0 = arith.constant 0 : i32
    %c0_i32_1 = arith.constant 0 : i32
    return %c0_i32, %c0_i32_0 : i32, i32
  }
  func.func @transform_14(%arg0: i32) -> (i32, i32) {
    %c0_i32 = arith.constant 0 : i32
    %c0_i32_0 = arith.constant 0 : i32
    %c0_i32_1 = arith.constant 0 : i32
    return %c0_i32, %c0_i32_0 : i32, i32
  }
  func.func @transform_15(%arg0: i32) -> (i32, i32) {
    %c0_i32 = arith.constant 0 : i32
    %c0_i32_0 = arith.constant 0 : i32
    %c0_i32_1 = arith.constant 0 : i32
    return %c0_i32, %c0_i32_0 : i32, i32
  }
  func.func @transform_16(%arg0: i32) -> (i32, i32) {
    %c0_i32 = arith.constant 0 : i32
    %c0_i32_0 = arith.constant 0 : i32
    %c0_i32_1 = arith.constant 0 : i32
    return %c0_i32, %c0_i32_0 : i32, i32
  }
  func.func @transform_17(%arg0: i32) -> (i32, i32) {
    %c0_i32 = arith.constant 0 : i32
    %c0_i32_0 = arith.constant 0 : i32
    %c0_i32_1 = arith.constant 0 : i32
    return %c0_i32, %c0_i32_0 : i32, i32
  }
  func.func @transform_18(%arg0: i32) -> (i32, i32) {
    %c0_i32 = arith.constant 0 : i32
    %c0_i32_0 = arith.constant 0 : i32
    %c0_i32_1 = arith.constant 0 : i32
    return %c0_i32, %c0_i32_0 : i32, i32
  }
  func.func @transform_19(%arg0: i32) -> (i32, i32) {
    %c0_i32 = arith.constant 0 : i32
    %c0_i32_0 = arith.constant 0 : i32
    %c0_i32_1 = arith.constant 0 : i32
    return %c0_i32, %c0_i32_0 : i32, i32
  }
  func.func @transform_20(%arg0: i32) -> (i32, i32) {
    %c0_i32 = arith.constant 0 : i32
    %c0_i32_0 = arith.constant 0 : i32
    %c0_i32_1 = arith.constant 0 : i32
    return %c0_i32, %c0_i32_0 : i32, i32
  }
  func.func @transform_21(%arg0: i32) -> (i32, i32) {
    %c0_i32 = arith.constant 0 : i32
    %c0_i32_0 = arith.constant 0 : i32
    %c0_i32_1 = arith.constant 0 : i32
    return %c0_i32, %c0_i32_0 : i32, i32
  }
  func.func @transform_22(%arg0: i32) -> (i32, i32) {
    %c0_i32 = arith.constant 0 : i32
    %c0_i32_0 = arith.constant 0 : i32
    %c0_i32_1 = arith.constant 0 : i32
    return %c0_i32, %c0_i32_0 : i32, i32
  }
  func.func @transform_23(%arg0: i32) -> (i32, i32) {
    %c0_i32 = arith.constant 0 : i32
    %c0_i32_0 = arith.constant 0 : i32
    %c0_i32_1 = arith.constant 0 : i32
    return %c0_i32, %c0_i32_0 : i32, i32
  }
  func.func @transform_24(%arg0: i32) -> (i32, i32) {
    %c0_i32 = arith.constant 0 : i32
    %c0_i32_0 = arith.constant 0 : i32
    %c0_i32_1 = arith.constant 0 : i32
    return %c0_i32, %c0_i32_0 : i32, i32
  }
  func.func @transform_25(%arg0: i32) -> (i32, i32) {
    %c0_i32 = arith.constant 0 : i32
    %c0_i32_0 = arith.constant 0 : i32
    %c0_i32_1 = arith.constant 0 : i32
    return %c0_i32, %c0_i32_0 : i32, i32
  }
  func.func @transform_26(%arg0: i32) -> (i32, i32) {
    %c0_i32 = arith.constant 0 : i32
    %c0_i32_0 = arith.constant 0 : i32
    %c0_i32_1 = arith.constant 0 : i32
    return %c0_i32, %c0_i32_0 : i32, i32
  }
  func.func @transform_27(%arg0: i32) -> (i32, i32) {
    %c0_i32 = arith.constant 0 : i32
    %c0_i32_0 = arith.constant 0 : i32
    %c0_i32_1 = arith.constant 0 : i32
    return %c0_i32, %c0_i32_0 : i32, i32
  }
  func.func @transform_28(%arg0: i32) -> (i32, i32, i32) {
    %c0_i32 = arith.constant 0 : i32
    %c0_i32_0 = arith.constant 0 : i32
    %c0_i32_1 = arith.constant 0 : i32
    return %arg0, %c0_i32, %c0_i32_0 : i32, i32, i32
  }
}

</mosaic_0001>

<llo_original>
// kernel: tpu_custom_call.1
$region0: #{tpu_custom_call.1}
  #allocation0 [shape = 'u32[]', space=smem, size = 0x4, offset = 0x4, fixed_abs, tag = 'smem constant byte address 0x4 - core index']
  #allocation1 [shape = 'u32[144,128]{1,0:T(1,128)}', space=vmem, size = 0x12000, scoped, tag = 'internal scratch']
  %s0 = inlined_call_operand.hbm [shape: f32[2,8,32], index: 0, kind: input, shape index: {}]
  %s1 = inlined_call_operand.hbm [shape: f32[2,8,32], index: 1, kind: input, shape index: {}]
  %s2 = inlined_call_operand.vmem [shape: f32[32,32], index: 2, kind: input, shape index: {}]
  %s3 = inlined_call_operand.hbm [shape: f32[1,32], index: 3, kind: input, shape index: {}]
  %s4 = inlined_call_operand.vmem [shape: f32[32,32], index: 4, kind: input, shape index: {}]
  %s5 = inlined_call_operand.hbm [shape: f32[1,32], index: 5, kind: input, shape index: {}]
  %s6 = inlined_call_operand.vmem [shape: f32[32,32], index: 6, kind: input, shape index: {}]
  %s7 = inlined_call_operand.hbm [shape: f32[1,32], index: 7, kind: input, shape index: {}]
  %s8 = inlined_call_operand.hbm [shape: f32[32,32], index: 8, kind: input, shape index: {}]
  %s9 = inlined_call_operand.hbm [shape: f32[1,32], index: 9, kind: input, shape index: {}]
  %s10 = inlined_call_operand.hbm [shape: f32[1,32], index: 10, kind: input, shape index: {}]
  %s11 = inlined_call_operand.hbm [shape: f32[1,32], index: 11, kind: input, shape index: {}]
  %s12 = inlined_call_operand.vmem [shape: f32[32,32], index: 12, kind: input, shape index: {}]
  %s13 = inlined_call_operand.hbm [shape: f32[1,32], index: 13, kind: input, shape index: {}]
  %s14 = inlined_call_operand.hbm [shape: f32[32,32], index: 14, kind: input, shape index: {}]
  %s15 = inlined_call_operand.hbm [shape: f32[1,32], index: 15, kind: input, shape index: {}]
  %s16 = inlined_call_operand.hbm [shape: f32[32,32], index: 16, kind: input, shape index: {}]
  %s17 = inlined_call_operand.hbm [shape: f32[1,32], index: 17, kind: input, shape index: {}]
  %s18 = inlined_call_operand.hbm [shape: f32[32,32], index: 18, kind: input, shape index: {}]
  %s19 = inlined_call_operand.vmem [shape: f32[1,32], index: 19, kind: input, shape index: {}]
  %s20 = inlined_call_operand.vmem [shape: f32[1,32], index: 20, kind: input, shape index: {}]
  %s21 = inlined_call_operand.vmem [shape: f32[1,32], index: 21, kind: input, shape index: {}]
  %s22 = inlined_call_operand.hbm [shape: f32[32,64], index: 22, kind: input, shape index: {}]
  %s23 = inlined_call_operand.vmem [shape: f32[1,64], index: 23, kind: input, shape index: {}]
  %s24 = inlined_call_operand.vmem [shape: f32[64,32], index: 24, kind: input, shape index: {}]
  %s25 = inlined_call_operand.vmem [shape: f32[1,32], index: 25, kind: input, shape index: {}]
  %s26 = inlined_call_operand.vmem [shape: f32[1,32], index: 26, kind: input, shape index: {}]
  %s27 = inlined_call_operand.vmem [shape: f32[1,32], index: 27, kind: input, shape index: {}]
  %s28 = inlined_call_operand.hbm [shape: f32[2,8,128], index: 28, kind: output, shape index: {}]
  %s29 = sld [smem:[#allocation0]]
  $region209: #{tpu_custom_call.1} parent=0
    _
  %s31 = ssub.s32 1, %s29
  %s32 = scalar_select 0, %s31, %s29
  $region1: #{tpu_custom_call.1} parent=0
    #allocation2 [shape = 'u8[8192]{0}', space=vmem, size = 0x2000, scoped, tag = 'input window, operand 0']
    #allocation3 [shape = 's32[2]{0}', space=sflag, size = 0x8, scoped, tag = 'scoped memory for tpu_custom_call.1']
    #allocation4 [shape = 's32[2]{0}', space=sflag, size = 0x8, scoped, tag = 'scoped memory for tpu_custom_call.1']
    #allocation5 [shape = 'u8[8192]{0}', space=vmem, size = 0x2000, scoped, tag = 'input window, operand 1']
    #allocation6 [shape = 's32[2]{0}', space=sflag, size = 0x8, scoped, tag = 'scoped memory for tpu_custom_call.1']
    #allocation7 [shape = 'u8[512]{0}', space=vmem, size = 0x400, scoped, tag = 'input window, operand 3, single buffered']
    #allocation8 [shape = 'u8[512]{0}', space=vmem, size = 0x400, scoped, tag = 'input window, operand 5, single buffered']
    #allocation9 [shape = 's32[1]{0}', space=sflag, size = 0x4, scoped, tag = 'scoped memory for tpu_custom_call.1']
    #allocation10 [shape = 'u8[512]{0}', space=vmem, size = 0x400, scoped, tag = 'input window, operand 7, single buffered']
    #allocation11 [shape = 'u8[16384]{0}', space=vmem, size = 0x4000, scoped, tag = 'input window, operand 8, single buffered']
    #allocation12 [shape = 's32[1]{0}', space=sflag, size = 0x4, scoped, tag = 'scoped memory for tpu_custom_call.1']
    #allocation13 [shape = 'u8[512]{0}', space=vmem, size = 0x400, scoped, tag = 'input window, operand 9, single buffered']
    #allocation14 [shape = 'u8[512]{0}', space=vmem, size = 0x400, scoped, tag = 'input window, operand 10, single buffered']
    #allocation15 [shape = 's32[1]{0}', space=sflag, size = 0x4, scoped, tag = 'scoped memory for tpu_custom_call.1']
    #allocation16 [shape = 'u8[512]{0}', space=vmem, size = 0x400, scoped, tag = 'input window, operand 11, single buffered']
    #allocation17 [shape = 'u8[512]{0}', space=vmem, size = 0x400, scoped, tag = 'input window, operand 13, single buffered']
    #allocation18 [shape = 's32[1]{0}', space=sflag, size = 0x4, scoped, tag = 'scoped memory for tpu_custom_call.1']
    #allocation19 [shape = 'u8[16384]{0}', space=vmem, size = 0x4000, scoped, tag = 'input window, operand 14, single buffered']
    #allocation20 [shape = 'u8[512]{0}', space=vmem, size = 0x400, scoped, tag = 'input window, operand 15, single buffered']
    #allocation21 [shape = 's32[1]{0}', space=sflag, size = 0x4, scoped, tag = 'scoped memory for tpu_custom_call.1']
    #allocation22 [shape = 'u8[16384]{0}', space=vmem, size = 0x4000, scoped, tag = 'input window, operand 16, single buffered']
    #allocation23 [shape = 'u8[512]{0}', space=vmem, size = 0x400, scoped, tag = 'input window, operand 17, single buffered']
    #allocation24 [shape = 's32[1]{0}', space=sflag, size = 0x4, scoped, tag = 'scoped memory for tpu_custom_call.1']
    #allocation25 [shape = 'u8[16384]{0}', space=vmem, size = 0x4000, scoped, tag = 'input window, operand 18, single buffered']
    #allocation26 [shape = 'u8[16384]{0}', space=vmem, size = 0x4000, scoped, tag = 'input window, operand 22, single buffered']
    #allocation27 [shape = 's32[1]{0}', space=sflag, size = 0x4, scoped, tag = 'scoped memory for tpu_custom_call.1']
    #allocation28 [shape = 'u8[8192]{0}', space=vmem, size = 0x2000, scoped, tag = 'output window, operand 0']
    %33 = vsyncpa [#allocation3], 0
    %s34 = scalar_lea.sflag [#allocation3], 1
    %35 = vsyncpa %s34, 0
    %36 = vsyncpa [#allocation6], 0
    %s37 = scalar_lea.sflag [#allocation6], 1
    %38 = vsyncpa %s37, 0
    %39 = vsyncpa [#allocation9], 0
    %40 = vsyncpa [#allocation12], 0
    %41 = vsyncpa [#allocation15], 0
    %42 = vsyncpa [#allocation18], 0
    %43 = vsyncpa [#allocation21], 0
    %44 = vsyncpa [#allocation24], 0
    %45 = vsyncpa [#allocation27], 0
    %46 = vsyncpa [#allocation4], 0
    %s47 = scalar_lea.sflag [#allocation4], 1
    %48 = vsyncpa %s47, 0
    loop: start=0, step=1, limit=4
    $region2: #{tpu_custom_call.1} parent=1 // loop_pre_header
      _
    $region3: #{tpu_custom_call.1} parent=1 // loop_header
      %s50 = sphi 0, %s54
      %p51 = scmp.ge.s32.totalorder %s50, 4
      %s60 = sphi 0, %s62
      %s63 = sphi 0, %s60
      %s64 = sphi 0, %s63
      %s80 = sphi 0, %s64
      %s86 = sphi 0, %s88
      %s89 = sphi 0, %s86
      %s90 = sphi 0, %s89
      %s106 = sphi 0, %s90
      %s110 = sphi 0, %s110
      %s112 = sphi 0, %s110
      %s113 = sphi 0, %s112
      %s127 = sphi 0, %s113
      %s131 = sphi 0, %s131
      %s133 = sphi 0, %s131
      %s134 = sphi 0, %s133
      %s148 = sphi 0, %s134
      %s152 = sphi 0, %s152
      %s154 = sphi 0, %s152
      %s155 = sphi 0, %s154
      %s169 = sphi 0, %s155
      %s173 = sphi 0, %s173
      %s175 = sphi 0, %s173
      %s176 = sphi 0, %s175
      %s190 = sphi 0, %s176
      %s194 = sphi 0, %s194
      %s196 = sphi 0, %s194
      %s197 = sphi 0, %s196
      %s211 = sphi 0, %s197
      %s215 = sphi 0, %s215
      %s217 = sphi 0, %s215
      %s218 = sphi 0, %s217
      %s232 = sphi 0, %s218
      %s236 = sphi 0, %s236
      %s238 = sphi 0, %s236
      %s239 = sphi 0, %s238
      %s253 = sphi 0, %s239
      %s257 = sphi 0, %s257
      %s259 = sphi 0, %s257
      %s260 = sphi 0, %s259
      %s274 = sphi 0, %s260
      %s278 = sphi 0, %s278
      %s280 = sphi 0, %s278
      %s281 = sphi 0, %s280
      %s295 = sphi 0, %s281
      %s299 = sphi 0, %s299
      %s301 = sphi 0, %s299
      %s302 = sphi 0, %s301
      %s316 = sphi 0, %s302
      %s320 = sphi 0, %s320
      %s322 = sphi 0, %s320
      %s323 = sphi 0, %s322
      %s337 = sphi 0, %s323
      %s341 = sphi 0, %s341
      %s343 = sphi 0, %s341
      %s344 = sphi 0, %s343
      %s358 = sphi 0, %s344
      %s362 = sphi 0, %s362
      %s364 = sphi 0, %s362
      %s365 = sphi 0, %s364
      %s379 = sphi 0, %s365
      %s383 = sphi 0, %s383
      %s385 = sphi 0, %s383
      %s386 = sphi 0, %s385
      %s400 = sphi 0, %s386
      %s404 = sphi 0, %s404
      %s406 = sphi 0, %s404
      %s407 = sphi 0, %s406
      %s421 = sphi 0, %s407
      %s425 = sphi 0, %s425
      %s427 = sphi 0, %s425
      %s428 = sphi 0, %s427
      %s442 = sphi 0, %s428
      %s446 = sphi 0, %s446
      %s448 = sphi 0, %s446
      %s449 = sphi 0, %s448
      %s463 = sphi 0, %s449
      %s467 = sphi 0, %s467
      %s469 = sphi 0, %s467
      %s470 = sphi 0, %s469
      %s484 = sphi 0, %s470
      %s488 = sphi 0, %s488
      %s490 = sphi 0, %s488
      %s491 = sphi 0, %s490
      %s505 = sphi 0, %s491
      %s509 = sphi 0, %s509
      %s511 = sphi 0, %s509
      %s512 = sphi 0, %s511
      %s526 = sphi 0, %s512
      %s530 = sphi 0, %s530
      %s532 = sphi 0, %s530
      %s533 = sphi 0, %s532
      %s547 = sphi 0, %s533
      %s551 = sphi 0, %s551
      %s553 = sphi 0, %s551
      %s554 = sphi 0, %s553
      %s568 = sphi 0, %s554
      %s572 = sphi 0, %s572
      %s574 = sphi 0, %s572
      %s575 = sphi 0, %s574
      %s589 = sphi 0, %s575
      %s593 = sphi 0, %s593
      %s595 = sphi 0, %s593
      %s596 = sphi 0, %s595
      %s610 = sphi 0, %s596
      %s614 = sphi 0, %s614
      %s616 = sphi 0, %s614
      %s617 = sphi 0, %s616
      %s631 = sphi 0, %s617
      %s635 = sphi 0, %s635
      %s637 = sphi 0, %s635
      %s638 = sphi 0, %s637
      %s652 = sphi 0, %s638
      %s658 = sphi 0, %s660
      %s661 = sphi 0, %s658
      %s662 = sphi 0, %s661
      %s678 = sphi 0, %s662
    $region4: #{tpu_custom_call.1} parent=1 // loop_header_branch
      %53 = sbr.rel (%p51) target = $region8
    $region5: #{tpu_custom_call.1} parent=1 // loop_body
      %s55 = ssub.s32 %s50, 1
      %s56 = ssub.s32 %s50, 2
      %s57 = sadd.s32 %s50, 1
      %s58 = ssub.s32 %s50, %s57
      %p59 = scmp.eq.s32.totalorder %s58, 0
      %s61 = sadd.s32 %s60, 1
      %s62 = scalar_select %p59, %s60, %s61
      %p65 = pneg %p59
      %p66 = scmp.eq.s32.totalorder %s50, 1
      %p67 = por %p65, %p66
      %p68 = scmp.ne.s32.totalorder %s60, %s63
      %p69 = scmp.eq.s32.totalorder %s50, 0
      %p70 = por %p68, %p69
      %p71 = scmp.ne.s32.totalorder %s60, %s63
      %p72 = scmp.eq.s32.totalorder %s55, 1
      %p73 = por %p71, %p72
      %p74 = scmp.ne.s32.totalorder %s63, %s64
      %p75 = scmp.eq.s32.totalorder %s55, 0
      %p76 = por %p74, %p75
      %p77 = scmp.ne.s32.totalorder %s63, %s64
      %p78 = scmp.eq.s32.totalorder %s56, 1
      %p79 = por %p77, %p78
      %p81 = scmp.ne.s32.totalorder %s64, %s80
      %p82 = scmp.eq.s32.totalorder %s56, 0
      %p83 = por %p81, %p82
      %s84 = ssub.s32 %s50, %s57
      %p85 = scmp.eq.s32.totalorder %s84, 0
      %s87 = sadd.s32 %s86, 1
      %s88 = scalar_select %p85, %s86, %s87
      %p91 = pneg %p85
      %p92 = scmp.eq.s32.totalorder %s50, 1
      %p93 = por %p91, %p92
      %p94 = scmp.ne.s32.totalorder %s86, %s89
      %p95 = scmp.eq.s32.totalorder %s50, 0
      %p96 = por %p94, %p95
      %p97 = scmp.ne.s32.totalorder %s86, %s89
      %p98 = scmp.eq.s32.totalorder %s55, 1
      %p99 = por %p97, %p98
      %p100 = scmp.ne.s32.totalorder %s89, %s90
      %p101 = scmp.eq.s32.totalorder %s55, 0
      %p102 = por %p100, %p101
      %p103 = scmp.ne.s32.totalorder %s89, %s90
      %p104 = scmp.eq.s32.totalorder %s56, 1
      %p105 = por %p103, %p104
      %p107 = scmp.ne.s32.totalorder %s90, %s106
      %p108 = scmp.eq.s32.totalorder %s56, 0
      %p109 = por %p107, %p108
      %s111 = sadd.s32 %s110, 1
      %p114 = scmp.eq.s32.totalorder %s50, 1
      %p115 = scmp.ne.s32.totalorder %s110, %s112
      %p116 = scmp.eq.s32.totalorder %s50, 0
      %p117 = por %p115, %p116
      %p118 = scmp.ne.s32.totalorder %s110, %s112
      %p119 = scmp.eq.s32.totalorder %s55, 1
      %p120 = por %p118, %p119
      %p121 = scmp.ne.s32.totalorder %s112, %s113
      %p122 = scmp.eq.s32.totalorder %s55, 0
      %p123 = por %p121, %p122
      %p124 = scmp.ne.s32.totalorder %s112, %s113
      %p125 = scmp.eq.s32.totalorder %s56, 1
      %p126 = por %p124, %p125
      %p128 = scmp.ne.s32.totalorder %s113, %s127
      %p129 = scmp.eq.s32.totalorder %s56, 0
      %p130 = por %p128, %p129
      %s132 = sadd.s32 %s131, 1
      %p135 = scmp.eq.s32.totalorder %s50, 1
      %p136 = scmp.ne.s32.totalorder %s131, %s133
      %p137 = scmp.eq.s32.totalorder %s50, 0
      %p138 = por %p136, %p137
      %p139 = scmp.ne.s32.totalorder %s131, %s133
      %p140 = scmp.eq.s32.totalorder %s55, 1
      %p141 = por %p139, %p140
      %p142 = scmp.ne.s32.totalorder %s133, %s134
      %p143 = scmp.eq.s32.totalorder %s55, 0
      %p144 = por %p142, %p143
      %p145 = scmp.ne.s32.totalorder %s133, %s134
      %p146 = scmp.eq.s32.totalorder %s56, 1
      %p147 = por %p145, %p146
      %p149 = scmp.ne.s32.totalorder %s134, %s148
      %p150 = scmp.eq.s32.totalorder %s56, 0
      %p151 = por %p149, %p150
      %s153 = sadd.s32 %s152, 1
      %p156 = scmp.eq.s32.totalorder %s50, 1
      %p157 = scmp.ne.s32.totalorder %s152, %s154
      %p158 = scmp.eq.s32.totalorder %s50, 0
      %p159 = por %p157, %p158
      %p160 = scmp.ne.s32.totalorder %s152, %s154
      %p161 = scmp.eq.s32.totalorder %s55, 1
      %p162 = por %p160, %p161
      %p163 = scmp.ne.s32.totalorder %s154, %s155
      %p164 = scmp.eq.s32.totalorder %s55, 0
      %p165 = por %p163, %p164
      %p166 = scmp.ne.s32.totalorder %s154, %s155
      %p167 = scmp.eq.s32.totalorder %s56, 1
      %p168 = por %p166, %p167
      %p170 = scmp.ne.s32.totalorder %s155, %s169
      %p171 = scmp.eq.s32.totalorder %s56, 0
      %p172 = por %p170, %p171
      %s174 = sadd.s32 %s173, 1
      %p177 = scmp.eq.s32.totalorder %s50, 1
      %p178 = scmp.ne.s32.totalorder %s173, %s175
      %p179 = scmp.eq.s32.totalorder %s50, 0
      %p180 = por %p178, %p179
      %p181 = scmp.ne.s32.totalorder %s173, %s175
      %p182 = scmp.eq.s32.totalorder %s55, 1
      %p183 = por %p181, %p182
      %p184 = scmp.ne.s32.totalorder %s175, %s176
      %p185 = scmp.eq.s32.totalorder %s55, 0
      %p186 = por %p184, %p185
      %p187 = scmp.ne.s32.totalorder %s175, %s176
      %p188 = scmp.eq.s32.totalorder %s56, 1
      %p189 = por %p187, %p188
      %p191 = scmp.ne.s32.totalorder %s176, %s190
      %p192 = scmp.eq.s32.totalorder %s56, 0
      %p193 = por %p191, %p192
      %s195 = sadd.s32 %s194, 1
      %p198 = scmp.eq.s32.totalorder %s50, 1
      %p199 = scmp.ne.s32.totalorder %s194, %s196
      %p200 = scmp.eq.s32.totalorder %s50, 0
      %p201 = por %p199, %p200
      %p202 = scmp.ne.s32.totalorder %s194, %s196
      %p203 = scmp.eq.s32.totalorder %s55, 1
      %p204 = por %p202, %p203
      %p205 = scmp.ne.s32.totalorder %s196, %s197
      %p206 = scmp.eq.s32.totalorder %s55, 0
      %p207 = por %p205, %p206
      %p208 = scmp.ne.s32.totalorder %s196, %s197
      %p209 = scmp.eq.s32.totalorder %s56, 1
      %p210 = por %p208, %p209
      %p212 = scmp.ne.s32.totalorder %s197, %s211
      %p213 = scmp.eq.s32.totalorder %s56, 0
      %p214 = por %p212, %p213
      %s216 = sadd.s32 %s215, 1
      %p219 = scmp.eq.s32.totalorder %s50, 1
      %p220 = scmp.ne.s32.totalorder %s215, %s217
      %p221 = scmp.eq.s32.totalorder %s50, 0
      %p222 = por %p220, %p221
      %p223 = scmp.ne.s32.totalorder %s215, %s217
      %p224 = scmp.eq.s32.totalorder %s55, 1
      %p225 = por %p223, %p224
      %p226 = scmp.ne.s32.totalorder %s217, %s218
      %p227 = scmp.eq.s32.totalorder %s55, 0
      %p228 = por %p226, %p227
      %p229 = scmp.ne.s32.totalorder %s217, %s218
      %p230 = scmp.eq.s32.totalorder %s56, 1
      %p231 = por %p229, %p230
      %p233 = scmp.ne.s32.totalorder %s218, %s232
      %p234 = scmp.eq.s32.totalorder %s56, 0
      %p235 = por %p233, %p234
      %s237 = sadd.s32 %s236, 1
      %p240 = scmp.eq.s32.totalorder %s50, 1
      %p241 = scmp.ne.s32.totalorder %s236, %s238
      %p242 = scmp.eq.s32.totalorder %s50, 0
      %p243 = por %p241, %p242
      %p244 = scmp.ne.s32.totalorder %s236, %s238
      %p245 = scmp.eq.s32.totalorder %s55, 1
      %p246 = por %p244, %p245
      %p247 = scmp.ne.s32.totalorder %s238, %s239
      %p248 = scmp.eq.s32.totalorder %s55, 0
      %p249 = por %p247, %p248
      %p250 = scmp.ne.s32.totalorder %s238, %s239
      %p251 = scmp.eq.s32.totalorder %s56, 1
      %p252 = por %p250, %p251
      %p254 = scmp.ne.s32.totalorder %s239, %s253
      %p255 = scmp.eq.s32.totalorder %s56, 0
      %p256 = por %p254, %p255
      %s258 = sadd.s32 %s257, 1
      %p261 = scmp.eq.s32.totalorder %s50, 1
      %p262 = scmp.ne.s32.totalorder %s257, %s259
      %p263 = scmp.eq.s32.totalorder %s50, 0
      %p264 = por %p262, %p263
      %p265 = scmp.ne.s32.totalorder %s257, %s259
      %p266 = scmp.eq.s32.totalorder %s55, 1
      %p267 = por %p265, %p266
      %p268 = scmp.ne.s32.totalorder %s259, %s260
      %p269 = scmp.eq.s32.totalorder %s55, 0
      %p270 = por %p268, %p269
      %p271 = scmp.ne.s32.totalorder %s259, %s260
      %p272 = scmp.eq.s32.totalorder %s56, 1
      %p273 = por %p271, %p272
      %p275 = scmp.ne.s32.totalorder %s260, %s274
      %p276 = scmp.eq.s32.totalorder %s56, 0
      %p277 = por %p275, %p276
      %s279 = sadd.s32 %s278, 1
      %p282 = scmp.eq.s32.totalorder %s50, 1
      %p283 = scmp.ne.s32.totalorder %s278, %s280
      %p284 = scmp.eq.s32.totalorder %s50, 0
      %p285 = por %p283, %p284
      %p286 = scmp.ne.s32.totalorder %s278, %s280
      %p287 = scmp.eq.s32.totalorder %s55, 1
      %p288 = por %p286, %p287
      %p289 = scmp.ne.s32.totalorder %s280, %s281
      %p290 = scmp.eq.s32.totalorder %s55, 0
      %p291 = por %p289, %p290
      %p292 = scmp.ne.s32.totalorder %s280, %s281
      %p293 = scmp.eq.s32.totalorder %s56, 1
      %p294 = por %p292, %p293
      %p296 = scmp.ne.s32.totalorder %s281, %s295
      %p297 = scmp.eq.s32.totalorder %s56, 0
      %p298 = por %p296, %p297
      %s300 = sadd.s32 %s299, 1
      %p303 = scmp.eq.s32.totalorder %s50, 1
      %p304 = scmp.ne.s32.totalorder %s299, %s301
      %p305 = scmp.eq.s32.totalorder %s50, 0
      %p306 = por %p304, %p305
      %p307 = scmp.ne.s32.totalorder %s299, %s301
      %p308 = scmp.eq.s32.totalorder %s55, 1
      %p309 = por %p307, %p308
      %p310 = scmp.ne.s32.totalorder %s301, %s302
      %p311 = scmp.eq.s32.totalorder %s55, 0
      %p312 = por %p310, %p311
      %p313 = scmp.ne.s32.totalorder %s301, %s302
      %p314 = scmp.eq.s32.totalorder %s56, 1
      %p315 = por %p313, %p314
      %p317 = scmp.ne.s32.totalorder %s302, %s316
      %p318 = scmp.eq.s32.totalorder %s56, 0
      %p319 = por %p317, %p318
      %s321 = sadd.s32 %s320, 1
      %p324 = scmp.eq.s32.totalorder %s50, 1
      %p325 = scmp.ne.s32.totalorder %s320, %s322
      %p326 = scmp.eq.s32.totalorder %s50, 0
      %p327 = por %p325, %p326
      %p328 = scmp.ne.s32.totalorder %s320, %s322
      %p329 = scmp.eq.s32.totalorder %s55, 1
      %p330 = por %p328, %p329
      %p331 = scmp.ne.s32.totalorder %s322, %s323
      %p332 = scmp.eq.s32.totalorder %s55, 0
      %p333 = por %p331, %p332
      %p334 = scmp.ne.s32.totalorder %s322, %s323
      %p335 = scmp.eq.s32.totalorder %s56, 1
      %p336 = por %p334, %p335
      %p338 = scmp.ne.s32.totalorder %s323, %s337
      %p339 = scmp.eq.s32.totalorder %s56, 0
      %p340 = por %p338, %p339
      %s342 = sadd.s32 %s341, 1
      %p345 = scmp.eq.s32.totalorder %s50, 1
      %p346 = scmp.ne.s32.totalorder %s341, %s343
      %p347 = scmp.eq.s32.totalorder %s50, 0
      %p348 = por %p346, %p347
      %p349 = scmp.ne.s32.totalorder %s341, %s343
      %p350 = scmp.eq.s32.totalorder %s55, 1
      %p351 = por %p349, %p350
      %p352 = scmp.ne.s32.totalorder %s343, %s344
      %p353 = scmp.eq.s32.totalorder %s55, 0
      %p354 = por %p352, %p353
      %p355 = scmp.ne.s32.totalorder %s343, %s344
      %p356 = scmp.eq.s32.totalorder %s56, 1
      %p357 = por %p355, %p356
      %p359 = scmp.ne.s32.totalorder %s344, %s358
      %p360 = scmp.eq.s32.totalorder %s56, 0
      %p361 = por %p359, %p360
      %s363 = sadd.s32 %s362, 1
      %p366 = scmp.eq.s32.totalorder %s50, 1
      %p367 = scmp.ne.s32.totalorder %s362, %s364
      %p368 = scmp.eq.s32.totalorder %s50, 0
      %p369 = por %p367, %p368
      %p370 = scmp.ne.s32.totalorder %s362, %s364
      %p371 = scmp.eq.s32.totalorder %s55, 1
      %p372 = por %p370, %p371
      %p373 = scmp.ne.s32.totalorder %s364, %s365
      %p374 = scmp.eq.s32.totalorder %s55, 0
      %p375 = por %p373, %p374
      %p376 = scmp.ne.s32.totalorder %s364, %s365
      %p377 = scmp.eq.s32.totalorder %s56, 1
      %p378 = por %p376, %p377
      %p380 = scmp.ne.s32.totalorder %s365, %s379
      %p381 = scmp.eq.s32.totalorder %s56, 0
      %p382 = por %p380, %p381
      %s384 = sadd.s32 %s383, 1
      %p387 = scmp.eq.s32.totalorder %s50, 1
      %p388 = scmp.ne.s32.totalorder %s383, %s385
      %p389 = scmp.eq.s32.totalorder %s50, 0
      %p390 = por %p388, %p389
      %p391 = scmp.ne.s32.totalorder %s383, %s385
      %p392 = scmp.eq.s32.totalorder %s55, 1
      %p393 = por %p391, %p392
      %p394 = scmp.ne.s32.totalorder %s385, %s386
      %p395 = scmp.eq.s32.totalorder %s55, 0
      %p396 = por %p394, %p395
      %p397 = scmp.ne.s32.totalorder %s385, %s386
      %p398 = scmp.eq.s32.totalorder %s56, 1
      %p399 = por %p397, %p398
      %p401 = scmp.ne.s32.totalorder %s386, %s400
      %p402 = scmp.eq.s32.totalorder %s56, 0
      %p403 = por %p401, %p402
      %s405 = sadd.s32 %s404, 1
      %p408 = scmp.eq.s32.totalorder %s50, 1
      %p409 = scmp.ne.s32.totalorder %s404, %s406
      %p410 = scmp.eq.s32.totalorder %s50, 0
      %p411 = por %p409, %p410
      %p412 = scmp.ne.s32.totalorder %s404, %s406
      %p413 = scmp.eq.s32.totalorder %s55, 1
      %p414 = por %p412, %p413
      %p415 = scmp.ne.s32.totalorder %s406, %s407
      %p416 = scmp.eq.s32.totalorder %s55, 0
      %p417 = por %p415, %p416
      %p418 = scmp.ne.s32.totalorder %s406, %s407
      %p419 = scmp.eq.s32.totalorder %s56, 1
      %p420 = por %p418, %p419
      %p422 = scmp.ne.s32.totalorder %s407, %s421
      %p423 = scmp.eq.s32.totalorder %s56, 0
      %p424 = por %p422, %p423
      %s426 = sadd.s32 %s425, 1
      %p429 = scmp.eq.s32.totalorder %s50, 1
      %p430 = scmp.ne.s32.totalorder %s425, %s427
      %p431 = scmp.eq.s32.totalorder %s50, 0
      %p432 = por %p430, %p431
      %p433 = scmp.ne.s32.totalorder %s425, %s427
      %p434 = scmp.eq.s32.totalorder %s55, 1
      %p435 = por %p433, %p434
      %p436 = scmp.ne.s32.totalorder %s427, %s428
      %p437 = scmp.eq.s32.totalorder %s55, 0
      %p438 = por %p436, %p437
      %p439 = scmp.ne.s32.totalorder %s427, %s428
      %p440 = scmp.eq.s32.totalorder %s56, 1
      %p441 = por %p439, %p440
      %p443 = scmp.ne.s32.totalorder %s428, %s442
      %p444 = scmp.eq.s32.totalorder %s56, 0
      %p445 = por %p443, %p444
      %s447 = sadd.s32 %s446, 1
      %p450 = scmp.eq.s32.totalorder %s50, 1
      %p451 = scmp.ne.s32.totalorder %s446, %s448
      %p452 = scmp.eq.s32.totalorder %s50, 0
      %p453 = por %p451, %p452
      %p454 = scmp.ne.s32.totalorder %s446, %s448
      %p455 = scmp.eq.s32.totalorder %s55, 1
      %p456 = por %p454, %p455
      %p457 = scmp.ne.s32.totalorder %s448, %s449
      %p458 = scmp.eq.s32.totalorder %s55, 0
      %p459 = por %p457, %p458
      %p460 = scmp.ne.s32.totalorder %s448, %s449
      %p461 = scmp.eq.s32.totalorder %s56, 1
      %p462 = por %p460, %p461
      %p464 = scmp.ne.s32.totalorder %s449, %s463
      %p465 = scmp.eq.s32.totalorder %s56, 0
      %p466 = por %p464, %p465
      %s468 = sadd.s32 %s467, 1
      %p471 = scmp.eq.s32.totalorder %s50, 1
      %p472 = scmp.ne.s32.totalorder %s467, %s469
      %p473 = scmp.eq.s32.totalorder %s50, 0
      %p474 = por %p472, %p473
      %p475 = scmp.ne.s32.totalorder %s467, %s469
      %p476 = scmp.eq.s32.totalorder %s55, 1
      %p477 = por %p475, %p476
      %p478 = scmp.ne.s32.totalorder %s469, %s470
      %p479 = scmp.eq.s32.totalorder %s55, 0
      %p480 = por %p478, %p479
      %p481 = scmp.ne.s32.totalorder %s469, %s470
      %p482 = scmp.eq.s32.totalorder %s56, 1
      %p483 = por %p481, %p482
      %p485 = scmp.ne.s32.totalorder %s470, %s484
      %p486 = scmp.eq.s32.totalorder %s56, 0
      %p487 = por %p485, %p486
      %s489 = sadd.s32 %s488, 1
      %p492 = scmp.eq.s32.totalorder %s50, 1
      %p493 = scmp.ne.s32.totalorder %s488, %s490
      %p494 = scmp.eq.s32.totalorder %s50, 0
      %p495 = por %p493, %p494
      %p496 = scmp.ne.s32.totalorder %s488, %s490
      %p497 = scmp.eq.s32.totalorder %s55, 1
      %p498 = por %p496, %p497
      %p499 = scmp.ne.s32.totalorder %s490, %s491
      %p500 = scmp.eq.s32.totalorder %s55, 0
      %p501 = por %p499, %p500
      %p502 = scmp.ne.s32.totalorder %s490, %s491
      %p503 = scmp.eq.s32.totalorder %s56, 1
      %p504 = por %p502, %p503
      %p506 = scmp.ne.s32.totalorder %s491, %s505
      %p507 = scmp.eq.s32.totalorder %s56, 0
      %p508 = por %p506, %p507
      %s510 = sadd.s32 %s509, 1
      %p513 = scmp.eq.s32.totalorder %s50, 1
      %p514 = scmp.ne.s32.totalorder %s509, %s511
      %p515 = scmp.eq.s32.totalorder %s50, 0
      %p516 = por %p514, %p515
      %p517 = scmp.ne.s32.totalorder %s509, %s511
      %p518 = scmp.eq.s32.totalorder %s55, 1
      %p519 = por %p517, %p518
      %p520 = scmp.ne.s32.totalorder %s511, %s512
      %p521 = scmp.eq.s32.totalorder %s55, 0
      %p522 = por %p520, %p521
      %p523 = scmp.ne.s32.totalorder %s511, %s512
      %p524 = scmp.eq.s32.totalorder %s56, 1
      %p525 = por %p523, %p524
      %p527 = scmp.ne.s32.totalorder %s512, %s526
      %p528 = scmp.eq.s32.totalorder %s56, 0
      %p529 = por %p527, %p528
      %s531 = sadd.s32 %s530, 1
      %p534 = scmp.eq.s32.totalorder %s50, 1
      %p535 = scmp.ne.s32.totalorder %s530, %s532
      %p536 = scmp.eq.s32.totalorder %s50, 0
      %p537 = por %p535, %p536
      %p538 = scmp.ne.s32.totalorder %s530, %s532
      %p539 = scmp.eq.s32.totalorder %s55, 1
      %p540 = por %p538, %p539
      %p541 = scmp.ne.s32.totalorder %s532, %s533
      %p542 = scmp.eq.s32.totalorder %s55, 0
      %p543 = por %p541, %p542
      %p544 = scmp.ne.s32.totalorder %s532, %s533
      %p545 = scmp.eq.s32.totalorder %s56, 1
      %p546 = por %p544, %p545
      %p548 = scmp.ne.s32.totalorder %s533, %s547
      %p549 = scmp.eq.s32.totalorder %s56, 0
      %p550 = por %p548, %p549
      %s552 = sadd.s32 %s551, 1
      %p555 = scmp.eq.s32.totalorder %s50, 1
      %p556 = scmp.ne.s32.totalorder %s551, %s553
      %p557 = scmp.eq.s32.totalorder %s50, 0
      %p558 = por %p556, %p557
      %p559 = scmp.ne.s32.totalorder %s551, %s553
      %p560 = scmp.eq.s32.totalorder %s55, 1
      %p561 = por %p559, %p560
      %p562 = scmp.ne.s32.totalorder %s553, %s554
      %p563 = scmp.eq.s32.totalorder %s55, 0
      %p564 = por %p562, %p563
      %p565 = scmp.ne.s32.totalorder %s553, %s554
      %p566 = scmp.eq.s32.totalorder %s56, 1
      %p567 = por %p565, %p566
      %p569 = scmp.ne.s32.totalorder %s554, %s568
      %p570 = scmp.eq.s32.totalorder %s56, 0
      %p571 = por %p569, %p570
      %s573 = sadd.s32 %s572, 1
      %p576 = scmp.eq.s32.totalorder %s50, 1
      %p577 = scmp.ne.s32.totalorder %s572, %s574
      %p578 = scmp.eq.s32.totalorder %s50, 0
      %p579 = por %p577, %p578
      %p580 = scmp.ne.s32.totalorder %s572, %s574
      %p581 = scmp.eq.s32.totalorder %s55, 1
      %p582 = por %p580, %p581
      %p583 = scmp.ne.s32.totalorder %s574, %s575
      %p584 = scmp.eq.s32.totalorder %s55, 0
      %p585 = por %p583, %p584
      %p586 = scmp.ne.s32.totalorder %s574, %s575
      %p587 = scmp.eq.s32.totalorder %s56, 1
      %p588 = por %p586, %p587
      %p590 = scmp.ne.s32.totalorder %s575, %s589
      %p591 = scmp.eq.s32.totalorder %s56, 0
      %p592 = por %p590, %p591
      %s594 = sadd.s32 %s593, 1
      %p597 = scmp.eq.s32.totalorder %s50, 1
      %p598 = scmp.ne.s32.totalorder %s593, %s595
      %p599 = scmp.eq.s32.totalorder %s50, 0
      %p600 = por %p598, %p599
      %p601 = scmp.ne.s32.totalorder %s593, %s595
      %p602 = scmp.eq.s32.totalorder %s55, 1
      %p603 = por %p601, %p602
      %p604 = scmp.ne.s32.totalorder %s595, %s596
      %p605 = scmp.eq.s32.totalorder %s55, 0
      %p606 = por %p604, %p605
      %p607 = scmp.ne.s32.totalorder %s595, %s596
      %p608 = scmp.eq.s32.totalorder %s56, 1
      %p609 = por %p607, %p608
      %p611 = scmp.ne.s32.totalorder %s596, %s610
      %p612 = scmp.eq.s32.totalorder %s56, 0
      %p613 = por %p611, %p612
      %s615 = sadd.s32 %s614, 1
      %p618 = scmp.eq.s32.totalorder %s50, 1
      %p619 = scmp.ne.s32.totalorder %s614, %s616
      %p620 = scmp.eq.s32.totalorder %s50, 0
      %p621 = por %p619, %p620
      %p622 = scmp.ne.s32.totalorder %s614, %s616
      %p623 = scmp.eq.s32.totalorder %s55, 1
      %p624 = por %p622, %p623
      %p625 = scmp.ne.s32.totalorder %s616, %s617
      %p626 = scmp.eq.s32.totalorder %s55, 0
      %p627 = por %p625, %p626
      %p628 = scmp.ne.s32.totalorder %s616, %s617
      %p629 = scmp.eq.s32.totalorder %s56, 1
      %p630 = por %p628, %p629
      %p632 = scmp.ne.s32.totalorder %s617, %s631
      %p633 = scmp.eq.s32.totalorder %s56, 0
      %p634 = por %p632, %p633
      %s636 = sadd.s32 %s635, 1
      %p639 = scmp.eq.s32.totalorder %s50, 1
      %p640 = scmp.ne.s32.totalorder %s635, %s637
      %p641 = scmp.eq.s32.totalorder %s50, 0
      %p642 = por %p640, %p641
      %p643 = scmp.ne.s32.totalorder %s635, %s637
      %p644 = scmp.eq.s32.totalorder %s55, 1
      %p645 = por %p643, %p644
      %p646 = scmp.ne.s32.totalorder %s637, %s638
      %p647 = scmp.eq.s32.totalorder %s55, 0
      %p648 = por %p646, %p647
      %p649 = scmp.ne.s32.totalorder %s637, %s638
      %p650 = scmp.eq.s32.totalorder %s56, 1
      %p651 = por %p649, %p650
      %p653 = scmp.ne.s32.totalorder %s638, %s652
      %p654 = scmp.eq.s32.totalorder %s56, 0
      %p655 = por %p653, %p654
      %s656 = ssub.s32 %s50, %s57
      %p657 = scmp.eq.s32.totalorder %s656, 0
      %s659 = sadd.s32 %s658, 1
      %s660 = scalar_select %p657, %s658, %s659
      %p663 = pneg %p657
      %p664 = scmp.eq.s32.totalorder %s50, 1
      %p665 = por %p663, %p664
      %p666 = scmp.ne.s32.totalorder %s658, %s661
      %p667 = scmp.eq.s32.totalorder %s50, 0
      %p668 = por %p666, %p667
      %p669 = scmp.ne.s32.totalorder %s658, %s661
      %p670 = scmp.eq.s32.totalorder %s55, 1
      %p671 = por %p669, %p670
      %p672 = scmp.ne.s32.totalorder %s661, %s662
      %p673 = scmp.eq.s32.totalorder %s55, 0
      %p674 = por %p672, %p673
      %p675 = scmp.ne.s32.totalorder %s661, %s662
      %p676 = scmp.eq.s32.totalorder %s56, 1
      %p677 = por %p675, %p676
      %p679 = scmp.ne.s32.totalorder %s662, %s678
      %p680 = scmp.eq.s32.totalorder %s56, 0
      %p681 = por %p679, %p680
      %p682 = scmp.le.s32.totalorder 1, %s50
      %p683 = scmp.lt.s32.totalorder %s50, 3
      %p684 = pnand %p682, %p683
      %p685 = pneg %p684
      // Predicated region
      $region9: #{tpu_custom_call.1} parent=5 // pred_check
        _
      $region10: #{tpu_custom_call.1} parent=5 // pred_check_branch
        %687 = sbr.rel (%p684) target = $region12
      $region11: #{tpu_custom_call.1} parent=5 // pred_region
        %s688 = ssub.s32 %s50, 1
        // Predicated region
        $region13: #{tpu_custom_call.1} parent=11 // pred_check
          %p689 = pneg %p123
        $region14: #{tpu_custom_call.1} parent=11 // pred_check_branch
          %691 = sbr.rel (%p689) target = $region16
        $region15: #{tpu_custom_call.1} parent=11 // pred_region
          _
        $region16: #{tpu_custom_call.1} parent=11 // pred_fallthru
          _
        // Predicated region
        $region17: #{tpu_custom_call.1} parent=11 // pred_check
          %p692 = pneg %p144
        $region18: #{tpu_custom_call.1} parent=11 // pred_check_branch
          %694 = sbr.rel (%p692) target = $region20
        $region19: #{tpu_custom_call.1} parent=11 // pred_region
          %s696 = ssub.s32 16, 16
          %697 = vsyncadd [#allocation6], %s696
          %s699 = sshll.u32 [#allocation7], 4
          %s700 = int_to_ptr.vmem [resolvable:$true] %s699
          %702 = dma.hbm_to_vmem [thread:$0]  %s3, 16, %s700, [#allocation6]
        $region20: #{tpu_custom_call.1} parent=11 // pred_fallthru
          _
        // Predicated region
        $region21: #{tpu_custom_call.1} parent=11 // pred_check
          %p703 = pneg %p165
        $region22: #{tpu_custom_call.1} parent=11 // pred_check_branch
          %705 = sbr.rel (%p703) target = $region24
        $region23: #{tpu_custom_call.1} parent=11 // pred_region
          _
        $region24: #{tpu_custom_call.1} parent=11 // pred_fallthru
          _
        // Predicated region
        $region25: #{tpu_custom_call.1} parent=11 // pred_check
          %p706 = pneg %p186
        $region26: #{tpu_custom_call.1} parent=11 // pred_check_branch
          %708 = sbr.rel (%p706) target = $region28
        $region27: #{tpu_custom_call.1} parent=11 // pred_region
          %s710 = ssub.s32 16, 16
          %711 = vsyncadd [#allocation9], %s710
          %s713 = sshll.u32 [#allocation8], 4
          %s714 = int_to_ptr.vmem [resolvable:$true] %s713
          %716 = dma.hbm_to_vmem [thread:$0]  %s5, 16, %s714, [#allocation9]
        $region28: #{tpu_custom_call.1} parent=11 // pred_fallthru
          _
        // Predicated region
        $region29: #{tpu_custom_call.1} parent=11 // pred_check
          %p717 = pneg %p207
        $region30: #{tpu_custom_call.1} parent=11 // pred_check_branch
          %719 = sbr.rel (%p717) target = $region32
        $region31: #{tpu_custom_call.1} parent=11 // pred_region
          _
        $region32: #{tpu_custom_call.1} parent=11 // pred_fallthru
          _
        // Predicated region
        $region33: #{tpu_custom_call.1} parent=11 // pred_check
          %p720 = pneg %p228
        $region34: #{tpu_custom_call.1} parent=11 // pred_check_branch
          %722 = sbr.rel (%p720) target = $region36
        $region35: #{tpu_custom_call.1} parent=11 // pred_region
          %s724 = ssub.s32 16, 16
          %725 = vsyncadd [#allocation9], %s724
          %s727 = sshll.u32 [#allocation10], 4
          %s728 = int_to_ptr.vmem [resolvable:$true] %s727
          %730 = dma.hbm_to_vmem [thread:$0]  %s7, 16, %s728, [#allocation9]
        $region36: #{tpu_custom_call.1} parent=11 // pred_fallthru
          _
        // Predicated region
        $region37: #{tpu_custom_call.1} parent=11 // pred_check
          %p731 = pneg %p249
        $region38: #{tpu_custom_call.1} parent=11 // pred_check_branch
          %733 = sbr.rel (%p731) target = $region40
        $region39: #{tpu_custom_call.1} parent=11 // pred_region
          %s735 = ssub.s32 512, 512
          %736 = vsyncadd [#allocation12], %s735
          %s737 = sshll.u32 [#allocation11], 4
          %s738 = int_to_ptr.vmem [resolvable:$true] %s737
          %743 = dma.hbm_to_vmem [thread:$0]  %s8, 512, %s738, [#allocation12], 128, 128, 8
        $region40: #{tpu_custom_call.1} parent=11 // pred_fallthru
          _
        // Predicated region
        $region41: #{tpu_custom_call.1} parent=11 // pred_check
          %p744 = pneg %p270
        $region42: #{tpu_custom_call.1} parent=11 // pred_check_branch
          %746 = sbr.rel (%p744) target = $region44
        $region43: #{tpu_custom_call.1} parent=11 // pred_region
          %s748 = ssub.s32 16, 16
          %749 = vsyncadd [#allocation12], %s748
          %s751 = sshll.u32 [#allocation13], 4
          %s752 = int_to_ptr.vmem [resolvable:$true] %s751
          %754 = dma.hbm_to_vmem [thread:$0]  %s9, 16, %s752, [#allocation12]
        $region44: #{tpu_custom_call.1} parent=11 // pred_fallthru
          _
        // Predicated region
        $region45: #{tpu_custom_call.1} parent=11 // pred_check
          %p755 = pneg %p291
        $region46: #{tpu_custom_call.1} parent=11 // pred_check_branch
          %757 = sbr.rel (%p755) target = $region48
        $region47: #{tpu_custom_call.1} parent=11 // pred_region
          %s759 = ssub.s32 16, 16
          %760 = vsyncadd [#allocation15], %s759
          %s762 = sshll.u32 [#allocation14], 4
          %s763 = int_to_ptr.vmem [resolvable:$true] %s762
          %765 = dma.hbm_to_vmem [thread:$0]  %s10, 16, %s763, [#allocation15]
        $region48: #{tpu_custom_call.1} parent=11 // pred_fallthru
          _
        // Predicated region
        $region49: #{tpu_custom_call.1} parent=11 // pred_check
          %p766 = pneg %p312
        $region50: #{tpu_custom_call.1} parent=11 // pred_check_branch
          %768 = sbr.rel (%p766) target = $region52
        $region51: #{tpu_custom_call.1} parent=11 // pred_region
          %s770 = ssub.s32 16, 16
          %771 = vsyncadd [#allocation15], %s770
          %s773 = sshll.u32 [#allocation16], 4
          %s774 = int_to_ptr.vmem [resolvable:$true] %s773
          %776 = dma.hbm_to_vmem [thread:$0]  %s11, 16, %s774, [#allocation15]
        $region52: #{tpu_custom_call.1} parent=11 // pred_fallthru
          _
        // Predicated region
        $region53: #{tpu_custom_call.1} parent=11 // pred_check
          %p777 = pneg %p333
        $region54: #{tpu_custom_call.1} parent=11 // pred_check_branch
          %779 = sbr.rel (%p777) target = $region56
        $region55: #{tpu_custom_call.1} parent=11 // pred_region
          _
        $region56: #{tpu_custom_call.1} parent=11 // pred_fallthru
          _
        // Predicated region
        $region57: #{tpu_custom_call.1} parent=11 // pred_check
          %p780 = pneg %p354
        $region58: #{tpu_custom_call.1} parent=11 // pred_check_branch
          %782 = sbr.rel (%p780) target = $region60
        $region59: #{tpu_custom_call.1} parent=11 // pred_region
          %s784 = ssub.s32 16, 16
          %785 = vsyncadd [#allocation18], %s784
          %s787 = sshll.u32 [#allocation17], 4
          %s788 = int_to_ptr.vmem [resolvable:$true] %s787
          %790 = dma.hbm_to_vmem [thread:$0]  %s13, 16, %s788, [#allocation18]
        $region60: #{tpu_custom_call.1} parent=11 // pred_fallthru
          _
        // Predicated region
        $region61: #{tpu_custom_call.1} parent=11 // pred_check
          %p791 = pneg %p375
        $region62: #{tpu_custom_call.1} parent=11 // pred_check_branch
          %793 = sbr.rel (%p791) target = $region64
        $region63: #{tpu_custom_call.1} parent=11 // pred_region
          %s795 = ssub.s32 512, 512
          %796 = vsyncadd [#allocation18], %s795
          %s797 = sshll.u32 [#allocation19], 4
          %s798 = int_to_ptr.vmem [resolvable:$true] %s797
          %803 = dma.hbm_to_vmem [thread:$0]  %s14, 512, %s798, [#allocation18], 128, 128, 8
        $region64: #{tpu_custom_call.1} parent=11 // pred_fallthru
          _
        // Predicated region
        $region65: #{tpu_custom_call.1} parent=11 // pred_check
          %p804 = pneg %p396
        $region66: #{tpu_custom_call.1} parent=11 // pred_check_branch
          %806 = sbr.rel (%p804) target = $region68
        $region67: #{tpu_custom_call.1} parent=11 // pred_region
          %s808 = ssub.s32 16, 16
          %809 = vsyncadd [#allocation21], %s808
          %s811 = sshll.u32 [#allocation20], 4
          %s812 = int_to_ptr.vmem [resolvable:$true] %s811
          %814 = dma.hbm_to_vmem [thread:$0]  %s15, 16, %s812, [#allocation21]
        $region68: #{tpu_custom_call.1} parent=11 // pred_fallthru
          _
        // Predicated region
        $region69: #{tpu_custom_call.1} parent=11 // pred_check
          %p815 = pneg %p417
        $region70: #{tpu_custom_call.1} parent=11 // pred_check_branch
          %817 = sbr.rel (%p815) target = $region72
        $region71: #{tpu_custom_call.1} parent=11 // pred_region
          %s819 = ssub.s32 512, 512
          %820 = vsyncadd [#allocation21], %s819
          %s821 = sshll.u32 [#allocation22], 4
          %s822 = int_to_ptr.vmem [resolvable:$true] %s821
          %827 = dma.hbm_to_vmem [thread:$0]  %s16, 512, %s822, [#allocation21], 128, 128, 8
        $region72: #{tpu_custom_call.1} parent=11 // pred_fallthru
          _
        // Predicated region
        $region73: #{tpu_custom_call.1} parent=11 // pred_check
          %p828 = pneg %p438
        $region74: #{tpu_custom_call.1} parent=11 // pred_check_branch
          %830 = sbr.rel (%p828) target = $region76
        $region75: #{tpu_custom_call.1} parent=11 // pred_region
          %s832 = ssub.s32 16, 16
          %833 = vsyncadd [#allocation24], %s832
          %s835 = sshll.u32 [#allocation23], 4
          %s836 = int_to_ptr.vmem [resolvable:$true] %s835
          %838 = dma.hbm_to_vmem [thread:$0]  %s17, 16, %s836, [#allocation24]
        $region76: #{tpu_custom_call.1} parent=11 // pred_fallthru
          _
        // Predicated region
        $region77: #{tpu_custom_call.1} parent=11 // pred_check
          %p839 = pneg %p459
        $region78: #{tpu_custom_call.1} parent=11 // pred_check_branch
          %841 = sbr.rel (%p839) target = $region80
        $region79: #{tpu_custom_call.1} parent=11 // pred_region
          %s843 = ssub.s32 512, 512
          %844 = vsyncadd [#allocation24], %s843
          %s845 = sshll.u32 [#allocation25], 4
          %s846 = int_to_ptr.vmem [resolvable:$true] %s845
          %851 = dma.hbm_to_vmem [thread:$0]  %s18, 512, %s846, [#allocation24], 128, 128, 8
        $region80: #{tpu_custom_call.1} parent=11 // pred_fallthru
          _
        // Predicated region
        $region81: #{tpu_custom_call.1} parent=11 // pred_check
          %p852 = pneg %p480
        $region82: #{tpu_custom_call.1} parent=11 // pred_check_branch
          %854 = sbr.rel (%p852) target = $region84
        $region83: #{tpu_custom_call.1} parent=11 // pred_region
          _
        $region84: #{tpu_custom_call.1} parent=11 // pred_fallthru
          _
        // Predicated region
        $region85: #{tpu_custom_call.1} parent=11 // pred_check
          %p855 = pneg %p501
        $region86: #{tpu_custom_call.1} parent=11 // pred_check_branch
          %857 = sbr.rel (%p855) target = $region88
        $region87: #{tpu_custom_call.1} parent=11 // pred_region
          _
        $region88: #{tpu_custom_call.1} parent=11 // pred_fallthru
          _
        // Predicated region
        $region89: #{tpu_custom_call.1} parent=11 // pred_check
          %p858 = pneg %p522
        $region90: #{tpu_custom_call.1} parent=11 // pred_check_branch
          %860 = sbr.rel (%p858) target = $region92
        $region91: #{tpu_custom_call.1} parent=11 // pred_region
          _
        $region92: #{tpu_custom_call.1} parent=11 // pred_fallthru
          _
        // Predicated region
        $region93: #{tpu_custom_call.1} parent=11 // pred_check
          %p861 = pneg %p543
        $region94: #{tpu_custom_call.1} parent=11 // pred_check_branch
          %863 = sbr.rel (%p861) target = $region96
        $region95: #{tpu_custom_call.1} parent=11 // pred_region
          %s865 = ssub.s32 512, 512
          %866 = vsyncadd [#allocation27], %s865
          %s867 = sshll.u32 [#allocation26], 4
          %s868 = int_to_ptr.vmem [resolvable:$true] %s867
          %873 = dma.hbm_to_vmem [thread:$0]  %s22, 512, %s868, [#allocation27], 128, 128, 8
        $region96: #{tpu_custom_call.1} parent=11 // pred_fallthru
          _
        // Predicated region
        $region97: #{tpu_custom_call.1} parent=11 // pred_check
          %p874 = pneg %p564
        $region98: #{tpu_custom_call.1} parent=11 // pred_check_branch
          %876 = sbr.rel (%p874) target = $region100
        $region99: #{tpu_custom_call.1} parent=11 // pred_region
          _
        $region100: #{tpu_custom_call.1} parent=11 // pred_fallthru
          _
        // Predicated region
        $region101: #{tpu_custom_call.1} parent=11 // pred_check
          %p877 = pneg %p585
        $region102: #{tpu_custom_call.1} parent=11 // pred_check_branch
          %879 = sbr.rel (%p877) target = $region104
        $region103: #{tpu_custom_call.1} parent=11 // pred_region
          _
        $region104: #{tpu_custom_call.1} parent=11 // pred_fallthru
          _
        // Predicated region
        $region105: #{tpu_custom_call.1} parent=11 // pred_check
          %p880 = pneg %p606
        $region106: #{tpu_custom_call.1} parent=11 // pred_check_branch
          %882 = sbr.rel (%p880) target = $region108
        $region107: #{tpu_custom_call.1} parent=11 // pred_region
          _
        $region108: #{tpu_custom_call.1} parent=11 // pred_fallthru
          _
        // Predicated region
        $region109: #{tpu_custom_call.1} parent=11 // pred_check
          %p883 = pneg %p627
        $region110: #{tpu_custom_call.1} parent=11 // pred_check_branch
          %885 = sbr.rel (%p883) target = $region112
        $region111: #{tpu_custom_call.1} parent=11 // pred_region
          _
        $region112: #{tpu_custom_call.1} parent=11 // pred_fallthru
          _
        // Predicated region
        $region113: #{tpu_custom_call.1} parent=11 // pred_check
          %p886 = pneg %p648
        $region114: #{tpu_custom_call.1} parent=11 // pred_check_branch
          %888 = sbr.rel (%p886) target = $region116
        $region115: #{tpu_custom_call.1} parent=11 // pred_region
          _
        $region116: #{tpu_custom_call.1} parent=11 // pred_fallthru
          _
      $region12: #{tpu_custom_call.1} parent=5 // pred_fallthru
        _
      %p889 = scmp.lt.s32.totalorder %s50, 2
      // Predicated region
      $region117: #{tpu_custom_call.1} parent=5 // pred_check
        %p890 = pneg %p889
      $region118: #{tpu_custom_call.1} parent=5 // pred_check_branch
        %892 = sbr.rel (%p890) target = $region120
      $region119: #{tpu_custom_call.1} parent=5 // pred_region
        // Predicated region
        $region121: #{tpu_custom_call.1} parent=119 // pred_check
          %p893 = pneg %p70
        $region122: #{tpu_custom_call.1} parent=119 // pred_check_branch
          %895 = sbr.rel (%p893) target = $region124
        $region123: #{tpu_custom_call.1} parent=119 // pred_region
          %s896 = sand.u32 %s60, 1
          %s897 = scalar_lea.sflag [#allocation3], %s896
          %s898 = sand.u32 %s60, 1
          %s899 = smul.addr %s898, 8
          %s900 = scalar_lea.vmem [#allocation2], %s899
          %s902 = ssub.s32 128, 128
          %903 = vsyncadd %s897, %s902
          %s904 = smul.addr %s50, 128
          %s905 = scalar_lea.hbm %s0, %s904
          %s907 = sshll.u32 %s900, 4
          %s908 = int_to_ptr.vmem [resolvable:$true] %s907
          %910 = dma.hbm_to_vmem [thread:$0]  %s905, 128, %s908, %s897
        $region124: #{tpu_custom_call.1} parent=119 // pred_fallthru
          _
        // Predicated region
        $region125: #{tpu_custom_call.1} parent=119 // pred_check
          %p911 = pneg %p96
        $region126: #{tpu_custom_call.1} parent=119 // pred_check_branch
          %913 = sbr.rel (%p911) target = $region128
        $region127: #{tpu_custom_call.1} parent=119 // pred_region
          %s914 = sand.u32 %s50, 1
          %s915 = scalar_lea.sflag [#allocation6], %s914
          %s916 = sand.u32 %s86, 1
          %s917 = smul.addr %s916, 8
          %s918 = scalar_lea.vmem [#allocation5], %s917
          %s920 = ssub.s32 128, 128
          %921 = vsyncadd %s915, %s920
          %s922 = smul.addr %s50, 128
          %s923 = scalar_lea.hbm %s1, %s922
          %s925 = sshll.u32 %s918, 4
          %s926 = int_to_ptr.vmem [resolvable:$true] %s925
          %928 = dma.hbm_to_vmem [thread:$0]  %s923, 128, %s926, %s915
        $region128: #{tpu_custom_call.1} parent=119 // pred_fallthru
          _
      $region120: #{tpu_custom_call.1} parent=5 // pred_fallthru
        _
      %p929 = scmp.le.s32.totalorder 1, %s50
      %p930 = scmp.lt.s32.totalorder %s50, 3
      %p931 = pnand %p929, %p930
      %p932 = pneg %p931
      // Predicated region
      $region129: #{tpu_custom_call.1} parent=5 // pred_check
        _
      $region130: #{tpu_custom_call.1} parent=5 // pred_check_branch
        %934 = sbr.rel (%p931) target = $region132
      $region131: #{tpu_custom_call.1} parent=5 // pred_region
        %s935 = ssub.s32 %s50, 1
        %s936 = sand.u32 %s63, 1
        %s937 = scalar_lea.sflag [#allocation3], %s936
        %s938 = sand.u32 %s63, 1
        %s939 = smul.addr %s938, 8
        %s940 = scalar_lea.vmem [#allocation2], %s939
        // Predicated region
        $region133: #{tpu_custom_call.1} parent=131 // pred_check
          %p941 = pneg %p76
        $region134: #{tpu_custom_call.1} parent=131 // pred_check_branch
          %943 = sbr.rel (%p941) target = $region136
        $region135: #{tpu_custom_call.1} parent=131 // pred_region
          %944 = dma.done %s937, 128
        $region136: #{tpu_custom_call.1} parent=131 // pred_fallthru
          _
        %s945 = sand.u32 %s55, 1
        %s946 = scalar_lea.sflag [#allocation6], %s945
        %s947 = sand.u32 %s89, 1
        %s948 = smul.addr %s947, 8
        %s949 = scalar_lea.vmem [#allocation5], %s948
        // Predicated region
        $region137: #{tpu_custom_call.1} parent=131 // pred_check
          %p950 = pneg %p102
        $region138: #{tpu_custom_call.1} parent=131 // pred_check_branch
          %952 = sbr.rel (%p950) target = $region140
        $region139: #{tpu_custom_call.1} parent=131 // pred_region
          %953 = dma.done %s946, 128
        $region140: #{tpu_custom_call.1} parent=131 // pred_fallthru
          _
        // Predicated region
        $region141: #{tpu_custom_call.1} parent=131 // pred_check
          %p954 = pneg %p144
        $region142: #{tpu_custom_call.1} parent=131 // pred_check_branch
          %956 = sbr.rel (%p954) target = $region144
        $region143: #{tpu_custom_call.1} parent=131 // pred_region
          %957 = dma.done [#allocation6], 16
        $region144: #{tpu_custom_call.1} parent=131 // pred_fallthru
          _
        // Predicated region
        $region145: #{tpu_custom_call.1} parent=131 // pred_check
          %p958 = pneg %p186
        $region146: #{tpu_custom_call.1} parent=131 // pred_check_branch
          %960 = sbr.rel (%p958) target = $region148
        $region147: #{tpu_custom_call.1} parent=131 // pred_region
          %961 = dma.done [#allocation9], 16
        $region148: #{tpu_custom_call.1} parent=131 // pred_fallthru
          _
        // Predicated region
        $region149: #{tpu_custom_call.1} parent=131 // pred_check
          %p962 = pneg %p228
        $region150: #{tpu_custom_call.1} parent=131 // pred_check_branch
          %964 = sbr.rel (%p962) target = $region152
        $region151: #{tpu_custom_call.1} parent=131 // pred_region
          %965 = dma.done [#allocation9], 16
        $region152: #{tpu_custom_call.1} parent=131 // pred_fallthru
          _
        // Predicated region
        $region153: #{tpu_custom_call.1} parent=131 // pred_check
          %p966 = pneg %p249
        $region154: #{tpu_custom_call.1} parent=131 // pred_check_branch
          %968 = sbr.rel (%p966) target = $region156
        $region155: #{tpu_custom_call.1} parent=131 // pred_region
          %969 = dma.done [#allocation12], 512
        $region156: #{tpu_custom_call.1} parent=131 // pred_fallthru
          _
        // Predicated region
        $region157: #{tpu_custom_call.1} parent=131 // pred_check
          %p970 = pneg %p270
        $region158: #{tpu_custom_call.1} parent=131 // pred_check_branch
          %972 = sbr.rel (%p970) target = $region160
        $region159: #{tpu_custom_call.1} parent=131 // pred_region
          %973 = dma.done [#allocation12], 16
        $region160: #{tpu_custom_call.1} parent=131 // pred_fallthru
          _
        // Predicated region
        $region161: #{tpu_custom_call.1} parent=131 // pred_check
          %p974 = pneg %p291
        $region162: #{tpu_custom_call.1} parent=131 // pred_check_branch
          %976 = sbr.rel (%p974) target = $region164
        $region163: #{tpu_custom_call.1} parent=131 // pred_region
          %977 = dma.done [#allocation15], 16
        $region164: #{tpu_custom_call.1} parent=131 // pred_fallthru
          _
        // Predicated region
        $region165: #{tpu_custom_call.1} parent=131 // pred_check
          %p978 = pneg %p312
        $region166: #{tpu_custom_call.1} parent=131 // pred_check_branch
          %980 = sbr.rel (%p978) target = $region168
        $region167: #{tpu_custom_call.1} parent=131 // pred_region
          %981 = dma.done [#allocation15], 16
        $region168: #{tpu_custom_call.1} parent=131 // pred_fallthru
          _
        // Predicated region
        $region169: #{tpu_custom_call.1} parent=131 // pred_check
          %p982 = pneg %p354
        $region170: #{tpu_custom_call.1} parent=131 // pred_check_branch
          %984 = sbr.rel (%p982) target = $region172
        $region171: #{tpu_custom_call.1} parent=131 // pred_region
          %985 = dma.done [#allocation18], 16
        $region172: #{tpu_custom_call.1} parent=131 // pred_fallthru
          _
        // Predicated region
        $region173: #{tpu_custom_call.1} parent=131 // pred_check
          %p986 = pneg %p375
        $region174: #{tpu_custom_call.1} parent=131 // pred_check_branch
          %988 = sbr.rel (%p986) target = $region176
        $region175: #{tpu_custom_call.1} parent=131 // pred_region
          %989 = dma.done [#allocation18], 512
        $region176: #{tpu_custom_call.1} parent=131 // pred_fallthru
          _
        // Predicated region
        $region177: #{tpu_custom_call.1} parent=131 // pred_check
          %p990 = pneg %p396
        $region178: #{tpu_custom_call.1} parent=131 // pred_check_branch
          %992 = sbr.rel (%p990) target = $region180
        $region179: #{tpu_custom_call.1} parent=131 // pred_region
          %993 = dma.done [#allocation21], 16
        $region180: #{tpu_custom_call.1} parent=131 // pred_fallthru
          _
        // Predicated region
        $region181: #{tpu_custom_call.1} parent=131 // pred_check
          %p994 = pneg %p417
        $region182: #{tpu_custom_call.1} parent=131 // pred_check_branch
          %996 = sbr.rel (%p994) target = $region184
        $region183: #{tpu_custom_call.1} parent=131 // pred_region
          %997 = dma.done [#allocation21], 512
        $region184: #{tpu_custom_call.1} parent=131 // pred_fallthru
          _
        // Predicated region
        $region185: #{tpu_custom_call.1} parent=131 // pred_check
          %p998 = pneg %p438
        $region186: #{tpu_custom_call.1} parent=131 // pred_check_branch
          %1000 = sbr.rel (%p998) target = $region188
        $region187: #{tpu_custom_call.1} parent=131 // pred_region
          %1001 = dma.done [#allocation24], 16
        $region188: #{tpu_custom_call.1} parent=131 // pred_fallthru
          _
        // Predicated region
        $region189: #{tpu_custom_call.1} parent=131 // pred_check
          %p1002 = pneg %p459
        $region190: #{tpu_custom_call.1} parent=131 // pred_check_branch
          %1004 = sbr.rel (%p1002) target = $region192
        $region191: #{tpu_custom_call.1} parent=131 // pred_region
          %1005 = dma.done [#allocation24], 512
        $region192: #{tpu_custom_call.1} parent=131 // pred_fallthru
          _
        // Predicated region
        $region193: #{tpu_custom_call.1} parent=131 // pred_check
          %p1006 = pneg %p543
        $region194: #{tpu_custom_call.1} parent=131 // pred_check_branch
          %1008 = sbr.rel (%p1006) target = $region196
        $region195: #{tpu_custom_call.1} parent=131 // pred_region
          %1009 = dma.done [#allocation27], 512
        $region196: #{tpu_custom_call.1} parent=131 // pred_fallthru
          _
        %s1010 = sand.u32 %s63, 1
        %s1011 = scalar_lea.sflag [#allocation3], %s1010
        %s1012 = sand.u32 %s63, 1
        %s1013 = smul.addr %s1012, 8
        %s1014 = scalar_lea.vmem [#allocation2], %s1013
        %p1015 = pneg %p76
        %p1016 = pneg %p73
        %s1017 = sand.u32 %s55, 1
        %s1018 = scalar_lea.sflag [#allocation6], %s1017
        %s1019 = sand.u32 %s89, 1
        %s1020 = smul.addr %s1019, 8
        %s1021 = scalar_lea.vmem [#allocation5], %s1020
        %p1022 = pneg %p102
        %p1023 = pneg %p99
        %p1024 = pneg %p123
        %p1025 = pneg %p120
        %p1026 = pneg %p144
        %p1027 = pneg %p141
        %p1028 = pneg %p165
        %p1029 = pneg %p162
        %p1030 = pneg %p186
        %p1031 = pneg %p183
        %p1032 = pneg %p207
        %p1033 = pneg %p204
        %p1034 = pneg %p228
        %p1035 = pneg %p225
        %p1036 = pneg %p249
        %p1037 = pneg %p246
        %p1038 = pneg %p270
        %p1039 = pneg %p267
        %p1040 = pneg %p291
        %p1041 = pneg %p288
        %p1042 = pneg %p312
        %p1043 = pneg %p309
        %p1044 = pneg %p333
        %p1045 = pneg %p330
        %p1046 = pneg %p354
        %p1047 = pneg %p351
        %p1048 = pneg %p375
        %p1049 = pneg %p372
        %p1050 = pneg %p396
        %p1051 = pneg %p393
        %p1052 = pneg %p417
        %p1053 = pneg %p414
        %p1054 = pneg %p438
        %p1055 = pneg %p435
        %p1056 = pneg %p459
        %p1057 = pneg %p456
        %p1058 = pneg %p480
        %p1059 = pneg %p477
        %p1060 = pneg %p501
        %p1061 = pneg %p498
        %p1062 = pneg %p522
        %p1063 = pneg %p519
        %p1064 = pneg %p543
        %p1065 = pneg %p540
        %p1066 = pneg %p564
        %p1067 = pneg %p561
        %p1068 = pneg %p585
        %p1069 = pneg %p582
        %p1070 = pneg %p606
        %p1071 = pneg %p603
        %p1072 = pneg %p627
        %p1073 = pneg %p624
        %p1074 = pneg %p648
        %p1075 = pneg %p645
        %p1076 = pneg %p674
        %p1077 = pneg %p671
        %s1078 = sand.u32 %s661, 1
        %s1079 = scalar_lea.sflag [#allocation4], %s1078
        %s1080 = sand.u32 %s661, 1
        %s1081 = smul.addr %s1080, 8
        %s1082 = scalar_lea.vmem [#allocation28], %s1081
        %v1083 = vld [vmem:[%s2] sm:$0xff]
        %v1084 = vld [vmem:[%s2 + $0x8] sm:$0xff]
        %v1085 = vld [vmem:[%s2 + $0x10] sm:$0xff]
        %v1086 = vld [vmem:[%s2 + $0x18] sm:$0xff]
        %v1087 = vld [vmem:[#allocation7] sm:$0x1]
        %v1088 = vld [vmem:[%s4] sm:$0xff]
        %v1089 = vld [vmem:[%s4 + $0x8] sm:$0xff]
        %v1090 = vld [vmem:[%s4 + $0x10] sm:$0xff]
        %v1091 = vld [vmem:[%s4 + $0x18] sm:$0xff]
        %v1092 = vld [vmem:[#allocation8] sm:$0x1]
        %v1093 = vld [vmem:[%s6] sm:$0xff]
        %v1094 = vld [vmem:[%s6 + $0x8] sm:$0xff]
        %v1095 = vld [vmem:[%s6 + $0x10] sm:$0xff]
        %v1096 = vld [vmem:[%s6 + $0x18] sm:$0xff]
        %v1097 = vld [vmem:[#allocation10] sm:$0x1]
        %v1098 = vld [vmem:[#allocation11] sm:$0xff]
        %v1099 = vld [vmem:[#allocation11 + $0x8] sm:$0xff]
        %v1100 = vld [vmem:[#allocation11 + $0x10] sm:$0xff]
        %v1101 = vld [vmem:[#allocation11 + $0x18] sm:$0xff]
        %v1102 = vld [vmem:[#allocation13] sm:$0x1]
        %v1103 = vld [vmem:[#allocation14] sm:$0x1]
        %v1104 = vld [vmem:[#allocation16] sm:$0x1]
        %v1105 = vld [vmem:[%s12] sm:$0xff]
        %v1106 = vld [vmem:[%s12 + $0x8] sm:$0xff]
        %v1107 = vld [vmem:[%s12 + $0x10] sm:$0xff]
        %v1108 = vld [vmem:[%s12 + $0x18] sm:$0xff]
        %v1109 = vld [vmem:[#allocation17] sm:$0x1]
        %v1110 = vld [vmem:[#allocation19] sm:$0xff]
        %v1111 = vld [vmem:[#allocation19 + $0x8] sm:$0xff]
        %v1112 = vld [vmem:[#allocation19 + $0x10] sm:$0xff]
        %v1113 = vld [vmem:[#allocation19 + $0x18] sm:$0xff]
        %v1114 = vld [vmem:[#allocation20] sm:$0x1]
        %v1115 = vld [vmem:[#allocation22] sm:$0xff]
        %v1116 = vld [vmem:[#allocation22 + $0x8] sm:$0xff]
        %v1117 = vld [vmem:[#allocation22 + $0x10] sm:$0xff]
        %v1118 = vld [vmem:[#allocation22 + $0x18] sm:$0xff]
        %v1119 = vld [vmem:[#allocation23] sm:$0x1]
        %v1120 = vld [vmem:[#allocation25] sm:$0xff]
        %v1121 = vld [vmem:[#allocation25 + $0x8] sm:$0xff]
        %v1122 = vld [vmem:[#allocation25 + $0x10] sm:$0xff]
        %v1123 = vld [vmem:[#allocation25 + $0x18] sm:$0xff]
        %v1124 = vld [vmem:[%s19] sm:$0x1]
        %v1125 = vld [vmem:[%s20] sm:$0x1]
        %v1126 = vld [vmem:[%s21] sm:$0x1]
        %v1127 = vld [vmem:[#allocation26] sm:$0xff]
        %v1128 = vld [vmem:[#allocation26 + $0x8] sm:$0xff]
        %v1129 = vld [vmem:[#allocation26 + $0x10] sm:$0xff]
        %v1130 = vld [vmem:[#allocation26 + $0x18] sm:$0xff]
        %v1131 = vld [vmem:[%s23] sm:$0x1]
        %v1132 = vld [vmem:[%s24] sm:$0xff]
        %v1133 = vld [vmem:[%s24 + $0x8] sm:$0xff]
        %v1134 = vld [vmem:[%s24 + $0x10] sm:$0xff]
        %v1135 = vld [vmem:[%s24 + $0x18] sm:$0xff]
        %v1136 = vld [vmem:[%s24 + $0x20] sm:$0xff]
        %v1137 = vld [vmem:[%s24 + $0x28] sm:$0xff]
        %v1138 = vld [vmem:[%s24 + $0x30] sm:$0xff]
        %v1139 = vld [vmem:[%s24 + $0x38] sm:$0xff]
        %v1140 = vld [vmem:[%s25] sm:$0x1]
        %v1141 = vld [vmem:[%s26] sm:$0x1]
        %v1142 = vld [vmem:[%s27] sm:$0x1]
        %v1143 = vld [vmem:[%s940] sm:$0xff]
        %v1144 = vld [vmem:[%s949] sm:$0xff]
        %v1146 = vlaneseq
        %v1147 = vshrl.u32 %v1146, 7
        %v1148 = vsub.s32 0, %v1147
        %v1149 = vrot.slane %v1087, %v1148
        %vm1151 = vcmask 261120
        %v1153 = vsel %vm1151, %v1143, 0
        %1155 = vmatprep.subr.mxu0 0.0
        %1156 = vmatpush1.msra.mxu0 %v1083
        %1157 = vmatprep.subr.mxu0 0.0
        %1158 = vmatpush1.msra.mxu0 %v1084
        %1159 = vmatprep.subr.mxu0 0.0
        %1160 = vmatpush1.msra.mxu0 %v1085
        %1161 = vmatprep.subr.mxu0 0.0
        %1162 = vmatpush1.msra.mxu0 %v1086
        %1163 = vmatprep.subr.mxu0 0.0
        %1164 = vmatpush1.msra.mxu0 0.0
        %1165 = vmatprep.subr.mxu0 0.0
        %1166 = vmatpush1.msra.mxu0 0.0
        %1167 = vmatprep.subr.mxu0 0.0
        %1168 = vmatpush1.msra.mxu0 0.0
        %1169 = vmatprep.subr.mxu0 0.0
        %1170 = vmatpush1.msra.mxu0 0.0
        %1171 = vmatprep.subr.mxu0 0.0
        %1172 = vmatpush1.msra.mxu0 0.0
        %1173 = vmatprep.subr.mxu0 0.0
        %1174 = vmatpush1.msra.mxu0 0.0
        %1175 = vmatprep.subr.mxu0 0.0
        %1176 = vmatpush1.msra.mxu0 0.0
        %1177 = vmatprep.subr.mxu0 0.0
        %1178 = vmatpush1.msra.mxu0 0.0
        %1179 = vmatprep.subr.mxu0 0.0
        %1180 = vmatpush1.msra.mxu0 0.0
        %1181 = vmatprep.subr.mxu0 0.0
        %1182 = vmatpush1.msra.mxu0 0.0
        %1183 = vmatprep.subr.mxu0 0.0
        %1184 = vmatpush1.msra.mxu0 0.0
        %1185 = vmatprep.subr.mxu0 0.0
        %1186 = vmatpush1.msra.mxu0 0.0
        %1187 = vmatprep.subr.mxu0 0.0
        %1188 = vmatpush1.msra.mxu0 0.0
        %1189 = vmatprep.subr.mxu0 0.0
        %1190 = vmatpush1.msra.mxu0 0.0
        %1191 = vmatprep.subr.mxu0 0.0
        %1192 = vmatpush1.msra.mxu0 0.0
        %1193 = vmatprep.subr.mxu0 0.0
        %1194 = vmatpush1.msra.mxu0 0.0
        %1195 = vmatprep.subr.mxu0 0.0
        %1196 = vmatpush1.msra.mxu0 0.0
        %1197 = vmatprep.subr.mxu0 0.0
        %1198 = vmatpush1.msra.mxu0 0.0
        %1199 = vmatprep.subr.mxu0 0.0
        %1200 = vmatpush1.msra.mxu0 0.0
        %1201 = vmatprep.subr.mxu0 0.0
        %1202 = vmatpush1.msra.mxu0 0.0
        %1203 = vmatprep.subr.mxu0 0.0
        %1204 = vmatpush1.msra.mxu0 0.0
        %1205 = vmatprep.subr.mxu0 0.0
        %1206 = vmatpush1.msra.mxu0 0.0
        %1207 = vmatprep.subr.mxu0 0.0
        %1208 = vmatpush1.msra.mxu0 0.0
        %1209 = vmatprep.subr.mxu0 0.0
        %1210 = vmatpush1.msra.mxu0 0.0
        %1211 = vmatprep.subr.mxu0 0.0
        %1212 = vmatpush1.msra.mxu0 0.0
        %1213 = vmatprep.subr.mxu0 0.0
        %1214 = vmatpush1.msra.mxu0 0.0
        %1215 = vmatprep.subr.mxu0 0.0
        %1216 = vmatpush1.msra.mxu0 0.0
        %1217 = vmatprep.subr.mxu0 0.0
        %1218 = vmatpush1.msra.mxu0 0.0
        %1219 = vmatprep.mubr.f32.mxu0 0.0
        %1220 = vmatmul.mubr.f32.gmra.mrb[0].mxu0 %v1153
        %v1221 = vpop.f32.mrb[0].mxu0
        %v1222 = vadd.f32 %v1149, %v1221
        %v1223 = vpop.f32.mrb[0].mxu0
        %1224 = vdwg.mxu0
        %v1226 = vlaneseq
        %v1227 = vshrl.u32 %v1226, 7
        %v1228 = vsub.s32 0, %v1227
        %v1229 = vrot.slane %v1092, %v1228
        %1231 = vmatprep.subr.mxu0 0.0
        %1232 = vmatpush1.msra.mxu0 %v1088
        %1233 = vmatprep.subr.mxu0 0.0
        %1234 = vmatpush1.msra.mxu0 %v1089
        %1235 = vmatprep.subr.mxu0 0.0
        %1236 = vmatpush1.msra.mxu0 %v1090
        %1237 = vmatprep.subr.mxu0 0.0
        %1238 = vmatpush1.msra.mxu0 %v1091
        %1239 = vmatprep.subr.mxu0 0.0
        %1240 = vmatpush1.msra.mxu0 0.0
        %1241 = vmatprep.subr.mxu0 0.0
        %1242 = vmatpush1.msra.mxu0 0.0
        %1243 = vmatprep.subr.mxu0 0.0
        %1244 = vmatpush1.msra.mxu0 0.0
        %1245 = vmatprep.subr.mxu0 0.0
        %1246 = vmatpush1.msra.mxu0 0.0
        %1247 = vmatprep.subr.mxu0 0.0
        %1248 = vmatpush1.msra.mxu0 0.0
        %1249 = vmatprep.subr.mxu0 0.0
        %1250 = vmatpush1.msra.mxu0 0.0
        %1251 = vmatprep.subr.mxu0 0.0
        %1252 = vmatpush1.msra.mxu0 0.0
        %1253 = vmatprep.subr.mxu0 0.0
        %1254 = vmatpush1.msra.mxu0 0.0
        %1255 = vmatprep.subr.mxu0 0.0
        %1256 = vmatpush1.msra.mxu0 0.0
        %1257 = vmatprep.subr.mxu0 0.0
        %1258 = vmatpush1.msra.mxu0 0.0
        %1259 = vmatprep.subr.mxu0 0.0
        %1260 = vmatpush1.msra.mxu0 0.0
        %1261 = vmatprep.subr.mxu0 0.0
        %1262 = vmatpush1.msra.mxu0 0.0
        %1263 = vmatprep.subr.mxu0 0.0
        %1264 = vmatpush1.msra.mxu0 0.0
        %1265 = vmatprep.subr.mxu0 0.0
        %1266 = vmatpush1.msra.mxu0 0.0
        %1267 = vmatprep.subr.mxu0 0.0
        %1268 = vmatpush1.msra.mxu0 0.0
        %1269 = vmatprep.subr.mxu0 0.0
        %1270 = vmatpush1.msra.mxu0 0.0
        %1271 = vmatprep.subr.mxu0 0.0
        %1272 = vmatpush1.msra.mxu0 0.0
        %1273 = vmatprep.subr.mxu0 0.0
        %1274 = vmatpush1.msra.mxu0 0.0
        %1275 = vmatprep.subr.mxu0 0.0
        %1276 = vmatpush1.msra.mxu0 0.0
        %1277 = vmatprep.subr.mxu0 0.0
        %1278 = vmatpush1.msra.mxu0 0.0
        %1279 = vmatprep.subr.mxu0 0.0
        %1280 = vmatpush1.msra.mxu0 0.0
        %1281 = vmatprep.subr.mxu0 0.0
        %1282 = vmatpush1.msra.mxu0 0.0
        %1283 = vmatprep.subr.mxu0 0.0
        %1284 = vmatpush1.msra.mxu0 0.0
        %1285 = vmatprep.subr.mxu0 0.0
        %1286 = vmatpush1.msra.mxu0 0.0
        %1287 = vmatprep.subr.mxu0 0.0
        %1288 = vmatpush1.msra.mxu0 0.0
        %1289 = vmatprep.subr.mxu0 0.0
        %1290 = vmatpush1.msra.mxu0 0.0
        %1291 = vmatprep.subr.mxu0 0.0
        %1292 = vmatpush1.msra.mxu0 0.0
        %1293 = vmatprep.subr.mxu0 0.0
        %1294 = vmatpush1.msra.mxu0 0.0
        %1295 = vmatprep.mubr.f32.mxu0 0.0
        %1296 = vmatmul.mubr.f32.gmra.mrb[0].mxu0 %v1153
        %v1297 = vpop.f32.mrb[0].mxu0
        %v1298 = vadd.f32 %v1229, %v1297
        %v1299 = vpop.f32.mrb[0].mxu0
        %1300 = vdwg.mxu0
        %v1302 = vlaneseq
        %v1303 = vshrl.u32 %v1302, 7
        %v1304 = vsub.s32 0, %v1303
        %v1305 = vrot.slane %v1097, %v1304
        %1307 = vmatprep.subr.mxu0 0.0
        %1308 = vmatpush1.msra.mxu0 %v1093
        %1309 = vmatprep.subr.mxu0 0.0
        %1310 = vmatpush1.msra.mxu0 %v1094
        %1311 = vmatprep.subr.mxu0 0.0
        %1312 = vmatpush1.msra.mxu0 %v1095
        %1313 = vmatprep.subr.mxu0 0.0
        %1314 = vmatpush1.msra.mxu0 %v1096
        %1315 = vmatprep.subr.mxu0 0.0
        %1316 = vmatpush1.msra.mxu0 0.0
        %1317 = vmatprep.subr.mxu0 0.0
        %1318 = vmatpush1.msra.mxu0 0.0
        %1319 = vmatprep.subr.mxu0 0.0
        %1320 = vmatpush1.msra.mxu0 0.0
        %1321 = vmatprep.subr.mxu0 0.0
        %1322 = vmatpush1.msra.mxu0 0.0
        %1323 = vmatprep.subr.mxu0 0.0
        %1324 = vmatpush1.msra.mxu0 0.0
        %1325 = vmatprep.subr.mxu0 0.0
        %1326 = vmatpush1.msra.mxu0 0.0
        %1327 = vmatprep.subr.mxu0 0.0
        %1328 = vmatpush1.msra.mxu0 0.0
        %1329 = vmatprep.subr.mxu0 0.0
        %1330 = vmatpush1.msra.mxu0 0.0
        %1331 = vmatprep.subr.mxu0 0.0
        %1332 = vmatpush1.msra.mxu0 0.0
        %1333 = vmatprep.subr.mxu0 0.0
        %1334 = vmatpush1.msra.mxu0 0.0
        %1335 = vmatprep.subr.mxu0 0.0
        %1336 = vmatpush1.msra.mxu0 0.0
        %1337 = vmatprep.subr.mxu0 0.0
        %1338 = vmatpush1.msra.mxu0 0.0
        %1339 = vmatprep.subr.mxu0 0.0
        %1340 = vmatpush1.msra.mxu0 0.0
        %1341 = vmatprep.subr.mxu0 0.0
        %1342 = vmatpush1.msra.mxu0 0.0
        %1343 = vmatprep.subr.mxu0 0.0
        %1344 = vmatpush1.msra.mxu0 0.0
        %1345 = vmatprep.subr.mxu0 0.0
        %1346 = vmatpush1.msra.mxu0 0.0
        %1347 = vmatprep.subr.mxu0 0.0
        %1348 = vmatpush1.msra.mxu0 0.0
        %1349 = vmatprep.subr.mxu0 0.0
        %1350 = vmatpush1.msra.mxu0 0.0
        %1351 = vmatprep.subr.mxu0 0.0
        %1352 = vmatpush1.msra.mxu0 0.0
        %1353 = vmatprep.subr.mxu0 0.0
        %1354 = vmatpush1.msra.mxu0 0.0
        %1355 = vmatprep.subr.mxu0 0.0
        %1356 = vmatpush1.msra.mxu0 0.0
        %1357 = vmatprep.subr.mxu0 0.0
        %1358 = vmatpush1.msra.mxu0 0.0
        %1359 = vmatprep.subr.mxu0 0.0
        %1360 = vmatpush1.msra.mxu0 0.0
        %1361 = vmatprep.subr.mxu0 0.0
        %1362 = vmatpush1.msra.mxu0 0.0
        %1363 = vmatprep.subr.mxu0 0.0
        %1364 = vmatpush1.msra.mxu0 0.0
        %1365 = vmatprep.subr.mxu0 0.0
        %1366 = vmatpush1.msra.mxu0 0.0
        %1367 = vmatprep.subr.mxu0 0.0
        %1368 = vmatpush1.msra.mxu0 0.0
        %1369 = vmatprep.subr.mxu0 0.0
        %1370 = vmatpush1.msra.mxu0 0.0
        %1371 = vmatprep.mubr.f32.mxu0 0.0
        %1372 = vmatmul.mubr.f32.gmra.mrb[0].mxu0 %v1153
        %v1373 = vpop.f32.mrb[0].mxu0
        %v1374 = vadd.f32 %v1305, %v1373
        %v1375 = vpop.f32.mrb[0].mxu0
        %1376 = vdwg.mxu0
        %1378 = vrot.lane.b32.xlu0 %v1222, 120
        %v1379 = vpop.permute.xlu0 %1378
        %1381 = vrot.lane.b32.xlu0 %v1222, 112
        %v1382 = vpop.permute.xlu0 %1381
        %1384 = vrot.lane.b32.xlu0 %v1222, 104
        %v1385 = vpop.permute.xlu0 %1384
        %v1387 = vcombine.low %v1222, %v1382
        %v1388 = vcombine.high %v1222, %v1382
        %v1390 = vunpack.c.l.s4 1983009808
        %v1391 = vunpack.c.0.s8 %v1390
        %v1392 = vlaneseq
        %v1393 = vshrl.u32 %v1392, 7
        %v1394 = vsub.s32 %v1391, %v1393
        %v1395 = vrot.slane %v1387, %v1394
        %v1397 = vunpack.c.l.s4 1983009808
        %v1398 = vunpack.c.0.s8 %v1397
        %v1399 = vlaneseq
        %v1400 = vshrl.u32 %v1399, 7
        %v1401 = vsub.s32 %v1398, %v1400
        %v1402 = vrot.slane %v1388, %v1401
        %v1403 = vcombine.low %v1379, %v1385
        %v1404 = vcombine.high %v1379, %v1385
        %v1406 = vunpack.c.l.s4 1983009808
        %v1407 = vunpack.c.0.s8 %v1406
        %v1408 = vlaneseq
        %v1409 = vshrl.u32 %v1408, 7
        %v1410 = vsub.s32 %v1407, %v1409
        %v1411 = vrot.slane %v1403, %v1410
        %v1413 = vunpack.c.l.s4 1983009808
        %v1414 = vunpack.c.0.s8 %v1413
        %v1415 = vlaneseq
        %v1416 = vshrl.u32 %v1415, 7
        %v1417 = vsub.s32 %v1414, %v1416
        %v1418 = vrot.slane %v1404, %v1417
        %v1419 = vcombine.low %v1395, %v1411
        %v1420 = vcombine.high %v1395, %v1411
        %v1422 = vunpack.c.l.s4 1934713408
        %v1423 = vunpack.c.0.s8 %v1422
        %v1424 = vlaneseq
        %v1425 = vshrl.u32 %v1424, 7
        %v1426 = vsub.s32 %v1423, %v1425
        %v1427 = vrot.slane %v1419, %v1426
        %v1429 = vunpack.c.l.s4 1934713408
        %v1430 = vunpack.c.0.s8 %v1429
        %v1431 = vlaneseq
        %v1432 = vshrl.u32 %v1431, 7
        %v1433 = vsub.s32 %v1430, %v1432
        %v1434 = vrot.slane %v1420, %v1433
        %v1435 = vcombine.low %v1402, %v1418
        %v1436 = vcombine.high %v1402, %v1418
        %v1438 = vunpack.c.l.s4 1934713408
        %v1439 = vunpack.c.0.s8 %v1438
        %v1440 = vlaneseq
        %v1441 = vshrl.u32 %v1440, 7
        %v1442 = vsub.s32 %v1439, %v1441
        %v1443 = vrot.slane %v1435, %v1442
        %v1445 = vunpack.c.l.s4 1934713408
        %v1446 = vunpack.c.0.s8 %v1445
        %v1447 = vlaneseq
        %v1448 = vshrl.u32 %v1447, 7
        %v1449 = vsub.s32 %v1446, %v1448
        %v1450 = vrot.slane %v1436, %v1449
        %v1451 = vcombine.high %v1427, 0.0
        %v1452 = vcombine.high %v1434, 0.0
        %v1453 = vcombine.high %v1443, 0.0
        %v1454 = vcombine.high %v1450, 0.0
        %v1455 = vcombine.low %v1427, %v1434
        %v1457 = vunpack.c.l.s4 1983009808
        %v1458 = vunpack.c.0.s8 %v1457
        %v1459 = vlaneseq
        %v1460 = vshrl.u32 %v1459, 7
        %v1461 = vsub.s32 %v1458, %v1460
        %v1462 = vrot.slane %v1455, %v1461
        %v1463 = vcombine.low %v1451, %v1452
        %v1465 = vunpack.c.l.s4 1983009808
        %v1466 = vunpack.c.0.s8 %v1465
        %v1467 = vlaneseq
        %v1468 = vshrl.u32 %v1467, 7
        %v1469 = vsub.s32 %v1466, %v1468
        %v1470 = vrot.slane %v1463, %v1469
        %v1471 = vcombine.low %v1443, %v1450
        %v1473 = vunpack.c.l.s4 1983009808
        %v1474 = vunpack.c.0.s8 %v1473
        %v1475 = vlaneseq
        %v1476 = vshrl.u32 %v1475, 7
        %v1477 = vsub.s32 %v1474, %v1476
        %v1478 = vrot.slane %v1471, %v1477
        %v1479 = vcombine.low %v1453, %v1454
        %v1481 = vunpack.c.l.s4 1983009808
        %v1482 = vunpack.c.0.s8 %v1481
        %v1483 = vlaneseq
        %v1484 = vshrl.u32 %v1483, 7
        %v1485 = vsub.s32 %v1482, %v1484
        %v1486 = vrot.slane %v1479, %v1485
        %v1487 = vcombine.low %v1462, %v1470
        %v1488 = vcombine.high %v1462, %v1470
        %v1490 = vunpack.c.l.s4 1934713408
        %v1491 = vunpack.c.0.s8 %v1490
        %v1492 = vlaneseq
        %v1493 = vshrl.u32 %v1492, 7
        %v1494 = vsub.s32 %v1491, %v1493
        %v1495 = vrot.slane %v1487, %v1494
        %v1497 = vunpack.c.l.s4 1934713408
        %v1498 = vunpack.c.0.s8 %v1497
        %v1499 = vlaneseq
        %v1500 = vshrl.u32 %v1499, 7
        %v1501 = vsub.s32 %v1498, %v1500
        %v1502 = vrot.slane %v1488, %v1501
        %v1503 = vcombine.low %v1478, %v1486
        %v1504 = vcombine.high %v1478, %v1486
        %v1506 = vunpack.c.l.s4 1934713408
        %v1507 = vunpack.c.0.s8 %v1506
        %v1508 = vlaneseq
        %v1509 = vshrl.u32 %v1508, 7
        %v1510 = vsub.s32 %v1507, %v1509
        %v1511 = vrot.slane %v1503, %v1510
        %v1513 = vunpack.c.l.s4 1934713408
        %v1514 = vunpack.c.0.s8 %v1513
        %v1515 = vlaneseq
        %v1516 = vshrl.u32 %v1515, 7
        %v1517 = vsub.s32 %v1514, %v1516
        %v1518 = vrot.slane %v1504, %v1517
        %v1519 = vcombine.low %v1495, %v1511
        %v1520 = vcombine.high %v1495, %v1511
        %v1521 = vcombine.low %v1502, %v1518
        %v1522 = vcombine.high %v1502, %v1518
        %1524 = vrot.lane.b32.xlu0 %v1298, 120
        %v1525 = vpop.permute.xlu0 %1524
        %1527 = vrot.lane.b32.xlu0 %v1298, 112
        %v1528 = vpop.permute.xlu0 %1527
        %1530 = vrot.lane.b32.xlu0 %v1298, 104
        %v1531 = vpop.permute.xlu0 %1530
        %v1533 = vcombine.low %v1298, %v1528
        %v1534 = vcombine.high %v1298, %v1528
        %v1536 = vunpack.c.l.s4 1983009808
        %v1537 = vunpack.c.0.s8 %v1536
        %v1538 = vlaneseq
        %v1539 = vshrl.u32 %v1538, 7
        %v1540 = vsub.s32 %v1537, %v1539
        %v1541 = vrot.slane %v1533, %v1540
        %v1543 = vunpack.c.l.s4 1983009808
        %v1544 = vunpack.c.0.s8 %v1543
        %v1545 = vlaneseq
        %v1546 = vshrl.u32 %v1545, 7
        %v1547 = vsub.s32 %v1544, %v1546
        %v1548 = vrot.slane %v1534, %v1547
        %v1549 = vcombine.low %v1525, %v1531
        %v1550 = vcombine.high %v1525, %v1531
        %v1552 = vunpack.c.l.s4 1983009808
        %v1553 = vunpack.c.0.s8 %v1552
        %v1554 = vlaneseq
        %v1555 = vshrl.u32 %v1554, 7
        %v1556 = vsub.s32 %v1553, %v1555
        %v1557 = vrot.slane %v1549, %v1556
        %v1559 = vunpack.c.l.s4 1983009808
        %v1560 = vunpack.c.0.s8 %v1559
        %v1561 = vlaneseq
        %v1562 = vshrl.u32 %v1561, 7
        %v1563 = vsub.s32 %v1560, %v1562
        %v1564 = vrot.slane %v1550, %v1563
        %v1565 = vcombine.low %v1541, %v1557
        %v1566 = vcombine.high %v1541, %v1557
        %v1568 = vunpack.c.l.s4 1934713408
        %v1569 = vunpack.c.0.s8 %v1568
        %v1570 = vlaneseq
        %v1571 = vshrl.u32 %v1570, 7
        %v1572 = vsub.s32 %v1569, %v1571
        %v1573 = vrot.slane %v1565, %v1572
        %v1575 = vunpack.c.l.s4 1934713408
        %v1576 = vunpack.c.0.s8 %v1575
        %v1577 = vlaneseq
        %v1578 = vshrl.u32 %v1577, 7
        %v1579 = vsub.s32 %v1576, %v1578
        %v1580 = vrot.slane %v1566, %v1579
        %v1581 = vcombine.low %v1548, %v1564
        %v1582 = vcombine.high %v1548, %v1564
        %v1584 = vunpack.c.l.s4 1934713408
        %v1585 = vunpack.c.0.s8 %v1584
        %v1586 = vlaneseq
        %v1587 = vshrl.u32 %v1586, 7
        %v1588 = vsub.s32 %v1585, %v1587
        %v1589 = vrot.slane %v1581, %v1588
        %v1591 = vunpack.c.l.s4 1934713408
        %v1592 = vunpack.c.0.s8 %v1591
        %v1593 = vlaneseq
        %v1594 = vshrl.u32 %v1593, 7
        %v1595 = vsub.s32 %v1592, %v1594
        %v1596 = vrot.slane %v1582, %v1595
        %v1597 = vcombine.high %v1573, 0.0
        %v1598 = vcombine.high %v1580, 0.0
        %v1599 = vcombine.high %v1589, 0.0
        %v1600 = vcombine.high %v1596, 0.0
        %v1601 = vcombine.low %v1573, %v1580
        %v1603 = vunpack.c.l.s4 1983009808
        %v1604 = vunpack.c.0.s8 %v1603
        %v1605 = vlaneseq
        %v1606 = vshrl.u32 %v1605, 7
        %v1607 = vsub.s32 %v1604, %v1606
        %v1608 = vrot.slane %v1601, %v1607
        %v1609 = vcombine.low %v1597, %v1598
        %v1611 = vunpack.c.l.s4 1983009808
        %v1612 = vunpack.c.0.s8 %v1611
        %v1613 = vlaneseq
        %v1614 = vshrl.u32 %v1613, 7
        %v1615 = vsub.s32 %v1612, %v1614
        %v1616 = vrot.slane %v1609, %v1615
        %v1617 = vcombine.low %v1589, %v1596
        %v1619 = vunpack.c.l.s4 1983009808
        %v1620 = vunpack.c.0.s8 %v1619
        %v1621 = vlaneseq
        %v1622 = vshrl.u32 %v1621, 7
        %v1623 = vsub.s32 %v1620, %v1622
        %v1624 = vrot.slane %v1617, %v1623
        %v1625 = vcombine.low %v1599, %v1600
        %v1627 = vunpack.c.l.s4 1983009808
        %v1628 = vunpack.c.0.s8 %v1627
        %v1629 = vlaneseq
        %v1630 = vshrl.u32 %v1629, 7
        %v1631 = vsub.s32 %v1628, %v1630
        %v1632 = vrot.slane %v1625, %v1631
        %v1633 = vcombine.low %v1608, %v1616
        %v1634 = vcombine.high %v1608, %v1616
        %v1636 = vunpack.c.l.s4 1934713408
        %v1637 = vunpack.c.0.s8 %v1636
        %v1638 = vlaneseq
        %v1639 = vshrl.u32 %v1638, 7
        %v1640 = vsub.s32 %v1637, %v1639
        %v1641 = vrot.slane %v1633, %v1640
        %v1643 = vunpack.c.l.s4 1934713408
        %v1644 = vunpack.c.0.s8 %v1643
        %v1645 = vlaneseq
        %v1646 = vshrl.u32 %v1645, 7
        %v1647 = vsub.s32 %v1644, %v1646
        %v1648 = vrot.slane %v1634, %v1647
        %v1649 = vcombine.low %v1624, %v1632
        %v1650 = vcombine.high %v1624, %v1632
        %v1652 = vunpack.c.l.s4 1934713408
        %v1653 = vunpack.c.0.s8 %v1652
        %v1654 = vlaneseq
        %v1655 = vshrl.u32 %v1654, 7
        %v1656 = vsub.s32 %v1653, %v1655
        %v1657 = vrot.slane %v1649, %v1656
        %v1659 = vunpack.c.l.s4 1934713408
        %v1660 = vunpack.c.0.s8 %v1659
        %v1661 = vlaneseq
        %v1662 = vshrl.u32 %v1661, 7
        %v1663 = vsub.s32 %v1660, %v1662
        %v1664 = vrot.slane %v1650, %v1663
        %v1665 = vcombine.low %v1641, %v1657
        %v1666 = vcombine.high %v1641, %v1657
        %v1667 = vcombine.low %v1648, %v1664
        %v1668 = vcombine.high %v1648, %v1664
        %1670 = vrot.lane.b32.xlu0 %v1374, 120
        %v1671 = vpop.permute.xlu0 %1670
        %1673 = vrot.lane.b32.xlu0 %v1374, 112
        %v1674 = vpop.permute.xlu0 %1673
        %1676 = vrot.lane.b32.xlu0 %v1374, 104
        %v1677 = vpop.permute.xlu0 %1676
        %v1679 = vcombine.low %v1374, %v1674
        %v1680 = vcombine.high %v1374, %v1674
        %v1682 = vunpack.c.l.s4 1983009808
        %v1683 = vunpack.c.0.s8 %v1682
        %v1684 = vlaneseq
        %v1685 = vshrl.u32 %v1684, 7
        %v1686 = vsub.s32 %v1683, %v1685
        %v1687 = vrot.slane %v1679, %v1686
        %v1689 = vunpack.c.l.s4 1983009808
        %v1690 = vunpack.c.0.s8 %v1689
        %v1691 = vlaneseq
        %v1692 = vshrl.u32 %v1691, 7
        %v1693 = vsub.s32 %v1690, %v1692
        %v1694 = vrot.slane %v1680, %v1693
        %v1695 = vcombine.low %v1671, %v1677
        %v1696 = vcombine.high %v1671, %v1677
        %v1698 = vunpack.c.l.s4 1983009808
        %v1699 = vunpack.c.0.s8 %v1698
        %v1700 = vlaneseq
        %v1701 = vshrl.u32 %v1700, 7
        %v1702 = vsub.s32 %v1699, %v1701
        %v1703 = vrot.slane %v1695, %v1702
        %v1705 = vunpack.c.l.s4 1983009808
        %v1706 = vunpack.c.0.s8 %v1705
        %v1707 = vlaneseq
        %v1708 = vshrl.u32 %v1707, 7
        %v1709 = vsub.s32 %v1706, %v1708
        %v1710 = vrot.slane %v1696, %v1709
        %v1711 = vcombine.low %v1687, %v1703
        %v1712 = vcombine.high %v1687, %v1703
        %v1714 = vunpack.c.l.s4 1934713408
        %v1715 = vunpack.c.0.s8 %v1714
        %v1716 = vlaneseq
        %v1717 = vshrl.u32 %v1716, 7
        %v1718 = vsub.s32 %v1715, %v1717
        %v1719 = vrot.slane %v1711, %v1718
        %v1721 = vunpack.c.l.s4 1934713408
        %v1722 = vunpack.c.0.s8 %v1721
        %v1723 = vlaneseq
        %v1724 = vshrl.u32 %v1723, 7
        %v1725 = vsub.s32 %v1722, %v1724
        %v1726 = vrot.slane %v1712, %v1725
        %v1727 = vcombine.low %v1694, %v1710
        %v1728 = vcombine.high %v1694, %v1710
        %v1730 = vunpack.c.l.s4 1934713408
        %v1731 = vunpack.c.0.s8 %v1730
        %v1732 = vlaneseq
        %v1733 = vshrl.u32 %v1732, 7
        %v1734 = vsub.s32 %v1731, %v1733
        %v1735 = vrot.slane %v1727, %v1734
        %v1737 = vunpack.c.l.s4 1934713408
        %v1738 = vunpack.c.0.s8 %v1737
        %v1739 = vlaneseq
        %v1740 = vshrl.u32 %v1739, 7
        %v1741 = vsub.s32 %v1738, %v1740
        %v1742 = vrot.slane %v1728, %v1741
        %v1743 = vcombine.high %v1719, 0.0
        %v1744 = vcombine.high %v1726, 0.0
        %v1745 = vcombine.high %v1735, 0.0
        %v1746 = vcombine.high %v1742, 0.0
        %v1747 = vcombine.low %v1719, %v1726
        %v1749 = vunpack.c.l.s4 1983009808
        %v1750 = vunpack.c.0.s8 %v1749
        %v1751 = vlaneseq
        %v1752 = vshrl.u32 %v1751, 7
        %v1753 = vsub.s32 %v1750, %v1752
        %v1754 = vrot.slane %v1747, %v1753
        %v1755 = vcombine.low %v1743, %v1744
        %v1757 = vunpack.c.l.s4 1983009808
        %v1758 = vunpack.c.0.s8 %v1757
        %v1759 = vlaneseq
        %v1760 = vshrl.u32 %v1759, 7
        %v1761 = vsub.s32 %v1758, %v1760
        %v1762 = vrot.slane %v1755, %v1761
        %v1763 = vcombine.low %v1735, %v1742
        %v1765 = vunpack.c.l.s4 1983009808
        %v1766 = vunpack.c.0.s8 %v1765
        %v1767 = vlaneseq
        %v1768 = vshrl.u32 %v1767, 7
        %v1769 = vsub.s32 %v1766, %v1768
        %v1770 = vrot.slane %v1763, %v1769
        %v1771 = vcombine.low %v1745, %v1746
        %v1773 = vunpack.c.l.s4 1983009808
        %v1774 = vunpack.c.0.s8 %v1773
        %v1775 = vlaneseq
        %v1776 = vshrl.u32 %v1775, 7
        %v1777 = vsub.s32 %v1774, %v1776
        %v1778 = vrot.slane %v1771, %v1777
        %v1779 = vcombine.low %v1754, %v1762
        %v1780 = vcombine.high %v1754, %v1762
        %v1782 = vunpack.c.l.s4 1934713408
        %v1783 = vunpack.c.0.s8 %v1782
        %v1784 = vlaneseq
        %v1785 = vshrl.u32 %v1784, 7
        %v1786 = vsub.s32 %v1783, %v1785
        %v1787 = vrot.slane %v1779, %v1786
        %v1789 = vunpack.c.l.s4 1934713408
        %v1790 = vunpack.c.0.s8 %v1789
        %v1791 = vlaneseq
        %v1792 = vshrl.u32 %v1791, 7
        %v1793 = vsub.s32 %v1790, %v1792
        %v1794 = vrot.slane %v1780, %v1793
        %v1795 = vcombine.low %v1770, %v1778
        %v1796 = vcombine.high %v1770, %v1778
        %v1798 = vunpack.c.l.s4 1934713408
        %v1799 = vunpack.c.0.s8 %v1798
        %v1800 = vlaneseq
        %v1801 = vshrl.u32 %v1800, 7
        %v1802 = vsub.s32 %v1799, %v1801
        %v1803 = vrot.slane %v1795, %v1802
        %v1805 = vunpack.c.l.s4 1934713408
        %v1806 = vunpack.c.0.s8 %v1805
        %v1807 = vlaneseq
        %v1808 = vshrl.u32 %v1807, 7
        %v1809 = vsub.s32 %v1806, %v1808
        %v1810 = vrot.slane %v1796, %v1809
        %v1811 = vcombine.low %v1787, %v1803
        %v1812 = vcombine.high %v1787, %v1803
        %v1813 = vcombine.low %v1794, %v1810
        %v1814 = vcombine.high %v1794, %v1810
        %vm1815 = vcmask 64512
        %v1817 = vsel %vm1815, %v1519, 0
        %v1820 = vsel %vm1815, %v1665, 0
        %1822 = vmatprep.subr.mxu0 0.0
        %1823 = vmatpush1.xpose.msra.mxu0 %v1820
        %1824 = vmatprep.subr.mxu0 0.0
        %1825 = vmatpush1.xpose.msra.mxu0 0.0
        %1826 = vmatprep.subr.mxu0 0.0
        %1827 = vmatpush1.xpose.msra.mxu0 0.0
        %1828 = vmatprep.subr.mxu0 0.0
        %1829 = vmatpush1.xpose.msra.mxu0 0.0
        %1830 = vmatprep.subr.mxu0 0.0
        %1831 = vmatpush1.xpose.msra.mxu0 0.0
        %1832 = vmatprep.subr.mxu0 0.0
        %1833 = vmatpush1.xpose.msra.mxu0 0.0
        %1834 = vmatprep.subr.mxu0 0.0
        %1835 = vmatpush1.xpose.msra.mxu0 0.0
        %1836 = vmatprep.subr.mxu0 0.0
        %1837 = vmatpush1.xpose.msra.mxu0 0.0
        %1838 = vmatprep.subr.mxu0 0.0
        %1839 = vmatpush1.xpose.msra.mxu0 0.0
        %1840 = vmatprep.subr.mxu0 0.0
        %1841 = vmatpush1.xpose.msra.mxu0 0.0
        %1842 = vmatprep.subr.mxu0 0.0
        %1843 = vmatpush1.xpose.msra.mxu0 0.0
        %1844 = vmatprep.subr.mxu0 0.0
        %1845 = vmatpush1.xpose.msra.mxu0 0.0
        %1846 = vmatprep.subr.mxu0 0.0
        %1847 = vmatpush1.xpose.msra.mxu0 0.0
        %1848 = vmatprep.subr.mxu0 0.0
        %1849 = vmatpush1.xpose.msra.mxu0 0.0
        %1850 = vmatprep.subr.mxu0 0.0
        %1851 = vmatpush1.xpose.msra.mxu0 0.0
        %1852 = vmatprep.subr.mxu0 0.0
        %1853 = vmatpush1.xpose.msra.mxu0 0.0
        %1854 = vmatprep.subr.mxu0 0.0
        %1855 = vmatpush1.xpose.msra.mxu0 0.0
        %1856 = vmatprep.subr.mxu0 0.0
        %1857 = vmatpush1.xpose.msra.mxu0 0.0
        %1858 = vmatprep.subr.mxu0 0.0
        %1859 = vmatpush1.xpose.msra.mxu0 0.0
        %1860 = vmatprep.subr.mxu0 0.0
        %1861 = vmatpush1.xpose.msra.mxu0 0.0
        %1862 = vmatprep.subr.mxu0 0.0
        %1863 = vmatpush1.xpose.msra.mxu0 0.0
        %1864 = vmatprep.subr.mxu0 0.0
        %1865 = vmatpush1.xpose.msra.mxu0 0.0
        %1866 = vmatprep.subr.mxu0 0.0
        %1867 = vmatpush1.xpose.msra.mxu0 0.0
        %1868 = vmatprep.subr.mxu0 0.0
        %1869 = vmatpush1.xpose.msra.mxu0 0.0
        %1870 = vmatprep.subr.mxu0 0.0
        %1871 = vmatpush1.xpose.msra.mxu0 0.0
        %1872 = vmatprep.subr.mxu0 0.0
        %1873 = vmatpush1.xpose.msra.mxu0 0.0
        %1874 = vmatprep.subr.mxu0 0.0
        %1875 = vmatpush1.xpose.msra.mxu0 0.0
        %1876 = vmatprep.subr.mxu0 0.0
        %1877 = vmatpush1.xpose.msra.mxu0 0.0
        %1878 = vmatprep.subr.mxu0 0.0
        %1879 = vmatpush1.xpose.msra.mxu0 0.0
        %1880 = vmatprep.subr.mxu0 0.0
        %1881 = vmatpush1.xpose.msra.mxu0 0.0
        %1882 = vmatprep.subr.mxu0 0.0
        %1883 = vmatpush1.xpose.msra.mxu0 0.0
        %1884 = vmatprep.subr.mxu0 0.0
        %1885 = vmatpush1.xpose.msra.mxu0 0.0
        %1886 = vmatprep.mubr.f32.mxu0 0.0
        %1887 = vmatmul.mubr.f32.gmra.mrb[0].mxu0 %v1817
        %v1888 = vpop.f32.mrb[0].mxu0
        %v1889 = vadd.f32 0.0, %v1888
        %v1890 = vpop.f32.mrb[0].mxu0
        %1891 = vdwg.mxu0
        %v1893 = vsel %vm1815, %v1520, 0
        %v1896 = vsel %vm1815, %v1666, 0
        %1898 = vmatprep.subr.mxu0 0.0
        %1899 = vmatpush1.xpose.msra.mxu0 %v1896
        %1900 = vmatprep.subr.mxu0 0.0
        %1901 = vmatpush1.xpose.msra.mxu0 0.0
        %1902 = vmatprep.subr.mxu0 0.0
        %1903 = vmatpush1.xpose.msra.mxu0 0.0
        %1904 = vmatprep.subr.mxu0 0.0
        %1905 = vmatpush1.xpose.msra.mxu0 0.0
        %1906 = vmatprep.subr.mxu0 0.0
        %1907 = vmatpush1.xpose.msra.mxu0 0.0
        %1908 = vmatprep.subr.mxu0 0.0
        %1909 = vmatpush1.xpose.msra.mxu0 0.0
        %1910 = vmatprep.subr.mxu0 0.0
        %1911 = vmatpush1.xpose.msra.mxu0 0.0
        %1912 = vmatprep.subr.mxu0 0.0
        %1913 = vmatpush1.xpose.msra.mxu0 0.0
        %1914 = vmatprep.subr.mxu0 0.0
        %1915 = vmatpush1.xpose.msra.mxu0 0.0
        %1916 = vmatprep.subr.mxu0 0.0
        %1917 = vmatpush1.xpose.msra.mxu0 0.0
        %1918 = vmatprep.subr.mxu0 0.0
        %1919 = vmatpush1.xpose.msra.mxu0 0.0
        %1920 = vmatprep.subr.mxu0 0.0
        %1921 = vmatpush1.xpose.msra.mxu0 0.0
        %1922 = vmatprep.subr.mxu0 0.0
        %1923 = vmatpush1.xpose.msra.mxu0 0.0
        %1924 = vmatprep.subr.mxu0 0.0
        %1925 = vmatpush1.xpose.msra.mxu0 0.0
        %1926 = vmatprep.subr.mxu0 0.0
        %1927 = vmatpush1.xpose.msra.mxu0 0.0
        %1928 = vmatprep.subr.mxu0 0.0
        %1929 = vmatpush1.xpose.msra.mxu0 0.0
        %1930 = vmatprep.subr.mxu0 0.0
        %1931 = vmatpush1.xpose.msra.mxu0 0.0
        %1932 = vmatprep.subr.mxu0 0.0
        %1933 = vmatpush1.xpose.msra.mxu0 0.0
        %1934 = vmatprep.subr.mxu0 0.0
        %1935 = vmatpush1.xpose.msra.mxu0 0.0
        %1936 = vmatprep.subr.mxu0 0.0
        %1937 = vmatpush1.xpose.msra.mxu0 0.0
        %1938 = vmatprep.subr.mxu0 0.0
        %1939 = vmatpush1.xpose.msra.mxu0 0.0
        %1940 = vmatprep.subr.mxu0 0.0
        %1941 = vmatpush1.xpose.msra.mxu0 0.0
        %1942 = vmatprep.subr.mxu0 0.0
        %1943 = vmatpush1.xpose.msra.mxu0 0.0
        %1944 = vmatprep.subr.mxu0 0.0
        %1945 = vmatpush1.xpose.msra.mxu0 0.0
        %1946 = vmatprep.subr.mxu0 0.0
        %1947 = vmatpush1.xpose.msra.mxu0 0.0
        %1948 = vmatprep.subr.mxu0 0.0
        %1949 = vmatpush1.xpose.msra.mxu0 0.0
        %1950 = vmatprep.subr.mxu0 0.0
        %1951 = vmatpush1.xpose.msra.mxu0 0.0
        %1952 = vmatprep.subr.mxu0 0.0
        %1953 = vmatpush1.xpose.msra.mxu0 0.0
        %1954 = vmatprep.subr.mxu0 0.0
        %1955 = vmatpush1.xpose.msra.mxu0 0.0
        %1956 = vmatprep.subr.mxu0 0.0
        %1957 = vmatpush1.xpose.msra.mxu0 0.0
        %1958 = vmatprep.subr.mxu0 0.0
        %1959 = vmatpush1.xpose.msra.mxu0 0.0
        %1960 = vmatprep.subr.mxu0 0.0
        %1961 = vmatpush1.xpose.msra.mxu0 0.0
        %1962 = vmatprep.mubr.f32.mxu0 0.0
        %1963 = vmatmul.mubr.f32.gmra.mrb[0].mxu0 %v1893
        %v1964 = vpop.f32.mrb[0].mxu0
        %v1965 = vadd.f32 0.0, %v1964
        %v1966 = vpop.f32.mrb[0].mxu0
        %1967 = vdwg.mxu0
        %v1969 = vsel %vm1815, %v1521, 0
        %v1972 = vsel %vm1815, %v1667, 0
        %1974 = vmatprep.subr.mxu0 0.0
        %1975 = vmatpush1.xpose.msra.mxu0 %v1972
        %1976 = vmatprep.subr.mxu0 0.0
        %1977 = vmatpush1.xpose.msra.mxu0 0.0
        %1978 = vmatprep.subr.mxu0 0.0
        %1979 = vmatpush1.xpose.msra.mxu0 0.0
        %1980 = vmatprep.subr.mxu0 0.0
        %1981 = vmatpush1.xpose.msra.mxu0 0.0
        %1982 = vmatprep.subr.mxu0 0.0
        %1983 = vmatpush1.xpose.msra.mxu0 0.0
        %1984 = vmatprep.subr.mxu0 0.0
        %1985 = vmatpush1.xpose.msra.mxu0 0.0
        %1986 = vmatprep.subr.mxu0 0.0
        %1987 = vmatpush1.xpose.msra.mxu0 0.0
        %1988 = vmatprep.subr.mxu0 0.0
        %1989 = vmatpush1.xpose.msra.mxu0 0.0
        %1990 = vmatprep.subr.mxu0 0.0
        %1991 = vmatpush1.xpose.msra.mxu0 0.0
        %1992 = vmatprep.subr.mxu0 0.0
        %1993 = vmatpush1.xpose.msra.mxu0 0.0
        %1994 = vmatprep.subr.mxu0 0.0
        %1995 = vmatpush1.xpose.msra.mxu0 0.0
        %1996 = vmatprep.subr.mxu0 0.0
        %1997 = vmatpush1.xpose.msra.mxu0 0.0
        %1998 = vmatprep.subr.mxu0 0.0
        %1999 = vmatpush1.xpose.msra.mxu0 0.0
        %2000 = vmatprep.subr.mxu0 0.0
        %2001 = vmatpush1.xpose.msra.mxu0 0.0
        %2002 = vmatprep.subr.mxu0 0.0
        %2003 = vmatpush1.xpose.msra.mxu0 0.0
        %2004 = vmatprep.subr.mxu0 0.0
        %2005 = vmatpush1.xpose.msra.mxu0 0.0
        %2006 = vmatprep.subr.mxu0 0.0
        %2007 = vmatpush1.xpose.msra.mxu0 0.0
        %2008 = vmatprep.subr.mxu0 0.0
        %2009 = vmatpush1.xpose.msra.mxu0 0.0
        %2010 = vmatprep.subr.mxu0 0.0
        %2011 = vmatpush1.xpose.msra.mxu0 0.0
        %2012 = vmatprep.subr.mxu0 0.0
        %2013 = vmatpush1.xpose.msra.mxu0 0.0
        %2014 = vmatprep.subr.mxu0 0.0
        %2015 = vmatpush1.xpose.msra.mxu0 0.0
        %2016 = vmatprep.subr.mxu0 0.0
        %2017 = vmatpush1.xpose.msra.mxu0 0.0
        %2018 = vmatprep.subr.mxu0 0.0
        %2019 = vmatpush1.xpose.msra.mxu0 0.0
        %2020 = vmatprep.subr.mxu0 0.0
        %2021 = vmatpush1.xpose.msra.mxu0 0.0
        %2022 = vmatprep.subr.mxu0 0.0
        %2023 = vmatpush1.xpose.msra.mxu0 0.0
        %2024 = vmatprep.subr.mxu0 0.0
        %2025 = vmatpush1.xpose.msra.mxu0 0.0
        %2026 = vmatprep.subr.mxu0 0.0
        %2027 = vmatpush1.xpose.msra.mxu0 0.0
        %2028 = vmatprep.subr.mxu0 0.0
        %2029 = vmatpush1.xpose.msra.mxu0 0.0
        %2030 = vmatprep.subr.mxu0 0.0
        %2031 = vmatpush1.xpose.msra.mxu0 0.0
        %2032 = vmatprep.subr.mxu0 0.0
        %2033 = vmatpush1.xpose.msra.mxu0 0.0
        %2034 = vmatprep.subr.mxu0 0.0
        %2035 = vmatpush1.xpose.msra.mxu0 0.0
        %2036 = vmatprep.subr.mxu0 0.0
        %2037 = vmatpush1.xpose.msra.mxu0 0.0
        %2038 = vmatprep.mubr.f32.mxu0 0.0
        %2039 = vmatmul.mubr.f32.gmra.mrb[0].mxu0 %v1969
        %v2040 = vpop.f32.mrb[0].mxu0
        %v2041 = vadd.f32 0.0, %v2040
        %v2042 = vpop.f32.mrb[0].mxu0
        %2043 = vdwg.mxu0
        %v2045 = vsel %vm1815, %v1522, 0
        %v2048 = vsel %vm1815, %v1668, 0
        %2050 = vmatprep.subr.mxu0 0.0
        %2051 = vmatpush1.xpose.msra.mxu0 %v2048
        %2052 = vmatprep.subr.mxu0 0.0
        %2053 = vmatpush1.xpose.msra.mxu0 0.0
        %2054 = vmatprep.subr.mxu0 0.0
        %2055 = vmatpush1.xpose.msra.mxu0 0.0
        %2056 = vmatprep.subr.mxu0 0.0
        %2057 = vmatpush1.xpose.msra.mxu0 0.0
        %2058 = vmatprep.subr.mxu0 0.0
        %2059 = vmatpush1.xpose.msra.mxu0 0.0
        %2060 = vmatprep.subr.mxu0 0.0
        %2061 = vmatpush1.xpose.msra.mxu0 0.0
        %2062 = vmatprep.subr.mxu0 0.0
        %2063 = vmatpush1.xpose.msra.mxu0 0.0
        %2064 = vmatprep.subr.mxu0 0.0
        %2065 = vmatpush1.xpose.msra.mxu0 0.0
        %2066 = vmatprep.subr.mxu0 0.0
        %2067 = vmatpush1.xpose.msra.mxu0 0.0
        %2068 = vmatprep.subr.mxu0 0.0
        %2069 = vmatpush1.xpose.msra.mxu0 0.0
        %2070 = vmatprep.subr.mxu0 0.0
        %2071 = vmatpush1.xpose.msra.mxu0 0.0
        %2072 = vmatprep.subr.mxu0 0.0
        %2073 = vmatpush1.xpose.msra.mxu0 0.0
        %2074 = vmatprep.subr.mxu0 0.0
        %2075 = vmatpush1.xpose.msra.mxu0 0.0
        %2076 = vmatprep.subr.mxu0 0.0
        %2077 = vmatpush1.xpose.msra.mxu0 0.0
        %2078 = vmatprep.subr.mxu0 0.0
        %2079 = vmatpush1.xpose.msra.mxu0 0.0
        %2080 = vmatprep.subr.mxu0 0.0
        %2081 = vmatpush1.xpose.msra.mxu0 0.0
        %2082 = vmatprep.subr.mxu0 0.0
        %2083 = vmatpush1.xpose.msra.mxu0 0.0
        %2084 = vmatprep.subr.mxu0 0.0
        %2085 = vmatpush1.xpose.msra.mxu0 0.0
        %2086 = vmatprep.subr.mxu0 0.0
        %2087 = vmatpush1.xpose.msra.mxu0 0.0
        %2088 = vmatprep.subr.mxu0 0.0
        %2089 = vmatpush1.xpose.msra.mxu0 0.0
        %2090 = vmatprep.subr.mxu0 0.0
        %2091 = vmatpush1.xpose.msra.mxu0 0.0
        %2092 = vmatprep.subr.mxu0 0.0
        %2093 = vmatpush1.xpose.msra.mxu0 0.0
        %2094 = vmatprep.subr.mxu0 0.0
        %2095 = vmatpush1.xpose.msra.mxu0 0.0
        %2096 = vmatprep.subr.mxu0 0.0
        %2097 = vmatpush1.xpose.msra.mxu0 0.0
        %2098 = vmatprep.subr.mxu0 0.0
        %2099 = vmatpush1.xpose.msra.mxu0 0.0
        %2100 = vmatprep.subr.mxu0 0.0
        %2101 = vmatpush1.xpose.msra.mxu0 0.0
        %2102 = vmatprep.subr.mxu0 0.0
        %2103 = vmatpush1.xpose.msra.mxu0 0.0
        %2104 = vmatprep.subr.mxu0 0.0
        %2105 = vmatpush1.xpose.msra.mxu0 0.0
        %2106 = vmatprep.subr.mxu0 0.0
        %2107 = vmatpush1.xpose.msra.mxu0 0.0
        %2108 = vmatprep.subr.mxu0 0.0
        %2109 = vmatpush1.xpose.msra.mxu0 0.0
        %2110 = vmatprep.subr.mxu0 0.0
        %2111 = vmatpush1.xpose.msra.mxu0 0.0
        %2112 = vmatprep.subr.mxu0 0.0
        %2113 = vmatpush1.xpose.msra.mxu0 0.0
        %2114 = vmatprep.mubr.f32.mxu0 0.0
        %2115 = vmatmul.mubr.f32.gmra.mrb[0].mxu0 %v2045
        %v2116 = vpop.f32.mrb[0].mxu0
        %v2117 = vadd.f32 0.0, %v2116
        %v2118 = vpop.f32.mrb[0].mxu0
        %2119 = vdwg.mxu0
        %v2120 = vmul.f32 %v1889, 0.125
        %v2121 = vmul.f32 %v1965, 0.125
        %v2122 = vmul.f32 %v2041, 0.125
        %v2123 = vmul.f32 %v2117, 0.125
        %v2124 = vsel %vm1815, %v2120, -inf
        %2125 = vmax.xlane.f32.xlu0 %v2124
        %v2126 = vpop.xlane.xlu0 %2125
        %v2127 = vsel %vm1815, %v2121, -inf
        %2128 = vmax.xlane.f32.xlu0 %v2127
        %v2129 = vpop.xlane.xlu0 %2128
        %v2130 = vsel %vm1815, %v2122, -inf
        %2131 = vmax.xlane.f32.xlu0 %v2130
        %v2132 = vpop.xlane.xlu0 %2131
        %v2133 = vsel %vm1815, %v2123, -inf
        %2134 = vmax.xlane.f32.xlu0 %v2133
        %v2135 = vpop.xlane.xlu0 %2134
        %v2136 = vsub.f32 %v2120, %v2126
        %v2137 = vsub.f32 %v2121, %v2129
        %v2138 = vsub.f32 %v2122, %v2132
        %v2139 = vsub.f32 %v2123, %v2135
        %v2140 = vmul.f32 %v2136, 1.442695
        %v2141 = vpow.pop %v2140
        %v2142 = vmul.f32 %v2137, 1.442695
        %v2143 = vpow.pop %v2142
        %v2144 = vmul.f32 %v2138, 1.442695
        %v2145 = vpow.pop %v2144
        %v2146 = vmul.f32 %v2139, 1.442695
        %v2147 = vpow.pop %v2146
        %v2148 = vsel %vm1815, %v2141, 0.0
        %2149 = vadd.xlane.f32.xlu0 %v2148
        %v2150 = vpop.xlane.xlu0 %2149
        %v2151 = vsel %vm1815, %v2143, 0.0
        %2152 = vadd.xlane.f32.xlu0 %v2151
        %v2153 = vpop.xlane.xlu0 %2152
        %v2154 = vsel %vm1815, %v2145, 0.0
        %2155 = vadd.xlane.f32.xlu0 %v2154
        %v2156 = vpop.xlane.xlu0 %2155
        %v2157 = vsel %vm1815, %v2147, 0.0
        %2158 = vadd.xlane.f32.xlu0 %v2157
        %v2159 = vpop.xlane.xlu0 %2158
        %v2160 = vrcp.pop %v2150
        %v2161 = vrcp.pop %v2153
        %v2162 = vrcp.pop %v2156
        %v2163 = vrcp.pop %v2159
        %v2164 = vmul.f32 %v2141, %v2160
        %v2165 = vmul.f32 %v2143, %v2161
        %v2166 = vmul.f32 %v2145, %v2162
        %v2167 = vmul.f32 %v2147, %v2163
        %v2169 = vsel %vm1815, %v2164, 0
        %2171 = vmatprep.subr.mxu0 0.0
        %2172 = vmatpush1.msra.mxu0 %v1811
        %2173 = vmatprep.subr.mxu0 0.0
        %2174 = vmatpush1.msra.mxu0 0.0
        %2175 = vmatprep.subr.mxu0 0.0
        %2176 = vmatpush1.msra.mxu0 0.0
        %2177 = vmatprep.subr.mxu0 0.0
        %2178 = vmatpush1.msra.mxu0 0.0
        %2179 = vmatprep.subr.mxu0 0.0
        %2180 = vmatpush1.msra.mxu0 0.0
        %2181 = vmatprep.subr.mxu0 0.0
        %2182 = vmatpush1.msra.mxu0 0.0
        %2183 = vmatprep.subr.mxu0 0.0
        %2184 = vmatpush1.msra.mxu0 0.0
        %2185 = vmatprep.subr.mxu0 0.0
        %2186 = vmatpush1.msra.mxu0 0.0
        %2187 = vmatprep.subr.mxu0 0.0
        %2188 = vmatpush1.msra.mxu0 0.0
        %2189 = vmatprep.subr.mxu0 0.0
        %2190 = vmatpush1.msra.mxu0 0.0
        %2191 = vmatprep.subr.mxu0 0.0
        %2192 = vmatpush1.msra.mxu0 0.0
        %2193 = vmatprep.subr.mxu0 0.0
        %2194 = vmatpush1.msra.mxu0 0.0
        %2195 = vmatprep.subr.mxu0 0.0
        %2196 = vmatpush1.msra.mxu0 0.0
        %2197 = vmatprep.subr.mxu0 0.0
        %2198 = vmatpush1.msra.mxu0 0.0
        %2199 = vmatprep.subr.mxu0 0.0
        %2200 = vmatpush1.msra.mxu0 0.0
        %2201 = vmatprep.subr.mxu0 0.0
        %2202 = vmatpush1.msra.mxu0 0.0
        %2203 = vmatprep.subr.mxu0 0.0
        %2204 = vmatpush1.msra.mxu0 0.0
        %2205 = vmatprep.subr.mxu0 0.0
        %2206 = vmatpush1.msra.mxu0 0.0
        %2207 = vmatprep.subr.mxu0 0.0
        %2208 = vmatpush1.msra.mxu0 0.0
        %2209 = vmatprep.subr.mxu0 0.0
        %2210 = vmatpush1.msra.mxu0 0.0
        %2211 = vmatprep.subr.mxu0 0.0
        %2212 = vmatpush1.msra.mxu0 0.0
        %2213 = vmatprep.subr.mxu0 0.0
        %2214 = vmatpush1.msra.mxu0 0.0
        %2215 = vmatprep.subr.mxu0 0.0
        %2216 = vmatpush1.msra.mxu0 0.0
        %2217 = vmatprep.subr.mxu0 0.0
        %2218 = vmatpush1.msra.mxu0 0.0
        %2219 = vmatprep.subr.mxu0 0.0
        %2220 = vmatpush1.msra.mxu0 0.0
        %2221 = vmatprep.subr.mxu0 0.0
        %2222 = vmatpush1.msra.mxu0 0.0
        %2223 = vmatprep.subr.mxu0 0.0
        %2224 = vmatpush1.msra.mxu0 0.0
        %2225 = vmatprep.subr.mxu0 0.0
        %2226 = vmatpush1.msra.mxu0 0.0
        %2227 = vmatprep.subr.mxu0 0.0
        %2228 = vmatpush1.msra.mxu0 0.0
        %2229 = vmatprep.subr.mxu0 0.0
        %2230 = vmatpush1.msra.mxu0 0.0
        %2231 = vmatprep.subr.mxu0 0.0
        %2232 = vmatpush1.msra.mxu0 0.0
        %2233 = vmatprep.subr.mxu0 0.0
        %2234 = vmatpush1.msra.mxu0 0.0
        %2235 = vmatprep.mubr.f32.mxu0 0.0
        %2236 = vmatmul.mubr.f32.gmra.mrb[0].mxu0 %v2169
        %v2237 = vpop.f32.mrb[0].mxu0
        %v2238 = vadd.f32 0.0, %v2237
        %v2239 = vpop.f32.mrb[0].mxu0
        %2240 = vdwg.mxu0
        %v2242 = vsel %vm1815, %v2165, 0
        %2244 = vmatprep.subr.mxu0 0.0
        %2245 = vmatpush1.msra.mxu0 %v1812
        %2246 = vmatprep.subr.mxu0 0.0
        %2247 = vmatpush1.msra.mxu0 0.0
        %2248 = vmatprep.subr.mxu0 0.0
        %2249 = vmatpush1.msra.mxu0 0.0
        %2250 = vmatprep.subr.mxu0 0.0
        %2251 = vmatpush1.msra.mxu0 0.0
        %2252 = vmatprep.subr.mxu0 0.0
        %2253 = vmatpush1.msra.mxu0 0.0
        %2254 = vmatprep.subr.mxu0 0.0
        %2255 = vmatpush1.msra.mxu0 0.0
        %2256 = vmatprep.subr.mxu0 0.0
        %2257 = vmatpush1.msra.mxu0 0.0
        %2258 = vmatprep.subr.mxu0 0.0
        %2259 = vmatpush1.msra.mxu0 0.0
        %2260 = vmatprep.subr.mxu0 0.0
        %2261 = vmatpush1.msra.mxu0 0.0
        %2262 = vmatprep.subr.mxu0 0.0
        %2263 = vmatpush1.msra.mxu0 0.0
        %2264 = vmatprep.subr.mxu0 0.0
        %2265 = vmatpush1.msra.mxu0 0.0
        %2266 = vmatprep.subr.mxu0 0.0
        %2267 = vmatpush1.msra.mxu0 0.0
        %2268 = vmatprep.subr.mxu0 0.0
        %2269 = vmatpush1.msra.mxu0 0.0
        %2270 = vmatprep.subr.mxu0 0.0
        %2271 = vmatpush1.msra.mxu0 0.0
        %2272 = vmatprep.subr.mxu0 0.0
        %2273 = vmatpush1.msra.mxu0 0.0
        %2274 = vmatprep.subr.mxu0 0.0
        %2275 = vmatpush1.msra.mxu0 0.0
        %2276 = vmatprep.subr.mxu0 0.0
        %2277 = vmatpush1.msra.mxu0 0.0
        %2278 = vmatprep.subr.mxu0 0.0
        %2279 = vmatpush1.msra.mxu0 0.0
        %2280 = vmatprep.subr.mxu0 0.0
        %2281 = vmatpush1.msra.mxu0 0.0
        %2282 = vmatprep.subr.mxu0 0.0
        %2283 = vmatpush1.msra.mxu0 0.0
        %2284 = vmatprep.subr.mxu0 0.0
        %2285 = vmatpush1.msra.mxu0 0.0
        %2286 = vmatprep.subr.mxu0 0.0
        %2287 = vmatpush1.msra.mxu0 0.0
        %2288 = vmatprep.subr.mxu0 0.0
        %2289 = vmatpush1.msra.mxu0 0.0
        %2290 = vmatprep.subr.mxu0 0.0
        %2291 = vmatpush1.msra.mxu0 0.0
        %2292 = vmatprep.subr.mxu0 0.0
        %2293 = vmatpush1.msra.mxu0 0.0
        %2294 = vmatprep.subr.mxu0 0.0
        %2295 = vmatpush1.msra.mxu0 0.0
        %2296 = vmatprep.subr.mxu0 0.0
        %2297 = vmatpush1.msra.mxu0 0.0
        %2298 = vmatprep.subr.mxu0 0.0
        %2299 = vmatpush1.msra.mxu0 0.0
        %2300 = vmatprep.subr.mxu0 0.0
        %2301 = vmatpush1.msra.mxu0 0.0
        %2302 = vmatprep.subr.mxu0 0.0
        %2303 = vmatpush1.msra.mxu0 0.0
        %2304 = vmatprep.subr.mxu0 0.0
        %2305 = vmatpush1.msra.mxu0 0.0
        %2306 = vmatprep.subr.mxu0 0.0
        %2307 = vmatpush1.msra.mxu0 0.0
        %2308 = vmatprep.mubr.f32.mxu0 0.0
        %2309 = vmatmul.mubr.f32.gmra.mrb[0].mxu0 %v2242
        %v2310 = vpop.f32.mrb[0].mxu0
        %v2311 = vadd.f32 0.0, %v2310
        %v2312 = vpop.f32.mrb[0].mxu0
        %2313 = vdwg.mxu0
        %v2315 = vsel %vm1815, %v2166, 0
        %2317 = vmatprep.subr.mxu0 0.0
        %2318 = vmatpush1.msra.mxu0 %v1813
        %2319 = vmatprep.subr.mxu0 0.0
        %2320 = vmatpush1.msra.mxu0 0.0
        %2321 = vmatprep.subr.mxu0 0.0
        %2322 = vmatpush1.msra.mxu0 0.0
        %2323 = vmatprep.subr.mxu0 0.0
        %2324 = vmatpush1.msra.mxu0 0.0
        %2325 = vmatprep.subr.mxu0 0.0
        %2326 = vmatpush1.msra.mxu0 0.0
        %2327 = vmatprep.subr.mxu0 0.0
        %2328 = vmatpush1.msra.mxu0 0.0
        %2329 = vmatprep.subr.mxu0 0.0
        %2330 = vmatpush1.msra.mxu0 0.0
        %2331 = vmatprep.subr.mxu0 0.0
        %2332 = vmatpush1.msra.mxu0 0.0
        %2333 = vmatprep.subr.mxu0 0.0
        %2334 = vmatpush1.msra.mxu0 0.0
        %2335 = vmatprep.subr.mxu0 0.0
        %2336 = vmatpush1.msra.mxu0 0.0
        %2337 = vmatprep.subr.mxu0 0.0
        %2338 = vmatpush1.msra.mxu0 0.0
        %2339 = vmatprep.subr.mxu0 0.0
        %2340 = vmatpush1.msra.mxu0 0.0
        %2341 = vmatprep.subr.mxu0 0.0
        %2342 = vmatpush1.msra.mxu0 0.0
        %2343 = vmatprep.subr.mxu0 0.0
        %2344 = vmatpush1.msra.mxu0 0.0
        %2345 = vmatprep.subr.mxu0 0.0
        %2346 = vmatpush1.msra.mxu0 0.0
        %2347 = vmatprep.subr.mxu0 0.0
        %2348 = vmatpush1.msra.mxu0 0.0
        %2349 = vmatprep.subr.mxu0 0.0
        %2350 = vmatpush1.msra.mxu0 0.0
        %2351 = vmatprep.subr.mxu0 0.0
        %2352 = vmatpush1.msra.mxu0 0.0
        %2353 = vmatprep.subr.mxu0 0.0
        %2354 = vmatpush1.msra.mxu0 0.0
        %2355 = vmatprep.subr.mxu0 0.0
        %2356 = vmatpush1.msra.mxu0 0.0
        %2357 = vmatprep.subr.mxu0 0.0
        %2358 = vmatpush1.msra.mxu0 0.0
        %2359 = vmatprep.subr.mxu0 0.0
        %2360 = vmatpush1.msra.mxu0 0.0
        %2361 = vmatprep.subr.mxu0 0.0
        %2362 = vmatpush1.msra.mxu0 0.0
        %2363 = vmatprep.subr.mxu0 0.0
        %2364 = vmatpush1.msra.mxu0 0.0
        %2365 = vmatprep.subr.mxu0 0.0
        %2366 = vmatpush1.msra.mxu0 0.0
        %2367 = vmatprep.subr.mxu0 0.0
        %2368 = vmatpush1.msra.mxu0 0.0
        %2369 = vmatprep.subr.mxu0 0.0
        %2370 = vmatpush1.msra.mxu0 0.0
        %2371 = vmatprep.subr.mxu0 0.0
        %2372 = vmatpush1.msra.mxu0 0.0
        %2373 = vmatprep.subr.mxu0 0.0
        %2374 = vmatpush1.msra.mxu0 0.0
        %2375 = vmatprep.subr.mxu0 0.0
        %2376 = vmatpush1.msra.mxu0 0.0
        %2377 = vmatprep.subr.mxu0 0.0
        %2378 = vmatpush1.msra.mxu0 0.0
        %2379 = vmatprep.subr.mxu0 0.0
        %2380 = vmatpush1.msra.mxu0 0.0
        %2381 = vmatprep.mubr.f32.mxu0 0.0
        %2382 = vmatmul.mubr.f32.gmra.mrb[0].mxu0 %v2315
        %v2383 = vpop.f32.mrb[0].mxu0
        %v2384 = vadd.f32 0.0, %v2383
        %v2385 = vpop.f32.mrb[0].mxu0
        %2386 = vdwg.mxu0
        %v2388 = vsel %vm1815, %v2167, 0
        %2390 = vmatprep.subr.mxu0 0.0
        %2391 = vmatpush1.msra.mxu0 %v1814
        %2392 = vmatprep.subr.mxu0 0.0
        %2393 = vmatpush1.msra.mxu0 0.0
        %2394 = vmatprep.subr.mxu0 0.0
        %2395 = vmatpush1.msra.mxu0 0.0
        %2396 = vmatprep.subr.mxu0 0.0
        %2397 = vmatpush1.msra.mxu0 0.0
        %2398 = vmatprep.subr.mxu0 0.0
        %2399 = vmatpush1.msra.mxu0 0.0
        %2400 = vmatprep.subr.mxu0 0.0
        %2401 = vmatpush1.msra.mxu0 0.0
        %2402 = vmatprep.subr.mxu0 0.0
        %2403 = vmatpush1.msra.mxu0 0.0
        %2404 = vmatprep.subr.mxu0 0.0
        %2405 = vmatpush1.msra.mxu0 0.0
        %2406 = vmatprep.subr.mxu0 0.0
        %2407 = vmatpush1.msra.mxu0 0.0
        %2408 = vmatprep.subr.mxu0 0.0
        %2409 = vmatpush1.msra.mxu0 0.0
        %2410 = vmatprep.subr.mxu0 0.0
        %2411 = vmatpush1.msra.mxu0 0.0
        %2412 = vmatprep.subr.mxu0 0.0
        %2413 = vmatpush1.msra.mxu0 0.0
        %2414 = vmatprep.subr.mxu0 0.0
        %2415 = vmatpush1.msra.mxu0 0.0
        %2416 = vmatprep.subr.mxu0 0.0
        %2417 = vmatpush1.msra.mxu0 0.0
        %2418 = vmatprep.subr.mxu0 0.0
        %2419 = vmatpush1.msra.mxu0 0.0
        %2420 = vmatprep.subr.mxu0 0.0
        %2421 = vmatpush1.msra.mxu0 0.0
        %2422 = vmatprep.subr.mxu0 0.0
        %2423 = vmatpush1.msra.mxu0 0.0
        %2424 = vmatprep.subr.mxu0 0.0
        %2425 = vmatpush1.msra.mxu0 0.0
        %2426 = vmatprep.subr.mxu0 0.0
        %2427 = vmatpush1.msra.mxu0 0.0
        %2428 = vmatprep.subr.mxu0 0.0
        %2429 = vmatpush1.msra.mxu0 0.0
        %2430 = vmatprep.subr.mxu0 0.0
        %2431 = vmatpush1.msra.mxu0 0.0
        %2432 = vmatprep.subr.mxu0 0.0
        %2433 = vmatpush1.msra.mxu0 0.0
        %2434 = vmatprep.subr.mxu0 0.0
        %2435 = vmatpush1.msra.mxu0 0.0
        %2436 = vmatprep.subr.mxu0 0.0
        %2437 = vmatpush1.msra.mxu0 0.0
        %2438 = vmatprep.subr.mxu0 0.0
        %2439 = vmatpush1.msra.mxu0 0.0
        %2440 = vmatprep.subr.mxu0 0.0
        %2441 = vmatpush1.msra.mxu0 0.0
        %2442 = vmatprep.subr.mxu0 0.0
        %2443 = vmatpush1.msra.mxu0 0.0
        %2444 = vmatprep.subr.mxu0 0.0
        %2445 = vmatpush1.msra.mxu0 0.0
        %2446 = vmatprep.subr.mxu0 0.0
        %2447 = vmatpush1.msra.mxu0 0.0
        %2448 = vmatprep.subr.mxu0 0.0
        %2449 = vmatpush1.msra.mxu0 0.0
        %2450 = vmatprep.subr.mxu0 0.0
        %2451 = vmatpush1.msra.mxu0 0.0
        %2452 = vmatprep.subr.mxu0 0.0
        %2453 = vmatpush1.msra.mxu0 0.0
        %2454 = vmatprep.mubr.f32.mxu0 0.0
        %2455 = vmatmul.mubr.f32.gmra.mrb[0].mxu0 %v2388
        %v2456 = vpop.f32.mrb[0].mxu0
        %v2457 = vadd.f32 0.0, %v2456
        %v2458 = vpop.f32.mrb[0].mxu0
        %2459 = vdwg.mxu0
        %v2460 = vcombine.low %v2238, %v2384
        %v2461 = vcombine.high %v2238, %v2384
        %v2463 = vunpack.c.l.s4 1983009808
        %v2464 = vunpack.c.0.s8 %v2463
        %v2465 = vlaneseq
        %v2466 = vshrl.u32 %v2465, 7
        %v2467 = vsub.s32 %v2464, %v2466
        %v2468 = vrot.slane %v2460, %v2467
        %v2470 = vunpack.c.l.s4 1983009808
        %v2471 = vunpack.c.0.s8 %v2470
        %v2472 = vlaneseq
        %v2473 = vshrl.u32 %v2472, 7
        %v2474 = vsub.s32 %v2471, %v2473
        %v2475 = vrot.slane %v2461, %v2474
        %v2476 = vcombine.low %v2311, %v2457
        %v2477 = vcombine.high %v2311, %v2457
        %v2479 = vunpack.c.l.s4 1983009808
        %v2480 = vunpack.c.0.s8 %v2479
        %v2481 = vlaneseq
        %v2482 = vshrl.u32 %v2481, 7
        %v2483 = vsub.s32 %v2480, %v2482
        %v2484 = vrot.slane %v2476, %v2483
        %v2486 = vunpack.c.l.s4 1983009808
        %v2487 = vunpack.c.0.s8 %v2486
        %v2488 = vlaneseq
        %v2489 = vshrl.u32 %v2488, 7
        %v2490 = vsub.s32 %v2487, %v2489
        %v2491 = vrot.slane %v2477, %v2490
        %v2492 = vcombine.low %v2468, %v2484
        %v2493 = vcombine.high %v2468, %v2484
        %v2495 = vunpack.c.l.s4 1934713408
        %v2496 = vunpack.c.0.s8 %v2495
        %v2497 = vlaneseq
        %v2498 = vshrl.u32 %v2497, 7
        %v2499 = vsub.s32 %v2496, %v2498
        %v2500 = vrot.slane %v2492, %v2499
        %v2502 = vunpack.c.l.s4 1934713408
        %v2503 = vunpack.c.0.s8 %v2502
        %v2504 = vlaneseq
        %v2505 = vshrl.u32 %v2504, 7
        %v2506 = vsub.s32 %v2503, %v2505
        %v2507 = vrot.slane %v2493, %v2506
        %v2508 = vcombine.low %v2475, %v2491
        %v2509 = vcombine.high %v2475, %v2491
        %v2511 = vunpack.c.l.s4 1934713408
        %v2512 = vunpack.c.0.s8 %v2511
        %v2513 = vlaneseq
        %v2514 = vshrl.u32 %v2513, 7
        %v2515 = vsub.s32 %v2512, %v2514
        %v2516 = vrot.slane %v2508, %v2515
        %v2518 = vunpack.c.l.s4 1934713408
        %v2519 = vunpack.c.0.s8 %v2518
        %v2520 = vlaneseq
        %v2521 = vshrl.u32 %v2520, 7
        %v2522 = vsub.s32 %v2519, %v2521
        %v2523 = vrot.slane %v2509, %v2522
        %v2524 = vcombine.high %v2500, 0.0
        %v2525 = vcombine.high %v2507, 0.0
        %v2526 = vcombine.high %v2516, 0.0
        %v2527 = vcombine.high %v2523, 0.0
        %v2528 = vcombine.low %v2500, %v2507
        %v2530 = vunpack.c.l.s4 1983009808
        %v2531 = vunpack.c.0.s8 %v2530
        %v2532 = vlaneseq
        %v2533 = vshrl.u32 %v2532, 7
        %v2534 = vsub.s32 %v2531, %v2533
        %v2535 = vrot.slane %v2528, %v2534
        %v2536 = vcombine.low %v2524, %v2525
        %v2538 = vunpack.c.l.s4 1983009808
        %v2539 = vunpack.c.0.s8 %v2538
        %v2540 = vlaneseq
        %v2541 = vshrl.u32 %v2540, 7
        %v2542 = vsub.s32 %v2539, %v2541
        %v2543 = vrot.slane %v2536, %v2542
        %v2544 = vcombine.low %v2516, %v2523
        %v2546 = vunpack.c.l.s4 1983009808
        %v2547 = vunpack.c.0.s8 %v2546
        %v2548 = vlaneseq
        %v2549 = vshrl.u32 %v2548, 7
        %v2550 = vsub.s32 %v2547, %v2549
        %v2551 = vrot.slane %v2544, %v2550
        %v2552 = vcombine.low %v2526, %v2527
        %v2554 = vunpack.c.l.s4 1983009808
        %v2555 = vunpack.c.0.s8 %v2554
        %v2556 = vlaneseq
        %v2557 = vshrl.u32 %v2556, 7
        %v2558 = vsub.s32 %v2555, %v2557
        %v2559 = vrot.slane %v2552, %v2558
        %v2560 = vcombine.low %v2535, %v2543
        %v2561 = vcombine.high %v2535, %v2543
        %v2563 = vunpack.c.l.s4 1934713408
        %v2564 = vunpack.c.0.s8 %v2563
        %v2565 = vlaneseq
        %v2566 = vshrl.u32 %v2565, 7
        %v2567 = vsub.s32 %v2564, %v2566
        %v2568 = vrot.slane %v2560, %v2567
        %v2570 = vunpack.c.l.s4 1934713408
        %v2571 = vunpack.c.0.s8 %v2570
        %v2572 = vlaneseq
        %v2573 = vshrl.u32 %v2572, 7
        %v2574 = vsub.s32 %v2571, %v2573
        %v2575 = vrot.slane %v2561, %v2574
        %v2576 = vcombine.low %v2551, %v2559
        %v2577 = vcombine.high %v2551, %v2559
        %v2579 = vunpack.c.l.s4 1934713408
        %v2580 = vunpack.c.0.s8 %v2579
        %v2581 = vlaneseq
        %v2582 = vshrl.u32 %v2581, 7
        %v2583 = vsub.s32 %v2580, %v2582
        %v2584 = vrot.slane %v2576, %v2583
        %v2586 = vunpack.c.l.s4 1934713408
        %v2587 = vunpack.c.0.s8 %v2586
        %v2588 = vlaneseq
        %v2589 = vshrl.u32 %v2588, 7
        %v2590 = vsub.s32 %v2587, %v2589
        %v2591 = vrot.slane %v2577, %v2590
        %v2592 = vcombine.low %v2568, %v2584
        %v2593 = vcombine.high %v2568, %v2584
        %v2594 = vcombine.low %v2575, %v2591
        %v2595 = vcombine.high %v2575, %v2591
        %2597 = vrot.lane.b32.xlu0 %v2593, 8
        %v2598 = vpop.permute.xlu0 %2597
        %2601 = vrot.lane.b32.xlu0 %v2594, 16
        %v2602 = vpop.permute.xlu0 %2601
        %2605 = vrot.lane.b32.xlu0 %v2595, 24
        %v2606 = vpop.permute.xlu0 %2605
        %v2608 = vsel %vm1815, %v2592, %v2598
        %vm2609 = vcmask 130048
        %v2610 = vsel %vm2609, %v2608, %v2602
        %vm2611 = vcmask 195584
        %v2612 = vsel %vm2611, %v2610, %v2606
        %v2614 = vlaneseq
        %v2615 = vshrl.u32 %v2614, 7
        %v2616 = vsub.s32 0, %v2615
        %v2617 = vrot.slane %v1102, %v2616
        %v2620 = vsel %vm1151, %v2612, 0
        %2622 = vmatprep.subr.mxu0 0.0
        %2623 = vmatpush1.msra.mxu0 %v1098
        %2624 = vmatprep.subr.mxu0 0.0
        %2625 = vmatpush1.msra.mxu0 %v1099
        %2626 = vmatprep.subr.mxu0 0.0
        %2627 = vmatpush1.msra.mxu0 %v1100
        %2628 = vmatprep.subr.mxu0 0.0
        %2629 = vmatpush1.msra.mxu0 %v1101
        %2630 = vmatprep.subr.mxu0 0.0
        %2631 = vmatpush1.msra.mxu0 0.0
        %2632 = vmatprep.subr.mxu0 0.0
        %2633 = vmatpush1.msra.mxu0 0.0
        %2634 = vmatprep.subr.mxu0 0.0
        %2635 = vmatpush1.msra.mxu0 0.0
        %2636 = vmatprep.subr.mxu0 0.0
        %2637 = vmatpush1.msra.mxu0 0.0
        %2638 = vmatprep.subr.mxu0 0.0
        %2639 = vmatpush1.msra.mxu0 0.0
        %2640 = vmatprep.subr.mxu0 0.0
        %2641 = vmatpush1.msra.mxu0 0.0
        %2642 = vmatprep.subr.mxu0 0.0
        %2643 = vmatpush1.msra.mxu0 0.0
        %2644 = vmatprep.subr.mxu0 0.0
        %2645 = vmatpush1.msra.mxu0 0.0
        %2646 = vmatprep.subr.mxu0 0.0
        %2647 = vmatpush1.msra.mxu0 0.0
        %2648 = vmatprep.subr.mxu0 0.0
        %2649 = vmatpush1.msra.mxu0 0.0
        %2650 = vmatprep.subr.mxu0 0.0
        %2651 = vmatpush1.msra.mxu0 0.0
        %2652 = vmatprep.subr.mxu0 0.0
        %2653 = vmatpush1.msra.mxu0 0.0
        %2654 = vmatprep.subr.mxu0 0.0
        %2655 = vmatpush1.msra.mxu0 0.0
        %2656 = vmatprep.subr.mxu0 0.0
        %2657 = vmatpush1.msra.mxu0 0.0
        %2658 = vmatprep.subr.mxu0 0.0
        %2659 = vmatpush1.msra.mxu0 0.0
        %2660 = vmatprep.subr.mxu0 0.0
        %2661 = vmatpush1.msra.mxu0 0.0
        %2662 = vmatprep.subr.mxu0 0.0
        %2663 = vmatpush1.msra.mxu0 0.0
        %2664 = vmatprep.subr.mxu0 0.0
        %2665 = vmatpush1.msra.mxu0 0.0
        %2666 = vmatprep.subr.mxu0 0.0
        %2667 = vmatpush1.msra.mxu0 0.0
        %2668 = vmatprep.subr.mxu0 0.0
        %2669 = vmatpush1.msra.mxu0 0.0
        %2670 = vmatprep.subr.mxu0 0.0
        %2671 = vmatpush1.msra.mxu0 0.0
        %2672 = vmatprep.subr.mxu0 0.0
        %2673 = vmatpush1.msra.mxu0 0.0
        %2674 = vmatprep.subr.mxu0 0.0
        %2675 = vmatpush1.msra.mxu0 0.0
        %2676 = vmatprep.subr.mxu0 0.0
        %2677 = vmatpush1.msra.mxu0 0.0
        %2678 = vmatprep.subr.mxu0 0.0
        %2679 = vmatpush1.msra.mxu0 0.0
        %2680 = vmatprep.subr.mxu0 0.0
        %2681 = vmatpush1.msra.mxu0 0.0
        %2682 = vmatprep.subr.mxu0 0.0
        %2683 = vmatpush1.msra.mxu0 0.0
        %2684 = vmatprep.subr.mxu0 0.0
        %2685 = vmatpush1.msra.mxu0 0.0
        %2686 = vmatprep.mubr.f32.mxu0 0.0
        %2687 = vmatmul.mubr.f32.gmra.mrb[0].mxu0 %v2620
        %v2688 = vpop.f32.mrb[0].mxu0
        %v2689 = vadd.f32 %v2617, %v2688
        %v2690 = vpop.f32.mrb[0].mxu0
        %2691 = vdwg.mxu0
        %v2692 = vadd.f32 %v1143, %v2689
        %v2693 = vsel %vm1151, %v2692, 0.0
        %2694 = vadd.xlane.f32.xlu0 %v2693
        %v2695 = vpop.xlane.xlu0 %2694
        %v2696 = vrcp.pop 32.0
        %v2697 = vmul.f32 %v2695, %v2696
        %v2698 = vsub.f32 %v2692, %v2697
        %v2699 = vmul.f32 %v2698, %v2698
        %v2700 = vsel %vm1151, %v2699, 0.0
        %2701 = vadd.xlane.f32.xlu0 %v2700
        %v2702 = vpop.xlane.xlu0 %2701
        %v2703 = vmul.f32 %v2702, %v2696
        %v2704 = vadd.f32 %v2703, 1e-05
        %v2705 = vrsqrt.pop %v2704
        %v2706 = vmul.f32 %v2698, %v2705
        %v2708 = vlaneseq
        %v2709 = vshrl.u32 %v2708, 7
        %v2710 = vsub.s32 0, %v2709
        %v2711 = vrot.slane %v1103, %v2710
        %v2713 = vmul.f32 %v2706, %v2711
        %v2715 = vlaneseq
        %v2716 = vshrl.u32 %v2715, 7
        %v2717 = vsub.s32 0, %v2716
        %v2718 = vrot.slane %v1104, %v2717
        %v2720 = vadd.f32 %v2713, %v2718
        %v2722 = vlaneseq
        %v2723 = vshrl.u32 %v2722, 7
        %v2724 = vsub.s32 0, %v2723
        %v2725 = vrot.slane %v1109, %v2724
        %v2728 = vsel %vm1151, %v2720, 0
        %2730 = vmatprep.subr.mxu0 0.0
        %2731 = vmatpush1.msra.mxu0 %v1105
        %2732 = vmatprep.subr.mxu0 0.0
        %2733 = vmatpush1.msra.mxu0 %v1106
        %2734 = vmatprep.subr.mxu0 0.0
        %2735 = vmatpush1.msra.mxu0 %v1107
        %2736 = vmatprep.subr.mxu0 0.0
        %2737 = vmatpush1.msra.mxu0 %v1108
        %2738 = vmatprep.subr.mxu0 0.0
        %2739 = vmatpush1.msra.mxu0 0.0
        %2740 = vmatprep.subr.mxu0 0.0
        %2741 = vmatpush1.msra.mxu0 0.0
        %2742 = vmatprep.subr.mxu0 0.0
        %2743 = vmatpush1.msra.mxu0 0.0
        %2744 = vmatprep.subr.mxu0 0.0
        %2745 = vmatpush1.msra.mxu0 0.0
        %2746 = vmatprep.subr.mxu0 0.0
        %2747 = vmatpush1.msra.mxu0 0.0
        %2748 = vmatprep.subr.mxu0 0.0
        %2749 = vmatpush1.msra.mxu0 0.0
        %2750 = vmatprep.subr.mxu0 0.0
        %2751 = vmatpush1.msra.mxu0 0.0
        %2752 = vmatprep.subr.mxu0 0.0
        %2753 = vmatpush1.msra.mxu0 0.0
        %2754 = vmatprep.subr.mxu0 0.0
        %2755 = vmatpush1.msra.mxu0 0.0
        %2756 = vmatprep.subr.mxu0 0.0
        %2757 = vmatpush1.msra.mxu0 0.0
        %2758 = vmatprep.subr.mxu0 0.0
        %2759 = vmatpush1.msra.mxu0 0.0
        %2760 = vmatprep.subr.mxu0 0.0
        %2761 = vmatpush1.msra.mxu0 0.0
        %2762 = vmatprep.subr.mxu0 0.0
        %2763 = vmatpush1.msra.mxu0 0.0
        %2764 = vmatprep.subr.mxu0 0.0
        %2765 = vmatpush1.msra.mxu0 0.0
        %2766 = vmatprep.subr.mxu0 0.0
        %2767 = vmatpush1.msra.mxu0 0.0
        %2768 = vmatprep.subr.mxu0 0.0
        %2769 = vmatpush1.msra.mxu0 0.0
        %2770 = vmatprep.subr.mxu0 0.0
        %2771 = vmatpush1.msra.mxu0 0.0
        %2772 = vmatprep.subr.mxu0 0.0
        %2773 = vmatpush1.msra.mxu0 0.0
        %2774 = vmatprep.subr.mxu0 0.0
        %2775 = vmatpush1.msra.mxu0 0.0
        %2776 = vmatprep.subr.mxu0 0.0
        %2777 = vmatpush1.msra.mxu0 0.0
        %2778 = vmatprep.subr.mxu0 0.0
        %2779 = vmatpush1.msra.mxu0 0.0
        %2780 = vmatprep.subr.mxu0 0.0
        %2781 = vmatpush1.msra.mxu0 0.0
        %2782 = vmatprep.subr.mxu0 0.0
        %2783 = vmatpush1.msra.mxu0 0.0
        %2784 = vmatprep.subr.mxu0 0.0
        %2785 = vmatpush1.msra.mxu0 0.0
        %2786 = vmatprep.subr.mxu0 0.0
        %2787 = vmatpush1.msra.mxu0 0.0
        %2788 = vmatprep.subr.mxu0 0.0
        %2789 = vmatpush1.msra.mxu0 0.0
        %2790 = vmatprep.subr.mxu0 0.0
        %2791 = vmatpush1.msra.mxu0 0.0
        %2792 = vmatprep.subr.mxu0 0.0
        %2793 = vmatpush1.msra.mxu0 0.0
        %2794 = vmatprep.mubr.f32.mxu0 0.0
        %2795 = vmatmul.mubr.f32.gmra.mrb[0].mxu0 %v2728
        %v2796 = vpop.f32.mrb[0].mxu0
        %v2797 = vadd.f32 %v2725, %v2796
        %v2798 = vpop.f32.mrb[0].mxu0
        %2799 = vdwg.mxu0
        %v2801 = vlaneseq
        %v2802 = vshrl.u32 %v2801, 7
        %v2803 = vsub.s32 0, %v2802
        %v2804 = vrot.slane %v1114, %v2803
        %v2807 = vsel %vm1151, %v1144, 0
        %2809 = vmatprep.subr.mxu0 0.0
        %2810 = vmatpush1.msra.mxu0 %v1110
        %2811 = vmatprep.subr.mxu0 0.0
        %2812 = vmatpush1.msra.mxu0 %v1111
        %2813 = vmatprep.subr.mxu0 0.0
        %2814 = vmatpush1.msra.mxu0 %v1112
        %2815 = vmatprep.subr.mxu0 0.0
        %2816 = vmatpush1.msra.mxu0 %v1113
        %2817 = vmatprep.subr.mxu0 0.0
        %2818 = vmatpush1.msra.mxu0 0.0
        %2819 = vmatprep.subr.mxu0 0.0
        %2820 = vmatpush1.msra.mxu0 0.0
        %2821 = vmatprep.subr.mxu0 0.0
        %2822 = vmatpush1.msra.mxu0 0.0
        %2823 = vmatprep.subr.mxu0 0.0
        %2824 = vmatpush1.msra.mxu0 0.0
        %2825 = vmatprep.subr.mxu0 0.0
        %2826 = vmatpush1.msra.mxu0 0.0
        %2827 = vmatprep.subr.mxu0 0.0
        %2828 = vmatpush1.msra.mxu0 0.0
        %2829 = vmatprep.subr.mxu0 0.0
        %2830 = vmatpush1.msra.mxu0 0.0
        %2831 = vmatprep.subr.mxu0 0.0
        %2832 = vmatpush1.msra.mxu0 0.0
        %2833 = vmatprep.subr.mxu0 0.0
        %2834 = vmatpush1.msra.mxu0 0.0
        %2835 = vmatprep.subr.mxu0 0.0
        %2836 = vmatpush1.msra.mxu0 0.0
        %2837 = vmatprep.subr.mxu0 0.0
        %2838 = vmatpush1.msra.mxu0 0.0
        %2839 = vmatprep.subr.mxu0 0.0
        %2840 = vmatpush1.msra.mxu0 0.0
        %2841 = vmatprep.subr.mxu0 0.0
        %2842 = vmatpush1.msra.mxu0 0.0
        %2843 = vmatprep.subr.mxu0 0.0
        %2844 = vmatpush1.msra.mxu0 0.0
        %2845 = vmatprep.subr.mxu0 0.0
        %2846 = vmatpush1.msra.mxu0 0.0
        %2847 = vmatprep.subr.mxu0 0.0
        %2848 = vmatpush1.msra.mxu0 0.0
        %2849 = vmatprep.subr.mxu0 0.0
        %2850 = vmatpush1.msra.mxu0 0.0
        %2851 = vmatprep.subr.mxu0 0.0
        %2852 = vmatpush1.msra.mxu0 0.0
        %2853 = vmatprep.subr.mxu0 0.0
        %2854 = vmatpush1.msra.mxu0 0.0
        %2855 = vmatprep.subr.mxu0 0.0
        %2856 = vmatpush1.msra.mxu0 0.0
        %2857 = vmatprep.subr.mxu0 0.0
        %2858 = vmatpush1.msra.mxu0 0.0
        %2859 = vmatprep.subr.mxu0 0.0
        %2860 = vmatpush1.msra.mxu0 0.0
        %2861 = vmatprep.subr.mxu0 0.0
        %2862 = vmatpush1.msra.mxu0 0.0
        %2863 = vmatprep.subr.mxu0 0.0
        %2864 = vmatpush1.msra.mxu0 0.0
        %2865 = vmatprep.subr.mxu0 0.0
        %2866 = vmatpush1.msra.mxu0 0.0
        %2867 = vmatprep.subr.mxu0 0.0
        %2868 = vmatpush1.msra.mxu0 0.0
        %2869 = vmatprep.subr.mxu0 0.0
        %2870 = vmatpush1.msra.mxu0 0.0
        %2871 = vmatprep.subr.mxu0 0.0
        %2872 = vmatpush1.msra.mxu0 0.0
        %2873 = vmatprep.mubr.f32.mxu0 0.0
        %2874 = vmatmul.mubr.f32.gmra.mrb[0].mxu0 %v2807
        %v2875 = vpop.f32.mrb[0].mxu0
        %v2876 = vadd.f32 %v2804, %v2875
        %v2877 = vpop.f32.mrb[0].mxu0
        %2878 = vdwg.mxu0
        %v2880 = vlaneseq
        %v2881 = vshrl.u32 %v2880, 7
        %v2882 = vsub.s32 0, %v2881
        %v2883 = vrot.slane %v1119, %v2882
        %2885 = vmatprep.subr.mxu0 0.0
        %2886 = vmatpush1.msra.mxu0 %v1115
        %2887 = vmatprep.subr.mxu0 0.0
        %2888 = vmatpush1.msra.mxu0 %v1116
        %2889 = vmatprep.subr.mxu0 0.0
        %2890 = vmatpush1.msra.mxu0 %v1117
        %2891 = vmatprep.subr.mxu0 0.0
        %2892 = vmatpush1.msra.mxu0 %v1118
        %2893 = vmatprep.subr.mxu0 0.0
        %2894 = vmatpush1.msra.mxu0 0.0
        %2895 = vmatprep.subr.mxu0 0.0
        %2896 = vmatpush1.msra.mxu0 0.0
        %2897 = vmatprep.subr.mxu0 0.0
        %2898 = vmatpush1.msra.mxu0 0.0
        %2899 = vmatprep.subr.mxu0 0.0
        %2900 = vmatpush1.msra.mxu0 0.0
        %2901 = vmatprep.subr.mxu0 0.0
        %2902 = vmatpush1.msra.mxu0 0.0
        %2903 = vmatprep.subr.mxu0 0.0
        %2904 = vmatpush1.msra.mxu0 0.0
        %2905 = vmatprep.subr.mxu0 0.0
        %2906 = vmatpush1.msra.mxu0 0.0
        %2907 = vmatprep.subr.mxu0 0.0
        %2908 = vmatpush1.msra.mxu0 0.0
        %2909 = vmatprep.subr.mxu0 0.0
        %2910 = vmatpush1.msra.mxu0 0.0
        %2911 = vmatprep.subr.mxu0 0.0
        %2912 = vmatpush1.msra.mxu0 0.0
        %2913 = vmatprep.subr.mxu0 0.0
        %2914 = vmatpush1.msra.mxu0 0.0
        %2915 = vmatprep.subr.mxu0 0.0
        %2916 = vmatpush1.msra.mxu0 0.0
        %2917 = vmatprep.subr.mxu0 0.0
        %2918 = vmatpush1.msra.mxu0 0.0
        %2919 = vmatprep.subr.mxu0 0.0
        %2920 = vmatpush1.msra.mxu0 0.0
        %2921 = vmatprep.subr.mxu0 0.0
        %2922 = vmatpush1.msra.mxu0 0.0
        %2923 = vmatprep.subr.mxu0 0.0
        %2924 = vmatpush1.msra.mxu0 0.0
        %2925 = vmatprep.subr.mxu0 0.0
        %2926 = vmatpush1.msra.mxu0 0.0
        %2927 = vmatprep.subr.mxu0 0.0
        %2928 = vmatpush1.msra.mxu0 0.0
        %2929 = vmatprep.subr.mxu0 0.0
        %2930 = vmatpush1.msra.mxu0 0.0
        %2931 = vmatprep.subr.mxu0 0.0
        %2932 = vmatpush1.msra.mxu0 0.0
        %2933 = vmatprep.subr.mxu0 0.0
        %2934 = vmatpush1.msra.mxu0 0.0
        %2935 = vmatprep.subr.mxu0 0.0
        %2936 = vmatpush1.msra.mxu0 0.0
        %2937 = vmatprep.subr.mxu0 0.0
        %2938 = vmatpush1.msra.mxu0 0.0
        %2939 = vmatprep.subr.mxu0 0.0
        %2940 = vmatpush1.msra.mxu0 0.0
        %2941 = vmatprep.subr.mxu0 0.0
        %2942 = vmatpush1.msra.mxu0 0.0
        %2943 = vmatprep.subr.mxu0 0.0
        %2944 = vmatpush1.msra.mxu0 0.0
        %2945 = vmatprep.subr.mxu0 0.0
        %2946 = vmatpush1.msra.mxu0 0.0
        %2947 = vmatprep.subr.mxu0 0.0
        %2948 = vmatpush1.msra.mxu0 0.0
        %2949 = vmatprep.mubr.f32.mxu0 0.0
        %2950 = vmatmul.mubr.f32.gmra.mrb[0].mxu0 %v2807
        %v2951 = vpop.f32.mrb[0].mxu0
        %v2952 = vadd.f32 %v2883, %v2951
        %v2953 = vpop.f32.mrb[0].mxu0
        %2954 = vdwg.mxu0
        %2956 = vrot.lane.b32.xlu0 %v2797, 120
        %v2957 = vpop.permute.xlu0 %2956
        %2959 = vrot.lane.b32.xlu0 %v2797, 112
        %v2960 = vpop.permute.xlu0 %2959
        %2962 = vrot.lane.b32.xlu0 %v2797, 104
        %v2963 = vpop.permute.xlu0 %2962
        %v2965 = vcombine.low %v2797, %v2960
        %v2966 = vcombine.high %v2797, %v2960
        %v2968 = vunpack.c.l.s4 1983009808
        %v2969 = vunpack.c.0.s8 %v2968
        %v2970 = vlaneseq
        %v2971 = vshrl.u32 %v2970, 7
        %v2972 = vsub.s32 %v2969, %v2971
        %v2973 = vrot.slane %v2965, %v2972
        %v2975 = vunpack.c.l.s4 1983009808
        %v2976 = vunpack.c.0.s8 %v2975
        %v2977 = vlaneseq
        %v2978 = vshrl.u32 %v2977, 7
        %v2979 = vsub.s32 %v2976, %v2978
        %v2980 = vrot.slane %v2966, %v2979
        %v2981 = vcombine.low %v2957, %v2963
        %v2982 = vcombine.high %v2957, %v2963
        %v2984 = vunpack.c.l.s4 1983009808
        %v2985 = vunpack.c.0.s8 %v2984
        %v2986 = vlaneseq
        %v2987 = vshrl.u32 %v2986, 7
        %v2988 = vsub.s32 %v2985, %v2987
        %v2989 = vrot.slane %v2981, %v2988
        %v2991 = vunpack.c.l.s4 1983009808
        %v2992 = vunpack.c.0.s8 %v2991
        %v2993 = vlaneseq
        %v2994 = vshrl.u32 %v2993, 7
        %v2995 = vsub.s32 %v2992, %v2994
        %v2996 = vrot.slane %v2982, %v2995
        %v2997 = vcombine.low %v2973, %v2989
        %v2998 = vcombine.high %v2973, %v2989
        %v3000 = vunpack.c.l.s4 1934713408
        %v3001 = vunpack.c.0.s8 %v3000
        %v3002 = vlaneseq
        %v3003 = vshrl.u32 %v3002, 7
        %v3004 = vsub.s32 %v3001, %v3003
        %v3005 = vrot.slane %v2997, %v3004
        %v3007 = vunpack.c.l.s4 1934713408
        %v3008 = vunpack.c.0.s8 %v3007
        %v3009 = vlaneseq
        %v3010 = vshrl.u32 %v3009, 7
        %v3011 = vsub.s32 %v3008, %v3010
        %v3012 = vrot.slane %v2998, %v3011
        %v3013 = vcombine.low %v2980, %v2996
        %v3014 = vcombine.high %v2980, %v2996
        %v3016 = vunpack.c.l.s4 1934713408
        %v3017 = vunpack.c.0.s8 %v3016
        %v3018 = vlaneseq
        %v3019 = vshrl.u32 %v3018, 7
        %v3020 = vsub.s32 %v3017, %v3019
        %v3021 = vrot.slane %v3013, %v3020
        %v3023 = vunpack.c.l.s4 1934713408
        %v3024 = vunpack.c.0.s8 %v3023
        %v3025 = vlaneseq
        %v3026 = vshrl.u32 %v3025, 7
        %v3027 = vsub.s32 %v3024, %v3026
        %v3028 = vrot.slane %v3014, %v3027
        %v3029 = vcombine.high %v3005, 0.0
        %v3030 = vcombine.high %v3012, 0.0
        %v3031 = vcombine.high %v3021, 0.0
        %v3032 = vcombine.high %v3028, 0.0
        %v3033 = vcombine.low %v3005, %v3012
        %v3035 = vunpack.c.l.s4 1983009808
        %v3036 = vunpack.c.0.s8 %v3035
        %v3037 = vlaneseq
        %v3038 = vshrl.u32 %v3037, 7
        %v3039 = vsub.s32 %v3036, %v3038
        %v3040 = vrot.slane %v3033, %v3039
        %v3041 = vcombine.low %v3029, %v3030
        %v3043 = vunpack.c.l.s4 1983009808
        %v3044 = vunpack.c.0.s8 %v3043
        %v3045 = vlaneseq
        %v3046 = vshrl.u32 %v3045, 7
        %v3047 = vsub.s32 %v3044, %v3046
        %v3048 = vrot.slane %v3041, %v3047
        %v3049 = vcombine.low %v3021, %v3028
        %v3051 = vunpack.c.l.s4 1983009808
        %v3052 = vunpack.c.0.s8 %v3051
        %v3053 = vlaneseq
        %v3054 = vshrl.u32 %v3053, 7
        %v3055 = vsub.s32 %v3052, %v3054
        %v3056 = vrot.slane %v3049, %v3055
        %v3057 = vcombine.low %v3031, %v3032
        %v3059 = vunpack.c.l.s4 1983009808
        %v3060 = vunpack.c.0.s8 %v3059
        %v3061 = vlaneseq
        %v3062 = vshrl.u32 %v3061, 7
        %v3063 = vsub.s32 %v3060, %v3062
        %v3064 = vrot.slane %v3057, %v3063
        %v3065 = vcombine.low %v3040, %v3048
        %v3066 = vcombine.high %v3040, %v3048
        %v3068 = vunpack.c.l.s4 1934713408
        %v3069 = vunpack.c.0.s8 %v3068
        %v3070 = vlaneseq
        %v3071 = vshrl.u32 %v3070, 7
        %v3072 = vsub.s32 %v3069, %v3071
        %v3073 = vrot.slane %v3065, %v3072
        %v3075 = vunpack.c.l.s4 1934713408
        %v3076 = vunpack.c.0.s8 %v3075
        %v3077 = vlaneseq
        %v3078 = vshrl.u32 %v3077, 7
        %v3079 = vsub.s32 %v3076, %v3078
        %v3080 = vrot.slane %v3066, %v3079
        %v3081 = vcombine.low %v3056, %v3064
        %v3082 = vcombine.high %v3056, %v3064
        %v3084 = vunpack.c.l.s4 1934713408
        %v3085 = vunpack.c.0.s8 %v3084
        %v3086 = vlaneseq
        %v3087 = vshrl.u32 %v3086, 7
        %v3088 = vsub.s32 %v3085, %v3087
        %v3089 = vrot.slane %v3081, %v3088
        %v3091 = vunpack.c.l.s4 1934713408
        %v3092 = vunpack.c.0.s8 %v3091
        %v3093 = vlaneseq
        %v3094 = vshrl.u32 %v3093, 7
        %v3095 = vsub.s32 %v3092, %v3094
        %v3096 = vrot.slane %v3082, %v3095
        %v3097 = vcombine.low %v3073, %v3089
        %v3098 = vcombine.high %v3073, %v3089
        %v3099 = vcombine.low %v3080, %v3096
        %v3100 = vcombine.high %v3080, %v3096
        %3102 = vrot.lane.b32.xlu0 %v2876, 120
        %v3103 = vpop.permute.xlu0 %3102
        %3105 = vrot.lane.b32.xlu0 %v2876, 112
        %v3106 = vpop.permute.xlu0 %3105
        %3108 = vrot.lane.b32.xlu0 %v2876, 104
        %v3109 = vpop.permute.xlu0 %3108
        %v3111 = vcombine.low %v2876, %v3106
        %v3112 = vcombine.high %v2876, %v3106
        %v3114 = vunpack.c.l.s4 1983009808
        %v3115 = vunpack.c.0.s8 %v3114
        %v3116 = vlaneseq
        %v3117 = vshrl.u32 %v3116, 7
        %v3118 = vsub.s32 %v3115, %v3117
        %v3119 = vrot.slane %v3111, %v3118
        %v3121 = vunpack.c.l.s4 1983009808
        %v3122 = vunpack.c.0.s8 %v3121
        %v3123 = vlaneseq
        %v3124 = vshrl.u32 %v3123, 7
        %v3125 = vsub.s32 %v3122, %v3124
        %v3126 = vrot.slane %v3112, %v3125
        %v3127 = vcombine.low %v3103, %v3109
        %v3128 = vcombine.high %v3103, %v3109
        %v3130 = vunpack.c.l.s4 1983009808
        %v3131 = vunpack.c.0.s8 %v3130
        %v3132 = vlaneseq
        %v3133 = vshrl.u32 %v3132, 7
        %v3134 = vsub.s32 %v3131, %v3133
        %v3135 = vrot.slane %v3127, %v3134
        %v3137 = vunpack.c.l.s4 1983009808
        %v3138 = vunpack.c.0.s8 %v3137
        %v3139 = vlaneseq
        %v3140 = vshrl.u32 %v3139, 7
        %v3141 = vsub.s32 %v3138, %v3140
        %v3142 = vrot.slane %v3128, %v3141
        %v3143 = vcombine.low %v3119, %v3135
        %v3144 = vcombine.high %v3119, %v3135
        %v3146 = vunpack.c.l.s4 1934713408
        %v3147 = vunpack.c.0.s8 %v3146
        %v3148 = vlaneseq
        %v3149 = vshrl.u32 %v3148, 7
        %v3150 = vsub.s32 %v3147, %v3149
        %v3151 = vrot.slane %v3143, %v3150
        %v3153 = vunpack.c.l.s4 1934713408
        %v3154 = vunpack.c.0.s8 %v3153
        %v3155 = vlaneseq
        %v3156 = vshrl.u32 %v3155, 7
        %v3157 = vsub.s32 %v3154, %v3156
        %v3158 = vrot.slane %v3144, %v3157
        %v3159 = vcombine.low %v3126, %v3142
        %v3160 = vcombine.high %v3126, %v3142
        %v3162 = vunpack.c.l.s4 1934713408
        %v3163 = vunpack.c.0.s8 %v3162
        %v3164 = vlaneseq
        %v3165 = vshrl.u32 %v3164, 7
        %v3166 = vsub.s32 %v3163, %v3165
        %v3167 = vrot.slane %v3159, %v3166
        %v3169 = vunpack.c.l.s4 1934713408
        %v3170 = vunpack.c.0.s8 %v3169
        %v3171 = vlaneseq
        %v3172 = vshrl.u32 %v3171, 7
        %v3173 = vsub.s32 %v3170, %v3172
        %v3174 = vrot.slane %v3160, %v3173
        %v3175 = vcombine.high %v3151, 0.0
        %v3176 = vcombine.high %v3158, 0.0
        %v3177 = vcombine.high %v3167, 0.0
        %v3178 = vcombine.high %v3174, 0.0
        %v3179 = vcombine.low %v3151, %v3158
        %v3181 = vunpack.c.l.s4 1983009808
        %v3182 = vunpack.c.0.s8 %v3181
        %v3183 = vlaneseq
        %v3184 = vshrl.u32 %v3183, 7
        %v3185 = vsub.s32 %v3182, %v3184
        %v3186 = vrot.slane %v3179, %v3185
        %v3187 = vcombine.low %v3175, %v3176
        %v3189 = vunpack.c.l.s4 1983009808
        %v3190 = vunpack.c.0.s8 %v3189
        %v3191 = vlaneseq
        %v3192 = vshrl.u32 %v3191, 7
        %v3193 = vsub.s32 %v3190, %v3192
        %v3194 = vrot.slane %v3187, %v3193
        %v3195 = vcombine.low %v3167, %v3174
        %v3197 = vunpack.c.l.s4 1983009808
        %v3198 = vunpack.c.0.s8 %v3197
        %v3199 = vlaneseq
        %v3200 = vshrl.u32 %v3199, 7
        %v3201 = vsub.s32 %v3198, %v3200
        %v3202 = vrot.slane %v3195, %v3201
        %v3203 = vcombine.low %v3177, %v3178
        %v3205 = vunpack.c.l.s4 1983009808
        %v3206 = vunpack.c.0.s8 %v3205
        %v3207 = vlaneseq
        %v3208 = vshrl.u32 %v3207, 7
        %v3209 = vsub.s32 %v3206, %v3208
        %v3210 = vrot.slane %v3203, %v3209
        %v3211 = vcombine.low %v3186, %v3194
        %v3212 = vcombine.high %v3186, %v3194
        %v3214 = vunpack.c.l.s4 1934713408
        %v3215 = vunpack.c.0.s8 %v3214
        %v3216 = vlaneseq
        %v3217 = vshrl.u32 %v3216, 7
        %v3218 = vsub.s32 %v3215, %v3217
        %v3219 = vrot.slane %v3211, %v3218
        %v3221 = vunpack.c.l.s4 1934713408
        %v3222 = vunpack.c.0.s8 %v3221
        %v3223 = vlaneseq
        %v3224 = vshrl.u32 %v3223, 7
        %v3225 = vsub.s32 %v3222, %v3224
        %v3226 = vrot.slane %v3212, %v3225
        %v3227 = vcombine.low %v3202, %v3210
        %v3228 = vcombine.high %v3202, %v3210
        %v3230 = vunpack.c.l.s4 1934713408
        %v3231 = vunpack.c.0.s8 %v3230
        %v3232 = vlaneseq
        %v3233 = vshrl.u32 %v3232, 7
        %v3234 = vsub.s32 %v3231, %v3233
        %v3235 = vrot.slane %v3227, %v3234
        %v3237 = vunpack.c.l.s4 1934713408
        %v3238 = vunpack.c.0.s8 %v3237
        %v3239 = vlaneseq
        %v3240 = vshrl.u32 %v3239, 7
        %v3241 = vsub.s32 %v3238, %v3240
        %v3242 = vrot.slane %v3228, %v3241
        %v3243 = vcombine.low %v3219, %v3235
        %v3244 = vcombine.high %v3219, %v3235
        %v3245 = vcombine.low %v3226, %v3242
        %v3246 = vcombine.high %v3226, %v3242
        %3248 = vrot.lane.b32.xlu0 %v2952, 120
        %v3249 = vpop.permute.xlu0 %3248
        %3251 = vrot.lane.b32.xlu0 %v2952, 112
        %v3252 = vpop.permute.xlu0 %3251
        %3254 = vrot.lane.b32.xlu0 %v2952, 104
        %v3255 = vpop.permute.xlu0 %3254
        %v3257 = vcombine.low %v2952, %v3252
        %v3258 = vcombine.high %v2952, %v3252
        %v3260 = vunpack.c.l.s4 1983009808
        %v3261 = vunpack.c.0.s8 %v3260
        %v3262 = vlaneseq
        %v3263 = vshrl.u32 %v3262, 7
        %v3264 = vsub.s32 %v3261, %v3263
        %v3265 = vrot.slane %v3257, %v3264
        %v3267 = vunpack.c.l.s4 1983009808
        %v3268 = vunpack.c.0.s8 %v3267
        %v3269 = vlaneseq
        %v3270 = vshrl.u32 %v3269, 7
        %v3271 = vsub.s32 %v3268, %v3270
        %v3272 = vrot.slane %v3258, %v3271
        %v3273 = vcombine.low %v3249, %v3255
        %v3274 = vcombine.high %v3249, %v3255
        %v3276 = vunpack.c.l.s4 1983009808
        %v3277 = vunpack.c.0.s8 %v3276
        %v3278 = vlaneseq
        %v3279 = vshrl.u32 %v3278, 7
        %v3280 = vsub.s32 %v3277, %v3279
        %v3281 = vrot.slane %v3273, %v3280
        %v3283 = vunpack.c.l.s4 1983009808
        %v3284 = vunpack.c.0.s8 %v3283
        %v3285 = vlaneseq
        %v3286 = vshrl.u32 %v3285, 7
        %v3287 = vsub.s32 %v3284, %v3286
        %v3288 = vrot.slane %v3274, %v3287
        %v3289 = vcombine.low %v3265, %v3281
        %v3290 = vcombine.high %v3265, %v3281
        %v3292 = vunpack.c.l.s4 1934713408
        %v3293 = vunpack.c.0.s8 %v3292
        %v3294 = vlaneseq
        %v3295 = vshrl.u32 %v3294, 7
        %v3296 = vsub.s32 %v3293, %v3295
        %v3297 = vrot.slane %v3289, %v3296
        %v3299 = vunpack.c.l.s4 1934713408
        %v3300 = vunpack.c.0.s8 %v3299
        %v3301 = vlaneseq
        %v3302 = vshrl.u32 %v3301, 7
        %v3303 = vsub.s32 %v3300, %v3302
        %v3304 = vrot.slane %v3290, %v3303
        %v3305 = vcombine.low %v3272, %v3288
        %v3306 = vcombine.high %v3272, %v3288
        %v3308 = vunpack.c.l.s4 1934713408
        %v3309 = vunpack.c.0.s8 %v3308
        %v3310 = vlaneseq
        %v3311 = vshrl.u32 %v3310, 7
        %v3312 = vsub.s32 %v3309, %v3311
        %v3313 = vrot.slane %v3305, %v3312
        %v3315 = vunpack.c.l.s4 1934713408
        %v3316 = vunpack.c.0.s8 %v3315
        %v3317 = vlaneseq
        %v3318 = vshrl.u32 %v3317, 7
        %v3319 = vsub.s32 %v3316, %v3318
        %v3320 = vrot.slane %v3306, %v3319
        %v3321 = vcombine.high %v3297, 0.0
        %v3322 = vcombine.high %v3304, 0.0
        %v3323 = vcombine.high %v3313, 0.0
        %v3324 = vcombine.high %v3320, 0.0
        %v3325 = vcombine.low %v3297, %v3304
        %v3327 = vunpack.c.l.s4 1983009808
        %v3328 = vunpack.c.0.s8 %v3327
        %v3329 = vlaneseq
        %v3330 = vshrl.u32 %v3329, 7
        %v3331 = vsub.s32 %v3328, %v3330
        %v3332 = vrot.slane %v3325, %v3331
        %v3333 = vcombine.low %v3321, %v3322
        %v3335 = vunpack.c.l.s4 1983009808
        %v3336 = vunpack.c.0.s8 %v3335
        %v3337 = vlaneseq
        %v3338 = vshrl.u32 %v3337, 7
        %v3339 = vsub.s32 %v3336, %v3338
        %v3340 = vrot.slane %v3333, %v3339
        %v3341 = vcombine.low %v3313, %v3320
        %v3343 = vunpack.c.l.s4 1983009808
        %v3344 = vunpack.c.0.s8 %v3343
        %v3345 = vlaneseq
        %v3346 = vshrl.u32 %v3345, 7
        %v3347 = vsub.s32 %v3344, %v3346
        %v3348 = vrot.slane %v3341, %v3347
        %v3349 = vcombine.low %v3323, %v3324
        %v3351 = vunpack.c.l.s4 1983009808
        %v3352 = vunpack.c.0.s8 %v3351
        %v3353 = vlaneseq
        %v3354 = vshrl.u32 %v3353, 7
        %v3355 = vsub.s32 %v3352, %v3354
        %v3356 = vrot.slane %v3349, %v3355
        %v3357 = vcombine.low %v3332, %v3340
        %v3358 = vcombine.high %v3332, %v3340
        %v3360 = vunpack.c.l.s4 1934713408
        %v3361 = vunpack.c.0.s8 %v3360
        %v3362 = vlaneseq
        %v3363 = vshrl.u32 %v3362, 7
        %v3364 = vsub.s32 %v3361, %v3363
        %v3365 = vrot.slane %v3357, %v3364
        %v3367 = vunpack.c.l.s4 1934713408
        %v3368 = vunpack.c.0.s8 %v3367
        %v3369 = vlaneseq
        %v3370 = vshrl.u32 %v3369, 7
        %v3371 = vsub.s32 %v3368, %v3370
        %v3372 = vrot.slane %v3358, %v3371
        %v3373 = vcombine.low %v3348, %v3356
        %v3374 = vcombine.high %v3348, %v3356
        %v3376 = vunpack.c.l.s4 1934713408
        %v3377 = vunpack.c.0.s8 %v3376
        %v3378 = vlaneseq
        %v3379 = vshrl.u32 %v3378, 7
        %v3380 = vsub.s32 %v3377, %v3379
        %v3381 = vrot.slane %v3373, %v3380
        %v3383 = vunpack.c.l.s4 1934713408
        %v3384 = vunpack.c.0.s8 %v3383
        %v3385 = vlaneseq
        %v3386 = vshrl.u32 %v3385, 7
        %v3387 = vsub.s32 %v3384, %v3386
        %v3388 = vrot.slane %v3374, %v3387
        %v3389 = vcombine.low %v3365, %v3381
        %v3390 = vcombine.high %v3365, %v3381
        %v3391 = vcombine.low %v3372, %v3388
        %v3392 = vcombine.high %v3372, %v3388
        %v3394 = vsel %vm1815, %v3097, 0
        %v3397 = vsel %vm1815, %v3243, 0
        %3399 = vmatprep.subr.mxu0 0.0
        %3400 = vmatpush1.xpose.msra.mxu0 %v3397
        %3401 = vmatprep.subr.mxu0 0.0
        %3402 = vmatpush1.xpose.msra.mxu0 0.0
        %3403 = vmatprep.subr.mxu0 0.0
        %3404 = vmatpush1.xpose.msra.mxu0 0.0
        %3405 = vmatprep.subr.mxu0 0.0
        %3406 = vmatpush1.xpose.msra.mxu0 0.0
        %3407 = vmatprep.subr.mxu0 0.0
        %3408 = vmatpush1.xpose.msra.mxu0 0.0
        %3409 = vmatprep.subr.mxu0 0.0
        %3410 = vmatpush1.xpose.msra.mxu0 0.0
        %3411 = vmatprep.subr.mxu0 0.0
        %3412 = vmatpush1.xpose.msra.mxu0 0.0
        %3413 = vmatprep.subr.mxu0 0.0
        %3414 = vmatpush1.xpose.msra.mxu0 0.0
        %3415 = vmatprep.subr.mxu0 0.0
        %3416 = vmatpush1.xpose.msra.mxu0 0.0
        %3417 = vmatprep.subr.mxu0 0.0
        %3418 = vmatpush1.xpose.msra.mxu0 0.0
        %3419 = vmatprep.subr.mxu0 0.0
        %3420 = vmatpush1.xpose.msra.mxu0 0.0
        %3421 = vmatprep.subr.mxu0 0.0
        %3422 = vmatpush1.xpose.msra.mxu0 0.0
        %3423 = vmatprep.subr.mxu0 0.0
        %3424 = vmatpush1.xpose.msra.mxu0 0.0
        %3425 = vmatprep.subr.mxu0 0.0
        %3426 = vmatpush1.xpose.msra.mxu0 0.0
        %3427 = vmatprep.subr.mxu0 0.0
        %3428 = vmatpush1.xpose.msra.mxu0 0.0
        %3429 = vmatprep.subr.mxu0 0.0
        %3430 = vmatpush1.xpose.msra.mxu0 0.0
        %3431 = vmatprep.subr.mxu0 0.0
        %3432 = vmatpush1.xpose.msra.mxu0 0.0
        %3433 = vmatprep.subr.mxu0 0.0
        %3434 = vmatpush1.xpose.msra.mxu0 0.0
        %3435 = vmatprep.subr.mxu0 0.0
        %3436 = vmatpush1.xpose.msra.mxu0 0.0
        %3437 = vmatprep.subr.mxu0 0.0
        %3438 = vmatpush1.xpose.msra.mxu0 0.0
        %3439 = vmatprep.subr.mxu0 0.0
        %3440 = vmatpush1.xpose.msra.mxu0 0.0
        %3441 = vmatprep.subr.mxu0 0.0
        %3442 = vmatpush1.xpose.msra.mxu0 0.0
        %3443 = vmatprep.subr.mxu0 0.0
        %3444 = vmatpush1.xpose.msra.mxu0 0.0
        %3445 = vmatprep.subr.mxu0 0.0
        %3446 = vmatpush1.xpose.msra.mxu0 0.0
        %3447 = vmatprep.subr.mxu0 0.0
        %3448 = vmatpush1.xpose.msra.mxu0 0.0
        %3449 = vmatprep.subr.mxu0 0.0
        %3450 = vmatpush1.xpose.msra.mxu0 0.0
        %3451 = vmatprep.subr.mxu0 0.0
        %3452 = vmatpush1.xpose.msra.mxu0 0.0
        %3453 = vmatprep.subr.mxu0 0.0
        %3454 = vmatpush1.xpose.msra.mxu0 0.0
        %3455 = vmatprep.subr.mxu0 0.0
        %3456 = vmatpush1.xpose.msra.mxu0 0.0
        %3457 = vmatprep.subr.mxu0 0.0
        %3458 = vmatpush1.xpose.msra.mxu0 0.0
        %3459 = vmatprep.subr.mxu0 0.0
        %3460 = vmatpush1.xpose.msra.mxu0 0.0
        %3461 = vmatprep.subr.mxu0 0.0
        %3462 = vmatpush1.xpose.msra.mxu0 0.0
        %3463 = vmatprep.mubr.f32.mxu0 0.0
        %3464 = vmatmul.mubr.f32.gmra.mrb[0].mxu0 %v3394
        %v3465 = vpop.f32.mrb[0].mxu0
        %v3466 = vadd.f32 0.0, %v3465
        %v3467 = vpop.f32.mrb[0].mxu0
        %3468 = vdwg.mxu0
        %v3470 = vsel %vm1815, %v3098, 0
        %v3473 = vsel %vm1815, %v3244, 0
        %3475 = vmatprep.subr.mxu0 0.0
        %3476 = vmatpush1.xpose.msra.mxu0 %v3473
        %3477 = vmatprep.subr.mxu0 0.0
        %3478 = vmatpush1.xpose.msra.mxu0 0.0
        %3479 = vmatprep.subr.mxu0 0.0
        %3480 = vmatpush1.xpose.msra.mxu0 0.0
        %3481 = vmatprep.subr.mxu0 0.0
        %3482 = vmatpush1.xpose.msra.mxu0 0.0
        %3483 = vmatprep.subr.mxu0 0.0
        %3484 = vmatpush1.xpose.msra.mxu0 0.0
        %3485 = vmatprep.subr.mxu0 0.0
        %3486 = vmatpush1.xpose.msra.mxu0 0.0
        %3487 = vmatprep.subr.mxu0 0.0
        %3488 = vmatpush1.xpose.msra.mxu0 0.0
        %3489 = vmatprep.subr.mxu0 0.0
        %3490 = vmatpush1.xpose.msra.mxu0 0.0
        %3491 = vmatprep.subr.mxu0 0.0
        %3492 = vmatpush1.xpose.msra.mxu0 0.0
        %3493 = vmatprep.subr.mxu0 0.0
        %3494 = vmatpush1.xpose.msra.mxu0 0.0
        %3495 = vmatprep.subr.mxu0 0.0
        %3496 = vmatpush1.xpose.msra.mxu0 0.0
        %3497 = vmatprep.subr.mxu0 0.0
        %3498 = vmatpush1.xpose.msra.mxu0 0.0
        %3499 = vmatprep.subr.mxu0 0.0
        %3500 = vmatpush1.xpose.msra.mxu0 0.0
        %3501 = vmatprep.subr.mxu0 0.0
        %3502 = vmatpush1.xpose.msra.mxu0 0.0
        %3503 = vmatprep.subr.mxu0 0.0
        %3504 = vmatpush1.xpose.msra.mxu0 0.0
        %3505 = vmatprep.subr.mxu0 0.0
        %3506 = vmatpush1.xpose.msra.mxu0 0.0
        %3507 = vmatprep.subr.mxu0 0.0
        %3508 = vmatpush1.xpose.msra.mxu0 0.0
        %3509 = vmatprep.subr.mxu0 0.0
        %3510 = vmatpush1.xpose.msra.mxu0 0.0
        %3511 = vmatprep.subr.mxu0 0.0
        %3512 = vmatpush1.xpose.msra.mxu0 0.0
        %3513 = vmatprep.subr.mxu0 0.0
        %3514 = vmatpush1.xpose.msra.mxu0 0.0
        %3515 = vmatprep.subr.mxu0 0.0
        %3516 = vmatpush1.xpose.msra.mxu0 0.0
        %3517 = vmatprep.subr.mxu0 0.0
        %3518 = vmatpush1.xpose.msra.mxu0 0.0
        %3519 = vmatprep.subr.mxu0 0.0
        %3520 = vmatpush1.xpose.msra.mxu0 0.0
        %3521 = vmatprep.subr.mxu0 0.0
        %3522 = vmatpush1.xpose.msra.mxu0 0.0
        %3523 = vmatprep.subr.mxu0 0.0
        %3524 = vmatpush1.xpose.msra.mxu0 0.0
        %3525 = vmatprep.subr.mxu0 0.0
        %3526 = vmatpush1.xpose.msra.mxu0 0.0
        %3527 = vmatprep.subr.mxu0 0.0
        %3528 = vmatpush1.xpose.msra.mxu0 0.0
        %3529 = vmatprep.subr.mxu0 0.0
        %3530 = vmatpush1.xpose.msra.mxu0 0.0
        %3531 = vmatprep.subr.mxu0 0.0
        %3532 = vmatpush1.xpose.msra.mxu0 0.0
        %3533 = vmatprep.subr.mxu0 0.0
        %3534 = vmatpush1.xpose.msra.mxu0 0.0
        %3535 = vmatprep.subr.mxu0 0.0
        %3536 = vmatpush1.xpose.msra.mxu0 0.0
        %3537 = vmatprep.subr.mxu0 0.0
        %3538 = vmatpush1.xpose.msra.mxu0 0.0
        %3539 = vmatprep.mubr.f32.mxu0 0.0
        %3540 = vmatmul.mubr.f32.gmra.mrb[0].mxu0 %v3470
        %v3541 = vpop.f32.mrb[0].mxu0
        %v3542 = vadd.f32 0.0, %v3541
        %v3543 = vpop.f32.mrb[0].mxu0
        %3544 = vdwg.mxu0
        %v3546 = vsel %vm1815, %v3099, 0
        %v3549 = vsel %vm1815, %v3245, 0
        %3551 = vmatprep.subr.mxu0 0.0
        %3552 = vmatpush1.xpose.msra.mxu0 %v3549
        %3553 = vmatprep.subr.mxu0 0.0
        %3554 = vmatpush1.xpose.msra.mxu0 0.0
        %3555 = vmatprep.subr.mxu0 0.0
        %3556 = vmatpush1.xpose.msra.mxu0 0.0
        %3557 = vmatprep.subr.mxu0 0.0
        %3558 = vmatpush1.xpose.msra.mxu0 0.0
        %3559 = vmatprep.subr.mxu0 0.0
        %3560 = vmatpush1.xpose.msra.mxu0 0.0
        %3561 = vmatprep.subr.mxu0 0.0
        %3562 = vmatpush1.xpose.msra.mxu0 0.0
        %3563 = vmatprep.subr.mxu0 0.0
        %3564 = vmatpush1.xpose.msra.mxu0 0.0
        %3565 = vmatprep.subr.mxu0 0.0
        %3566 = vmatpush1.xpose.msra.mxu0 0.0
        %3567 = vmatprep.subr.mxu0 0.0
        %3568 = vmatpush1.xpose.msra.mxu0 0.0
        %3569 = vmatprep.subr.mxu0 0.0
        %3570 = vmatpush1.xpose.msra.mxu0 0.0
        %3571 = vmatprep.subr.mxu0 0.0
        %3572 = vmatpush1.xpose.msra.mxu0 0.0
        %3573 = vmatprep.subr.mxu0 0.0
        %3574 = vmatpush1.xpose.msra.mxu0 0.0
        %3575 = vmatprep.subr.mxu0 0.0
        %3576 = vmatpush1.xpose.msra.mxu0 0.0
        %3577 = vmatprep.subr.mxu0 0.0
        %3578 = vmatpush1.xpose.msra.mxu0 0.0
        %3579 = vmatprep.subr.mxu0 0.0
        %3580 = vmatpush1.xpose.msra.mxu0 0.0
        %3581 = vmatprep.subr.mxu0 0.0
        %3582 = vmatpush1.xpose.msra.mxu0 0.0
        %3583 = vmatprep.subr.mxu0 0.0
        %3584 = vmatpush1.xpose.msra.mxu0 0.0
        %3585 = vmatprep.subr.mxu0 0.0
        %3586 = vmatpush1.xpose.msra.mxu0 0.0
        %3587 = vmatprep.subr.mxu0 0.0
        %3588 = vmatpush1.xpose.msra.mxu0 0.0
        %3589 = vmatprep.subr.mxu0 0.0
        %3590 = vmatpush1.xpose.msra.mxu0 0.0
        %3591 = vmatprep.subr.mxu0 0.0
        %3592 = vmatpush1.xpose.msra.mxu0 0.0
        %3593 = vmatprep.subr.mxu0 0.0
        %3594 = vmatpush1.xpose.msra.mxu0 0.0
        %3595 = vmatprep.subr.mxu0 0.0
        %3596 = vmatpush1.xpose.msra.mxu0 0.0
        %3597 = vmatprep.subr.mxu0 0.0
        %3598 = vmatpush1.xpose.msra.mxu0 0.0
        %3599 = vmatprep.subr.mxu0 0.0
        %3600 = vmatpush1.xpose.msra.mxu0 0.0
        %3601 = vmatprep.subr.mxu0 0.0
        %3602 = vmatpush1.xpose.msra.mxu0 0.0
        %3603 = vmatprep.subr.mxu0 0.0
        %3604 = vmatpush1.xpose.msra.mxu0 0.0
        %3605 = vmatprep.subr.mxu0 0.0
        %3606 = vmatpush1.xpose.msra.mxu0 0.0
        %3607 = vmatprep.subr.mxu0 0.0
        %3608 = vmatpush1.xpose.msra.mxu0 0.0
        %3609 = vmatprep.subr.mxu0 0.0
        %3610 = vmatpush1.xpose.msra.mxu0 0.0
        %3611 = vmatprep.subr.mxu0 0.0
        %3612 = vmatpush1.xpose.msra.mxu0 0.0
        %3613 = vmatprep.subr.mxu0 0.0
        %3614 = vmatpush1.xpose.msra.mxu0 0.0
        %3615 = vmatprep.mubr.f32.mxu0 0.0
        %3616 = vmatmul.mubr.f32.gmra.mrb[0].mxu0 %v3546
        %v3617 = vpop.f32.mrb[0].mxu0
        %v3618 = vadd.f32 0.0, %v3617
        %v3619 = vpop.f32.mrb[0].mxu0
        %3620 = vdwg.mxu0
        %v3622 = vsel %vm1815, %v3100, 0
        %v3625 = vsel %vm1815, %v3246, 0
        %3627 = vmatprep.subr.mxu0 0.0
        %3628 = vmatpush1.xpose.msra.mxu0 %v3625
        %3629 = vmatprep.subr.mxu0 0.0
        %3630 = vmatpush1.xpose.msra.mxu0 0.0
        %3631 = vmatprep.subr.mxu0 0.0
        %3632 = vmatpush1.xpose.msra.mxu0 0.0
        %3633 = vmatprep.subr.mxu0 0.0
        %3634 = vmatpush1.xpose.msra.mxu0 0.0
        %3635 = vmatprep.subr.mxu0 0.0
        %3636 = vmatpush1.xpose.msra.mxu0 0.0
        %3637 = vmatprep.subr.mxu0 0.0
        %3638 = vmatpush1.xpose.msra.mxu0 0.0
        %3639 = vmatprep.subr.mxu0 0.0
        %3640 = vmatpush1.xpose.msra.mxu0 0.0
        %3641 = vmatprep.subr.mxu0 0.0
        %3642 = vmatpush1.xpose.msra.mxu0 0.0
        %3643 = vmatprep.subr.mxu0 0.0
        %3644 = vmatpush1.xpose.msra.mxu0 0.0
        %3645 = vmatprep.subr.mxu0 0.0
        %3646 = vmatpush1.xpose.msra.mxu0 0.0
        %3647 = vmatprep.subr.mxu0 0.0
        %3648 = vmatpush1.xpose.msra.mxu0 0.0
        %3649 = vmatprep.subr.mxu0 0.0
        %3650 = vmatpush1.xpose.msra.mxu0 0.0
        %3651 = vmatprep.subr.mxu0 0.0
        %3652 = vmatpush1.xpose.msra.mxu0 0.0
        %3653 = vmatprep.subr.mxu0 0.0
        %3654 = vmatpush1.xpose.msra.mxu0 0.0
        %3655 = vmatprep.subr.mxu0 0.0
        %3656 = vmatpush1.xpose.msra.mxu0 0.0
        %3657 = vmatprep.subr.mxu0 0.0
        %3658 = vmatpush1.xpose.msra.mxu0 0.0
        %3659 = vmatprep.subr.mxu0 0.0
        %3660 = vmatpush1.xpose.msra.mxu0 0.0
        %3661 = vmatprep.subr.mxu0 0.0
        %3662 = vmatpush1.xpose.msra.mxu0 0.0
        %3663 = vmatprep.subr.mxu0 0.0
        %3664 = vmatpush1.xpose.msra.mxu0 0.0
        %3665 = vmatprep.subr.mxu0 0.0
        %3666 = vmatpush1.xpose.msra.mxu0 0.0
        %3667 = vmatprep.subr.mxu0 0.0
        %3668 = vmatpush1.xpose.msra.mxu0 0.0
        %3669 = vmatprep.subr.mxu0 0.0
        %3670 = vmatpush1.xpose.msra.mxu0 0.0
        %3671 = vmatprep.subr.mxu0 0.0
        %3672 = vmatpush1.xpose.msra.mxu0 0.0
        %3673 = vmatprep.subr.mxu0 0.0
        %3674 = vmatpush1.xpose.msra.mxu0 0.0
        %3675 = vmatprep.subr.mxu0 0.0
        %3676 = vmatpush1.xpose.msra.mxu0 0.0
        %3677 = vmatprep.subr.mxu0 0.0
        %3678 = vmatpush1.xpose.msra.mxu0 0.0
        %3679 = vmatprep.subr.mxu0 0.0
        %3680 = vmatpush1.xpose.msra.mxu0 0.0
        %3681 = vmatprep.subr.mxu0 0.0
        %3682 = vmatpush1.xpose.msra.mxu0 0.0
        %3683 = vmatprep.subr.mxu0 0.0
        %3684 = vmatpush1.xpose.msra.mxu0 0.0
        %3685 = vmatprep.subr.mxu0 0.0
        %3686 = vmatpush1.xpose.msra.mxu0 0.0
        %3687 = vmatprep.subr.mxu0 0.0
        %3688 = vmatpush1.xpose.msra.mxu0 0.0
        %3689 = vmatprep.subr.mxu0 0.0
        %3690 = vmatpush1.xpose.msra.mxu0 0.0
        %3691 = vmatprep.mubr.f32.mxu0 0.0
        %3692 = vmatmul.mubr.f32.gmra.mrb[0].mxu0 %v3622
        %v3693 = vpop.f32.mrb[0].mxu0
        %v3694 = vadd.f32 0.0, %v3693
        %v3695 = vpop.f32.mrb[0].mxu0
        %3696 = vdwg.mxu0
        %v3697 = vmul.f32 %v3466, 0.125
        %v3698 = vmul.f32 %v3542, 0.125
        %v3699 = vmul.f32 %v3618, 0.125
        %v3700 = vmul.f32 %v3694, 0.125
        %v3701 = vsel %vm1815, %v3697, -inf
        %3702 = vmax.xlane.f32.xlu0 %v3701
        %v3703 = vpop.xlane.xlu0 %3702
        %v3704 = vsel %vm1815, %v3698, -inf
        %3705 = vmax.xlane.f32.xlu0 %v3704
        %v3706 = vpop.xlane.xlu0 %3705
        %v3707 = vsel %vm1815, %v3699, -inf
        %3708 = vmax.xlane.f32.xlu0 %v3707
        %v3709 = vpop.xlane.xlu0 %3708
        %v3710 = vsel %vm1815, %v3700, -inf
        %3711 = vmax.xlane.f32.xlu0 %v3710
        %v3712 = vpop.xlane.xlu0 %3711
        %v3713 = vsub.f32 %v3697, %v3703
        %v3714 = vsub.f32 %v3698, %v3706
        %v3715 = vsub.f32 %v3699, %v3709
        %v3716 = vsub.f32 %v3700, %v3712
        %v3717 = vmul.f32 %v3713, 1.442695
        %v3718 = vpow.pop %v3717
        %v3719 = vmul.f32 %v3714, 1.442695
        %v3720 = vpow.pop %v3719
        %v3721 = vmul.f32 %v3715, 1.442695
        %v3722 = vpow.pop %v3721
        %v3723 = vmul.f32 %v3716, 1.442695
        %v3724 = vpow.pop %v3723
        %v3725 = vsel %vm1815, %v3718, 0.0
        %3726 = vadd.xlane.f32.xlu0 %v3725
        %v3727 = vpop.xlane.xlu0 %3726
        %v3728 = vsel %vm1815, %v3720, 0.0
        %3729 = vadd.xlane.f32.xlu0 %v3728
        %v3730 = vpop.xlane.xlu0 %3729
        %v3731 = vsel %vm1815, %v3722, 0.0
        %3732 = vadd.xlane.f32.xlu0 %v3731
        %v3733 = vpop.xlane.xlu0 %3732
        %v3734 = vsel %vm1815, %v3724, 0.0
        %3735 = vadd.xlane.f32.xlu0 %v3734
        %v3736 = vpop.xlane.xlu0 %3735
        %v3737 = vrcp.pop %v3727
        %v3738 = vrcp.pop %v3730
        %v3739 = vrcp.pop %v3733
        %v3740 = vrcp.pop %v3736
        %v3741 = vmul.f32 %v3718, %v3737
        %v3742 = vmul.f32 %v3720, %v3738
        %v3743 = vmul.f32 %v3722, %v3739
        %v3744 = vmul.f32 %v3724, %v3740
        %v3746 = vsel %vm1815, %v3741, 0
        %3748 = vmatprep.subr.mxu0 0.0
        %3749 = vmatpush1.msra.mxu0 %v3389
        %3750 = vmatprep.subr.mxu0 0.0
        %3751 = vmatpush1.msra.mxu0 0.0
        %3752 = vmatprep.subr.mxu0 0.0
        %3753 = vmatpush1.msra.mxu0 0.0
        %3754 = vmatprep.subr.mxu0 0.0
        %3755 = vmatpush1.msra.mxu0 0.0
        %3756 = vmatprep.subr.mxu0 0.0
        %3757 = vmatpush1.msra.mxu0 0.0
        %3758 = vmatprep.subr.mxu0 0.0
        %3759 = vmatpush1.msra.mxu0 0.0
        %3760 = vmatprep.subr.mxu0 0.0
        %3761 = vmatpush1.msra.mxu0 0.0
        %3762 = vmatprep.subr.mxu0 0.0
        %3763 = vmatpush1.msra.mxu0 0.0
        %3764 = vmatprep.subr.mxu0 0.0
        %3765 = vmatpush1.msra.mxu0 0.0
        %3766 = vmatprep.subr.mxu0 0.0
        %3767 = vmatpush1.msra.mxu0 0.0
        %3768 = vmatprep.subr.mxu0 0.0
        %3769 = vmatpush1.msra.mxu0 0.0
        %3770 = vmatprep.subr.mxu0 0.0
        %3771 = vmatpush1.msra.mxu0 0.0
        %3772 = vmatprep.subr.mxu0 0.0
        %3773 = vmatpush1.msra.mxu0 0.0
        %3774 = vmatprep.subr.mxu0 0.0
        %3775 = vmatpush1.msra.mxu0 0.0
        %3776 = vmatprep.subr.mxu0 0.0
        %3777 = vmatpush1.msra.mxu0 0.0
        %3778 = vmatprep.subr.mxu0 0.0
        %3779 = vmatpush1.msra.mxu0 0.0
        %3780 = vmatprep.subr.mxu0 0.0
        %3781 = vmatpush1.msra.mxu0 0.0
        %3782 = vmatprep.subr.mxu0 0.0
        %3783 = vmatpush1.msra.mxu0 0.0
        %3784 = vmatprep.subr.mxu0 0.0
        %3785 = vmatpush1.msra.mxu0 0.0
        %3786 = vmatprep.subr.mxu0 0.0
        %3787 = vmatpush1.msra.mxu0 0.0
        %3788 = vmatprep.subr.mxu0 0.0
        %3789 = vmatpush1.msra.mxu0 0.0
        %3790 = vmatprep.subr.mxu0 0.0
        %3791 = vmatpush1.msra.mxu0 0.0
        %3792 = vmatprep.subr.mxu0 0.0
        %3793 = vmatpush1.msra.mxu0 0.0
        %3794 = vmatprep.subr.mxu0 0.0
        %3795 = vmatpush1.msra.mxu0 0.0
        %3796 = vmatprep.subr.mxu0 0.0
        %3797 = vmatpush1.msra.mxu0 0.0
        %3798 = vmatprep.subr.mxu0 0.0
        %3799 = vmatpush1.msra.mxu0 0.0
        %3800 = vmatprep.subr.mxu0 0.0
        %3801 = vmatpush1.msra.mxu0 0.0
        %3802 = vmatprep.subr.mxu0 0.0
        %3803 = vmatpush1.msra.mxu0 0.0
        %3804 = vmatprep.subr.mxu0 0.0
        %3805 = vmatpush1.msra.mxu0 0.0
        %3806 = vmatprep.subr.mxu0 0.0
        %3807 = vmatpush1.msra.mxu0 0.0
        %3808 = vmatprep.subr.mxu0 0.0
        %3809 = vmatpush1.msra.mxu0 0.0
        %3810 = vmatprep.subr.mxu0 0.0
        %3811 = vmatpush1.msra.mxu0 0.0
        %3812 = vmatprep.mubr.f32.mxu0 0.0
        %3813 = vmatmul.mubr.f32.gmra.mrb[0].mxu0 %v3746
        %v3814 = vpop.f32.mrb[0].mxu0
        %v3815 = vadd.f32 0.0, %v3814
        %v3816 = vpop.f32.mrb[0].mxu0
        %3817 = vdwg.mxu0
        %v3819 = vsel %vm1815, %v3742, 0
        %3821 = vmatprep.subr.mxu0 0.0
        %3822 = vmatpush1.msra.mxu0 %v3390
        %3823 = vmatprep.subr.mxu0 0.0
        %3824 = vmatpush1.msra.mxu0 0.0
        %3825 = vmatprep.subr.mxu0 0.0
        %3826 = vmatpush1.msra.mxu0 0.0
        %3827 = vmatprep.subr.mxu0 0.0
        %3828 = vmatpush1.msra.mxu0 0.0
        %3829 = vmatprep.subr.mxu0 0.0
        %3830 = vmatpush1.msra.mxu0 0.0
        %3831 = vmatprep.subr.mxu0 0.0
        %3832 = vmatpush1.msra.mxu0 0.0
        %3833 = vmatprep.subr.mxu0 0.0
        %3834 = vmatpush1.msra.mxu0 0.0
        %3835 = vmatprep.subr.mxu0 0.0
        %3836 = vmatpush1.msra.mxu0 0.0
        %3837 = vmatprep.subr.mxu0 0.0
        %3838 = vmatpush1.msra.mxu0 0.0
        %3839 = vmatprep.subr.mxu0 0.0
        %3840 = vmatpush1.msra.mxu0 0.0
        %3841 = vmatprep.subr.mxu0 0.0
        %3842 = vmatpush1.msra.mxu0 0.0
        %3843 = vmatprep.subr.mxu0 0.0
        %3844 = vmatpush1.msra.mxu0 0.0
        %3845 = vmatprep.subr.mxu0 0.0
        %3846 = vmatpush1.msra.mxu0 0.0
        %3847 = vmatprep.subr.mxu0 0.0
        %3848 = vmatpush1.msra.mxu0 0.0
        %3849 = vmatprep.subr.mxu0 0.0
        %3850 = vmatpush1.msra.mxu0 0.0
        %3851 = vmatprep.subr.mxu0 0.0
        %3852 = vmatpush1.msra.mxu0 0.0
        %3853 = vmatprep.subr.mxu0 0.0
        %3854 = vmatpush1.msra.mxu0 0.0
        %3855 = vmatprep.subr.mxu0 0.0
        %3856 = vmatpush1.msra.mxu0 0.0
        %3857 = vmatprep.subr.mxu0 0.0
        %3858 = vmatpush1.msra.mxu0 0.0
        %3859 = vmatprep.subr.mxu0 0.0
        %3860 = vmatpush1.msra.mxu0 0.0
        %3861 = vmatprep.subr.mxu0 0.0
        %3862 = vmatpush1.msra.mxu0 0.0
        %3863 = vmatprep.subr.mxu0 0.0
        %3864 = vmatpush1.msra.mxu0 0.0
        %3865 = vmatprep.subr.mxu0 0.0
        %3866 = vmatpush1.msra.mxu0 0.0
        %3867 = vmatprep.subr.mxu0 0.0
        %3868 = vmatpush1.msra.mxu0 0.0
        %3869 = vmatprep.subr.mxu0 0.0
        %3870 = vmatpush1.msra.mxu0 0.0
        %3871 = vmatprep.subr.mxu0 0.0
        %3872 = vmatpush1.msra.mxu0 0.0
        %3873 = vmatprep.subr.mxu0 0.0
        %3874 = vmatpush1.msra.mxu0 0.0
        %3875 = vmatprep.subr.mxu0 0.0
        %3876 = vmatpush1.msra.mxu0 0.0
        %3877 = vmatprep.subr.mxu0 0.0
        %3878 = vmatpush1.msra.mxu0 0.0
        %3879 = vmatprep.subr.mxu0 0.0
        %3880 = vmatpush1.msra.mxu0 0.0
        %3881 = vmatprep.subr.mxu0 0.0
        %3882 = vmatpush1.msra.mxu0 0.0
        %3883 = vmatprep.subr.mxu0 0.0
        %3884 = vmatpush1.msra.mxu0 0.0
        %3885 = vmatprep.mubr.f32.mxu0 0.0
        %3886 = vmatmul.mubr.f32.gmra.mrb[0].mxu0 %v3819
        %v3887 = vpop.f32.mrb[0].mxu0
        %v3888 = vadd.f32 0.0, %v3887
        %v3889 = vpop.f32.mrb[0].mxu0
        %3890 = vdwg.mxu0
        %v3892 = vsel %vm1815, %v3743, 0
        %3894 = vmatprep.subr.mxu0 0.0
        %3895 = vmatpush1.msra.mxu0 %v3391
        %3896 = vmatprep.subr.mxu0 0.0
        %3897 = vmatpush1.msra.mxu0 0.0
        %3898 = vmatprep.subr.mxu0 0.0
        %3899 = vmatpush1.msra.mxu0 0.0
        %3900 = vmatprep.subr.mxu0 0.0
        %3901 = vmatpush1.msra.mxu0 0.0
        %3902 = vmatprep.subr.mxu0 0.0
        %3903 = vmatpush1.msra.mxu0 0.0
        %3904 = vmatprep.subr.mxu0 0.0
        %3905 = vmatpush1.msra.mxu0 0.0
        %3906 = vmatprep.subr.mxu0 0.0
        %3907 = vmatpush1.msra.mxu0 0.0
        %3908 = vmatprep.subr.mxu0 0.0
        %3909 = vmatpush1.msra.mxu0 0.0
        %3910 = vmatprep.subr.mxu0 0.0
        %3911 = vmatpush1.msra.mxu0 0.0
        %3912 = vmatprep.subr.mxu0 0.0
        %3913 = vmatpush1.msra.mxu0 0.0
        %3914 = vmatprep.subr.mxu0 0.0
        %3915 = vmatpush1.msra.mxu0 0.0
        %3916 = vmatprep.subr.mxu0 0.0
        %3917 = vmatpush1.msra.mxu0 0.0
        %3918 = vmatprep.subr.mxu0 0.0
        %3919 = vmatpush1.msra.mxu0 0.0
        %3920 = vmatprep.subr.mxu0 0.0
        %3921 = vmatpush1.msra.mxu0 0.0
        %3922 = vmatprep.subr.mxu0 0.0
        %3923 = vmatpush1.msra.mxu0 0.0
        %3924 = vmatprep.subr.mxu0 0.0
        %3925 = vmatpush1.msra.mxu0 0.0
        %3926 = vmatprep.subr.mxu0 0.0
        %3927 = vmatpush1.msra.mxu0 0.0
        %3928 = vmatprep.subr.mxu0 0.0
        %3929 = vmatpush1.msra.mxu0 0.0
        %3930 = vmatprep.subr.mxu0 0.0
        %3931 = vmatpush1.msra.mxu0 0.0
        %3932 = vmatprep.subr.mxu0 0.0
        %3933 = vmatpush1.msra.mxu0 0.0
        %3934 = vmatprep.subr.mxu0 0.0
        %3935 = vmatpush1.msra.mxu0 0.0
        %3936 = vmatprep.subr.mxu0 0.0
        %3937 = vmatpush1.msra.mxu0 0.0
        %3938 = vmatprep.subr.mxu0 0.0
        %3939 = vmatpush1.msra.mxu0 0.0
        %3940 = vmatprep.subr.mxu0 0.0
        %3941 = vmatpush1.msra.mxu0 0.0
        %3942 = vmatprep.subr.mxu0 0.0
        %3943 = vmatpush1.msra.mxu0 0.0
        %3944 = vmatprep.subr.mxu0 0.0
        %3945 = vmatpush1.msra.mxu0 0.0
        %3946 = vmatprep.subr.mxu0 0.0
        %3947 = vmatpush1.msra.mxu0 0.0
        %3948 = vmatprep.subr.mxu0 0.0
        %3949 = vmatpush1.msra.mxu0 0.0
        %3950 = vmatprep.subr.mxu0 0.0
        %3951 = vmatpush1.msra.mxu0 0.0
        %3952 = vmatprep.subr.mxu0 0.0
        %3953 = vmatpush1.msra.mxu0 0.0
        %3954 = vmatprep.subr.mxu0 0.0
        %3955 = vmatpush1.msra.mxu0 0.0
        %3956 = vmatprep.subr.mxu0 0.0
        %3957 = vmatpush1.msra.mxu0 0.0
        %3958 = vmatprep.mubr.f32.mxu0 0.0
        %3959 = vmatmul.mubr.f32.gmra.mrb[0].mxu0 %v3892
        %v3960 = vpop.f32.mrb[0].mxu0
        %v3961 = vadd.f32 0.0, %v3960
        %v3962 = vpop.f32.mrb[0].mxu0
        %3963 = vdwg.mxu0
        %v3965 = vsel %vm1815, %v3744, 0
        %3967 = vmatprep.subr.mxu0 0.0
        %3968 = vmatpush1.msra.mxu0 %v3392
        %3969 = vmatprep.subr.mxu0 0.0
        %3970 = vmatpush1.msra.mxu0 0.0
        %3971 = vmatprep.subr.mxu0 0.0
        %3972 = vmatpush1.msra.mxu0 0.0
        %3973 = vmatprep.subr.mxu0 0.0
        %3974 = vmatpush1.msra.mxu0 0.0
        %3975 = vmatprep.subr.mxu0 0.0
        %3976 = vmatpush1.msra.mxu0 0.0
        %3977 = vmatprep.subr.mxu0 0.0
        %3978 = vmatpush1.msra.mxu0 0.0
        %3979 = vmatprep.subr.mxu0 0.0
        %3980 = vmatpush1.msra.mxu0 0.0
        %3981 = vmatprep.subr.mxu0 0.0
        %3982 = vmatpush1.msra.mxu0 0.0
        %3983 = vmatprep.subr.mxu0 0.0
        %3984 = vmatpush1.msra.mxu0 0.0
        %3985 = vmatprep.subr.mxu0 0.0
        %3986 = vmatpush1.msra.mxu0 0.0
        %3987 = vmatprep.subr.mxu0 0.0
        %3988 = vmatpush1.msra.mxu0 0.0
        %3989 = vmatprep.subr.mxu0 0.0
        %3990 = vmatpush1.msra.mxu0 0.0
        %3991 = vmatprep.subr.mxu0 0.0
        %3992 = vmatpush1.msra.mxu0 0.0
        %3993 = vmatprep.subr.mxu0 0.0
        %3994 = vmatpush1.msra.mxu0 0.0
        %3995 = vmatprep.subr.mxu0 0.0
        %3996 = vmatpush1.msra.mxu0 0.0
        %3997 = vmatprep.subr.mxu0 0.0
        %3998 = vmatpush1.msra.mxu0 0.0
        %3999 = vmatprep.subr.mxu0 0.0
        %4000 = vmatpush1.msra.mxu0 0.0
        %4001 = vmatprep.subr.mxu0 0.0
        %4002 = vmatpush1.msra.mxu0 0.0
        %4003 = vmatprep.subr.mxu0 0.0
        %4004 = vmatpush1.msra.mxu0 0.0
        %4005 = vmatprep.subr.mxu0 0.0
        %4006 = vmatpush1.msra.mxu0 0.0
        %4007 = vmatprep.subr.mxu0 0.0
        %4008 = vmatpush1.msra.mxu0 0.0
        %4009 = vmatprep.subr.mxu0 0.0
        %4010 = vmatpush1.msra.mxu0 0.0
        %4011 = vmatprep.subr.mxu0 0.0
        %4012 = vmatpush1.msra.mxu0 0.0
        %4013 = vmatprep.subr.mxu0 0.0
        %4014 = vmatpush1.msra.mxu0 0.0
        %4015 = vmatprep.subr.mxu0 0.0
        %4016 = vmatpush1.msra.mxu0 0.0
        %4017 = vmatprep.subr.mxu0 0.0
        %4018 = vmatpush1.msra.mxu0 0.0
        %4019 = vmatprep.subr.mxu0 0.0
        %4020 = vmatpush1.msra.mxu0 0.0
        %4021 = vmatprep.subr.mxu0 0.0
        %4022 = vmatpush1.msra.mxu0 0.0
        %4023 = vmatprep.subr.mxu0 0.0
        %4024 = vmatpush1.msra.mxu0 0.0
        %4025 = vmatprep.subr.mxu0 0.0
        %4026 = vmatpush1.msra.mxu0 0.0
        %4027 = vmatprep.subr.mxu0 0.0
        %4028 = vmatpush1.msra.mxu0 0.0
        %4029 = vmatprep.subr.mxu0 0.0
        %4030 = vmatpush1.msra.mxu0 0.0
        %4031 = vmatprep.mubr.f32.mxu0 0.0
        %4032 = vmatmul.mubr.f32.gmra.mrb[0].mxu0 %v3965
        %v4033 = vpop.f32.mrb[0].mxu0
        %v4034 = vadd.f32 0.0, %v4033
        %v4035 = vpop.f32.mrb[0].mxu0
        %4036 = vdwg.mxu0
        %v4037 = vcombine.low %v3815, %v3961
        %v4038 = vcombine.high %v3815, %v3961
        %v4040 = vunpack.c.l.s4 1983009808
        %v4041 = vunpack.c.0.s8 %v4040
        %v4042 = vlaneseq
        %v4043 = vshrl.u32 %v4042, 7
        %v4044 = vsub.s32 %v4041, %v4043
        %v4045 = vrot.slane %v4037, %v4044
        %v4047 = vunpack.c.l.s4 1983009808
        %v4048 = vunpack.c.0.s8 %v4047
        %v4049 = vlaneseq
        %v4050 = vshrl.u32 %v4049, 7
        %v4051 = vsub.s32 %v4048, %v4050
        %v4052 = vrot.slane %v4038, %v4051
        %v4053 = vcombine.low %v3888, %v4034
        %v4054 = vcombine.high %v3888, %v4034
        %v4056 = vunpack.c.l.s4 1983009808
        %v4057 = vunpack.c.0.s8 %v4056
        %v4058 = vlaneseq
        %v4059 = vshrl.u32 %v4058, 7
        %v4060 = vsub.s32 %v4057, %v4059
        %v4061 = vrot.slane %v4053, %v4060
        %v4063 = vunpack.c.l.s4 1983009808
        %v4064 = vunpack.c.0.s8 %v4063
        %v4065 = vlaneseq
        %v4066 = vshrl.u32 %v4065, 7
        %v4067 = vsub.s32 %v4064, %v4066
        %v4068 = vrot.slane %v4054, %v4067
        %v4069 = vcombine.low %v4045, %v4061
        %v4070 = vcombine.high %v4045, %v4061
        %v4072 = vunpack.c.l.s4 1934713408
        %v4073 = vunpack.c.0.s8 %v4072
        %v4074 = vlaneseq
        %v4075 = vshrl.u32 %v4074, 7
        %v4076 = vsub.s32 %v4073, %v4075
        %v4077 = vrot.slane %v4069, %v4076
        %v4079 = vunpack.c.l.s4 1934713408
        %v4080 = vunpack.c.0.s8 %v4079
        %v4081 = vlaneseq
        %v4082 = vshrl.u32 %v4081, 7
        %v4083 = vsub.s32 %v4080, %v4082
        %v4084 = vrot.slane %v4070, %v4083
        %v4085 = vcombine.low %v4052, %v4068
        %v4086 = vcombine.high %v4052, %v4068
        %v4088 = vunpack.c.l.s4 1934713408
        %v4089 = vunpack.c.0.s8 %v4088
        %v4090 = vlaneseq
        %v4091 = vshrl.u32 %v4090, 7
        %v4092 = vsub.s32 %v4089, %v4091
        %v4093 = vrot.slane %v4085, %v4092
        %v4095 = vunpack.c.l.s4 1934713408
        %v4096 = vunpack.c.0.s8 %v4095
        %v4097 = vlaneseq
        %v4098 = vshrl.u32 %v4097, 7
        %v4099 = vsub.s32 %v4096, %v4098
        %v4100 = vrot.slane %v4086, %v4099
        %v4101 = vcombine.high %v4077, 0.0
        %v4102 = vcombine.high %v4084, 0.0
        %v4103 = vcombine.high %v4093, 0.0
        %v4104 = vcombine.high %v4100, 0.0
        %v4105 = vcombine.low %v4077, %v4084
        %v4107 = vunpack.c.l.s4 1983009808
        %v4108 = vunpack.c.0.s8 %v4107
        %v4109 = vlaneseq
        %v4110 = vshrl.u32 %v4109, 7
        %v4111 = vsub.s32 %v4108, %v4110
        %v4112 = vrot.slane %v4105, %v4111
        %v4113 = vcombine.low %v4101, %v4102
        %v4115 = vunpack.c.l.s4 1983009808
        %v4116 = vunpack.c.0.s8 %v4115
        %v4117 = vlaneseq
        %v4118 = vshrl.u32 %v4117, 7
        %v4119 = vsub.s32 %v4116, %v4118
        %v4120 = vrot.slane %v4113, %v4119
        %v4121 = vcombine.low %v4093, %v4100
        %v4123 = vunpack.c.l.s4 1983009808
        %v4124 = vunpack.c.0.s8 %v4123
        %v4125 = vlaneseq
        %v4126 = vshrl.u32 %v4125, 7
        %v4127 = vsub.s32 %v4124, %v4126
        %v4128 = vrot.slane %v4121, %v4127
        %v4129 = vcombine.low %v4103, %v4104
        %v4131 = vunpack.c.l.s4 1983009808
        %v4132 = vunpack.c.0.s8 %v4131
        %v4133 = vlaneseq
        %v4134 = vshrl.u32 %v4133, 7
        %v4135 = vsub.s32 %v4132, %v4134
        %v4136 = vrot.slane %v4129, %v4135
        %v4137 = vcombine.low %v4112, %v4120
        %v4138 = vcombine.high %v4112, %v4120
        %v4140 = vunpack.c.l.s4 1934713408
        %v4141 = vunpack.c.0.s8 %v4140
        %v4142 = vlaneseq
        %v4143 = vshrl.u32 %v4142, 7
        %v4144 = vsub.s32 %v4141, %v4143
        %v4145 = vrot.slane %v4137, %v4144
        %v4147 = vunpack.c.l.s4 1934713408
        %v4148 = vunpack.c.0.s8 %v4147
        %v4149 = vlaneseq
        %v4150 = vshrl.u32 %v4149, 7
        %v4151 = vsub.s32 %v4148, %v4150
        %v4152 = vrot.slane %v4138, %v4151
        %v4153 = vcombine.low %v4128, %v4136
        %v4154 = vcombine.high %v4128, %v4136
        %v4156 = vunpack.c.l.s4 1934713408
        %v4157 = vunpack.c.0.s8 %v4156
        %v4158 = vlaneseq
        %v4159 = vshrl.u32 %v4158, 7
        %v4160 = vsub.s32 %v4157, %v4159
        %v4161 = vrot.slane %v4153, %v4160
        %v4163 = vunpack.c.l.s4 1934713408
        %v4164 = vunpack.c.0.s8 %v4163
        %v4165 = vlaneseq
        %v4166 = vshrl.u32 %v4165, 7
        %v4167 = vsub.s32 %v4164, %v4166
        %v4168 = vrot.slane %v4154, %v4167
        %v4169 = vcombine.low %v4145, %v4161
        %v4170 = vcombine.high %v4145, %v4161
        %v4171 = vcombine.low %v4152, %v4168
        %v4172 = vcombine.high %v4152, %v4168
        %4174 = vrot.lane.b32.xlu0 %v4170, 8
        %v4175 = vpop.permute.xlu0 %4174
        %4178 = vrot.lane.b32.xlu0 %v4171, 16
        %v4179 = vpop.permute.xlu0 %4178
        %4182 = vrot.lane.b32.xlu0 %v4172, 24
        %v4183 = vpop.permute.xlu0 %4182
        %v4185 = vsel %vm1815, %v4169, %v4175
        %v4186 = vsel %vm2609, %v4185, %v4179
        %v4187 = vsel %vm2611, %v4186, %v4183
        %v4189 = vlaneseq
        %v4190 = vshrl.u32 %v4189, 7
        %v4191 = vsub.s32 0, %v4190
        %v4192 = vrot.slane %v1124, %v4191
        %v4195 = vsel %vm1151, %v4187, 0
        %4197 = vmatprep.subr.mxu0 0.0
        %4198 = vmatpush1.msra.mxu0 %v1120
        %4199 = vmatprep.subr.mxu0 0.0
        %4200 = vmatpush1.msra.mxu0 %v1121
        %4201 = vmatprep.subr.mxu0 0.0
        %4202 = vmatpush1.msra.mxu0 %v1122
        %4203 = vmatprep.subr.mxu0 0.0
        %4204 = vmatpush1.msra.mxu0 %v1123
        %4205 = vmatprep.subr.mxu0 0.0
        %4206 = vmatpush1.msra.mxu0 0.0
        %4207 = vmatprep.subr.mxu0 0.0
        %4208 = vmatpush1.msra.mxu0 0.0
        %4209 = vmatprep.subr.mxu0 0.0
        %4210 = vmatpush1.msra.mxu0 0.0
        %4211 = vmatprep.subr.mxu0 0.0
        %4212 = vmatpush1.msra.mxu0 0.0
        %4213 = vmatprep.subr.mxu0 0.0
        %4214 = vmatpush1.msra.mxu0 0.0
        %4215 = vmatprep.subr.mxu0 0.0
        %4216 = vmatpush1.msra.mxu0 0.0
        %4217 = vmatprep.subr.mxu0 0.0
        %4218 = vmatpush1.msra.mxu0 0.0
        %4219 = vmatprep.subr.mxu0 0.0
        %4220 = vmatpush1.msra.mxu0 0.0
        %4221 = vmatprep.subr.mxu0 0.0
        %4222 = vmatpush1.msra.mxu0 0.0
        %4223 = vmatprep.subr.mxu0 0.0
        %4224 = vmatpush1.msra.mxu0 0.0
        %4225 = vmatprep.subr.mxu0 0.0
        %4226 = vmatpush1.msra.mxu0 0.0
        %4227 = vmatprep.subr.mxu0 0.0
        %4228 = vmatpush1.msra.mxu0 0.0
        %4229 = vmatprep.subr.mxu0 0.0
        %4230 = vmatpush1.msra.mxu0 0.0
        %4231 = vmatprep.subr.mxu0 0.0
        %4232 = vmatpush1.msra.mxu0 0.0
        %4233 = vmatprep.subr.mxu0 0.0
        %4234 = vmatpush1.msra.mxu0 0.0
        %4235 = vmatprep.subr.mxu0 0.0
        %4236 = vmatpush1.msra.mxu0 0.0
        %4237 = vmatprep.subr.mxu0 0.0
        %4238 = vmatpush1.msra.mxu0 0.0
        %4239 = vmatprep.subr.mxu0 0.0
        %4240 = vmatpush1.msra.mxu0 0.0
        %4241 = vmatprep.subr.mxu0 0.0
        %4242 = vmatpush1.msra.mxu0 0.0
        %4243 = vmatprep.subr.mxu0 0.0
        %4244 = vmatpush1.msra.mxu0 0.0
        %4245 = vmatprep.subr.mxu0 0.0
        %4246 = vmatpush1.msra.mxu0 0.0
        %4247 = vmatprep.subr.mxu0 0.0
        %4248 = vmatpush1.msra.mxu0 0.0
        %4249 = vmatprep.subr.mxu0 0.0
        %4250 = vmatpush1.msra.mxu0 0.0
        %4251 = vmatprep.subr.mxu0 0.0
        %4252 = vmatpush1.msra.mxu0 0.0
        %4253 = vmatprep.subr.mxu0 0.0
        %4254 = vmatpush1.msra.mxu0 0.0
        %4255 = vmatprep.subr.mxu0 0.0
        %4256 = vmatpush1.msra.mxu0 0.0
        %4257 = vmatprep.subr.mxu0 0.0
        %4258 = vmatpush1.msra.mxu0 0.0
        %4259 = vmatprep.subr.mxu0 0.0
        %4260 = vmatpush1.msra.mxu0 0.0
        %4261 = vmatprep.mubr.f32.mxu0 0.0
        %4262 = vmatmul.mubr.f32.gmra.mrb[0].mxu0 %v4195
        %v4263 = vpop.f32.mrb[0].mxu0
        %v4264 = vadd.f32 %v4192, %v4263
        %v4265 = vpop.f32.mrb[0].mxu0
        %4266 = vdwg.mxu0
        %v4267 = vadd.f32 %v2720, %v4264
        %v4268 = vsel %vm1151, %v4267, 0.0
        %4269 = vadd.xlane.f32.xlu0 %v4268
        %v4270 = vpop.xlane.xlu0 %4269
        %v4271 = vmul.f32 %v4270, %v2696
        %v4272 = vsub.f32 %v4267, %v4271
        %v4273 = vmul.f32 %v4272, %v4272
        %v4274 = vsel %vm1151, %v4273, 0.0
        %4275 = vadd.xlane.f32.xlu0 %v4274
        %v4276 = vpop.xlane.xlu0 %4275
        %v4277 = vmul.f32 %v4276, %v2696
        %v4278 = vadd.f32 %v4277, 1e-05
        %v4279 = vrsqrt.pop %v4278
        %v4280 = vmul.f32 %v4272, %v4279
        %v4282 = vlaneseq
        %v4283 = vshrl.u32 %v4282, 7
        %v4284 = vsub.s32 0, %v4283
        %v4285 = vrot.slane %v1125, %v4284
        %v4287 = vmul.f32 %v4280, %v4285
        %v4289 = vlaneseq
        %v4290 = vshrl.u32 %v4289, 7
        %v4291 = vsub.s32 0, %v4290
        %v4292 = vrot.slane %v1126, %v4291
        %v4294 = vadd.f32 %v4287, %v4292
        %v4296 = vlaneseq
        %v4297 = vshrl.u32 %v4296, 7
        %v4298 = vsub.s32 0, %v4297
        %v4299 = vrot.slane %v1131, %v4298
        %v4302 = vsel %vm1151, %v4294, 0
        %4304 = vmatprep.subr.mxu0 0.0
        %4305 = vmatpush1.msra.mxu0 %v1127
        %4306 = vmatprep.subr.mxu0 0.0
        %4307 = vmatpush1.msra.mxu0 %v1128
        %4308 = vmatprep.subr.mxu0 0.0
        %4309 = vmatpush1.msra.mxu0 %v1129
        %4310 = vmatprep.subr.mxu0 0.0
        %4311 = vmatpush1.msra.mxu0 %v1130
        %4312 = vmatprep.subr.mxu0 0.0
        %4313 = vmatpush1.msra.mxu0 0.0
        %4314 = vmatprep.subr.mxu0 0.0
        %4315 = vmatpush1.msra.mxu0 0.0
        %4316 = vmatprep.subr.mxu0 0.0
        %4317 = vmatpush1.msra.mxu0 0.0
        %4318 = vmatprep.subr.mxu0 0.0
        %4319 = vmatpush1.msra.mxu0 0.0
        %4320 = vmatprep.subr.mxu0 0.0
        %4321 = vmatpush1.msra.mxu0 0.0
        %4322 = vmatprep.subr.mxu0 0.0
        %4323 = vmatpush1.msra.mxu0 0.0
        %4324 = vmatprep.subr.mxu0 0.0
        %4325 = vmatpush1.msra.mxu0 0.0
        %4326 = vmatprep.subr.mxu0 0.0
        %4327 = vmatpush1.msra.mxu0 0.0
        %4328 = vmatprep.subr.mxu0 0.0
        %4329 = vmatpush1.msra.mxu0 0.0
        %4330 = vmatprep.subr.mxu0 0.0
        %4331 = vmatpush1.msra.mxu0 0.0
        %4332 = vmatprep.subr.mxu0 0.0
        %4333 = vmatpush1.msra.mxu0 0.0
        %4334 = vmatprep.subr.mxu0 0.0
        %4335 = vmatpush1.msra.mxu0 0.0
        %4336 = vmatprep.subr.mxu0 0.0
        %4337 = vmatpush1.msra.mxu0 0.0
        %4338 = vmatprep.subr.mxu0 0.0
        %4339 = vmatpush1.msra.mxu0 0.0
        %4340 = vmatprep.subr.mxu0 0.0
        %4341 = vmatpush1.msra.mxu0 0.0
        %4342 = vmatprep.subr.mxu0 0.0
        %4343 = vmatpush1.msra.mxu0 0.0
        %4344 = vmatprep.subr.mxu0 0.0
        %4345 = vmatpush1.msra.mxu0 0.0
        %4346 = vmatprep.subr.mxu0 0.0
        %4347 = vmatpush1.msra.mxu0 0.0
        %4348 = vmatprep.subr.mxu0 0.0
        %4349 = vmatpush1.msra.mxu0 0.0
        %4350 = vmatprep.subr.mxu0 0.0
        %4351 = vmatpush1.msra.mxu0 0.0
        %4352 = vmatprep.subr.mxu0 0.0
        %4353 = vmatpush1.msra.mxu0 0.0
        %4354 = vmatprep.subr.mxu0 0.0
        %4355 = vmatpush1.msra.mxu0 0.0
        %4356 = vmatprep.subr.mxu0 0.0
        %4357 = vmatpush1.msra.mxu0 0.0
        %4358 = vmatprep.subr.mxu0 0.0
        %4359 = vmatpush1.msra.mxu0 0.0
        %4360 = vmatprep.subr.mxu0 0.0
        %4361 = vmatpush1.msra.mxu0 0.0
        %4362 = vmatprep.subr.mxu0 0.0
        %4363 = vmatpush1.msra.mxu0 0.0
        %4364 = vmatprep.subr.mxu0 0.0
        %4365 = vmatpush1.msra.mxu0 0.0
        %4366 = vmatprep.subr.mxu0 0.0
        %4367 = vmatpush1.msra.mxu0 0.0
        %4368 = vmatprep.mubr.f32.mxu0 0.0
        %4369 = vmatmul.mubr.f32.gmra.mrb[0].mxu0 %v4302
        %v4370 = vpop.f32.mrb[0].mxu0
        %v4371 = vadd.f32 %v4299, %v4370
        %v4372 = vpop.f32.mrb[0].mxu0
        %4373 = vdwg.mxu0
        %v4374 = vmax.f32 %v4371, 0.0
        %v4376 = vlaneseq
        %v4377 = vshrl.u32 %v4376, 7
        %v4378 = vsub.s32 0, %v4377
        %v4379 = vrot.slane %v1140, %v4378
        %vm4381 = vcmask 523264
        %v4383 = vsel %vm4381, %v4374, 0
        %4385 = vmatprep.subr.mxu0 0.0
        %4386 = vmatpush1.msra.mxu0 %v1132
        %4387 = vmatprep.subr.mxu0 0.0
        %4388 = vmatpush1.msra.mxu0 %v1133
        %4389 = vmatprep.subr.mxu0 0.0
        %4390 = vmatpush1.msra.mxu0 %v1134
        %4391 = vmatprep.subr.mxu0 0.0
        %4392 = vmatpush1.msra.mxu0 %v1135
        %4393 = vmatprep.subr.mxu0 0.0
        %4394 = vmatpush1.msra.mxu0 %v1136
        %4395 = vmatprep.subr.mxu0 0.0
        %4396 = vmatpush1.msra.mxu0 %v1137
        %4397 = vmatprep.subr.mxu0 0.0
        %4398 = vmatpush1.msra.mxu0 %v1138
        %4399 = vmatprep.subr.mxu0 0.0
        %4400 = vmatpush1.msra.mxu0 %v1139
        %4401 = vmatprep.subr.mxu0 0.0
        %4402 = vmatpush1.msra.mxu0 0.0
        %4403 = vmatprep.subr.mxu0 0.0
        %4404 = vmatpush1.msra.mxu0 0.0
        %4405 = vmatprep.subr.mxu0 0.0
        %4406 = vmatpush1.msra.mxu0 0.0
        %4407 = vmatprep.subr.mxu0 0.0
        %4408 = vmatpush1.msra.mxu0 0.0
        %4409 = vmatprep.subr.mxu0 0.0
        %4410 = vmatpush1.msra.mxu0 0.0
        %4411 = vmatprep.subr.mxu0 0.0
        %4412 = vmatpush1.msra.mxu0 0.0
        %4413 = vmatprep.subr.mxu0 0.0
        %4414 = vmatpush1.msra.mxu0 0.0
        %4415 = vmatprep.subr.mxu0 0.0
        %4416 = vmatpush1.msra.mxu0 0.0
        %4417 = vmatprep.subr.mxu0 0.0
        %4418 = vmatpush1.msra.mxu0 0.0
        %4419 = vmatprep.subr.mxu0 0.0
        %4420 = vmatpush1.msra.mxu0 0.0
        %4421 = vmatprep.subr.mxu0 0.0
        %4422 = vmatpush1.msra.mxu0 0.0
        %4423 = vmatprep.subr.mxu0 0.0
        %4424 = vmatpush1.msra.mxu0 0.0
        %4425 = vmatprep.subr.mxu0 0.0
        %4426 = vmatpush1.msra.mxu0 0.0
        %4427 = vmatprep.subr.mxu0 0.0
        %4428 = vmatpush1.msra.mxu0 0.0
        %4429 = vmatprep.subr.mxu0 0.0
        %4430 = vmatpush1.msra.mxu0 0.0
        %4431 = vmatprep.subr.mxu0 0.0
        %4432 = vmatpush1.msra.mxu0 0.0
        %4433 = vmatprep.subr.mxu0 0.0
        %4434 = vmatpush1.msra.mxu0 0.0
        %4435 = vmatprep.subr.mxu0 0.0
        %4436 = vmatpush1.msra.mxu0 0.0
        %4437 = vmatprep.subr.mxu0 0.0
        %4438 = vmatpush1.msra.mxu0 0.0
        %4439 = vmatprep.subr.mxu0 0.0
        %4440 = vmatpush1.msra.mxu0 0.0
        %4441 = vmatprep.subr.mxu0 0.0
        %4442 = vmatpush1.msra.mxu0 0.0
        %4443 = vmatprep.subr.mxu0 0.0
        %4444 = vmatpush1.msra.mxu0 0.0
        %4445 = vmatprep.subr.mxu0 0.0
        %4446 = vmatpush1.msra.mxu0 0.0
        %4447 = vmatprep.subr.mxu0 0.0
        %4448 = vmatpush1.msra.mxu0 0.0
        %4449 = vmatprep.mubr.f32.mxu0 0.0
        %4450 = vmatmul.mubr.f32.gmra.mrb[0].mxu0 %v4383
        %v4451 = vpop.f32.mrb[0].mxu0
        %v4452 = vadd.f32 %v4379, %v4451
        %v4453 = vpop.f32.mrb[0].mxu0
        %4454 = vdwg.mxu0
        %v4455 = vadd.f32 %v4294, %v4452
        %v4456 = vsel %vm1151, %v4455, 0.0
        %4457 = vadd.xlane.f32.xlu0 %v4456
        %v4458 = vpop.xlane.xlu0 %4457
        %v4459 = vmul.f32 %v4458, %v2696
        %v4460 = vsub.f32 %v4455, %v4459
        %v4461 = vmul.f32 %v4460, %v4460
        %v4462 = vsel %vm1151, %v4461, 0.0
        %4463 = vadd.xlane.f32.xlu0 %v4462
        %v4464 = vpop.xlane.xlu0 %4463
        %v4465 = vmul.f32 %v4464, %v2696
        %v4466 = vadd.f32 %v4465, 1e-05
        %v4467 = vrsqrt.pop %v4466
        %v4468 = vmul.f32 %v4460, %v4467
        %v4470 = vlaneseq
        %v4471 = vshrl.u32 %v4470, 7
        %v4472 = vsub.s32 0, %v4471
        %v4473 = vrot.slane %v1141, %v4472
        %v4475 = vmul.f32 %v4468, %v4473
        %v4477 = vlaneseq
        %v4478 = vshrl.u32 %v4477, 7
        %v4479 = vsub.s32 0, %v4478
        %v4480 = vrot.slane %v1142, %v4479
        %v4482 = vadd.f32 %v4475, %v4480
        %v4483 = vsel %vm1151, %v4482, 0.0
        %4484 = vst [vmem:[%s1082] sm:$0xff] %v4483
        %s4485 = sand.u32 %s661, 1
        %s4486 = scalar_lea.sflag [#allocation4], %s4485
        %s4487 = sand.u32 %s661, 1
        %s4488 = smul.addr %s4487, 8
        %s4489 = scalar_lea.vmem [#allocation28], %s4488
        // Predicated region
        $region197: #{tpu_custom_call.1} parent=131 // pred_check
          %p4490 = pneg %p671
        $region198: #{tpu_custom_call.1} parent=131 // pred_check_branch
          %4492 = sbr.rel (%p4490) target = $region200
        $region199: #{tpu_custom_call.1} parent=131 // pred_region
          %s4494 = ssub.s32 128, 128
          %4495 = vsyncadd %s4486, %s4494
          %s4496 = smul.addr %s55, 128
          %s4497 = scalar_lea.hbm %s28, %s4496
          %s4499 = sshll.u32 %s4489, 4
          %s4500 = int_to_ptr.vmem [resolvable:$true] %s4499
          %4502 = dma.vmem_to_hbm [thread:$0]  %s4500, 128, %s4497, %s4486
        $region200: #{tpu_custom_call.1} parent=131 // pred_fallthru
          _
      $region132: #{tpu_custom_call.1} parent=5 // pred_fallthru
        _
      %p4503 = scmp.le.s32.totalorder 2, %s50
      // Predicated region
      $region201: #{tpu_custom_call.1} parent=5 // pred_check
        %p4504 = pneg %p4503
      $region202: #{tpu_custom_call.1} parent=5 // pred_check_branch
        %4506 = sbr.rel (%p4504) target = $region204
      $region203: #{tpu_custom_call.1} parent=5 // pred_region
        %s4507 = ssub.s32 %s50, 2
        // Predicated region
        $region205: #{tpu_custom_call.1} parent=203 // pred_check
          %p4508 = pneg %p677
        $region206: #{tpu_custom_call.1} parent=203 // pred_check_branch
          %4510 = sbr.rel (%p4508) target = $region208
        $region207: #{tpu_custom_call.1} parent=203 // pred_region
          %s4511 = sand.u32 %s662, 1
          %s4512 = scalar_lea.sflag [#allocation4], %s4511
          %s4513 = sand.u32 %s662, 1
          %s4514 = smul.addr %s4513, 8
          %s4515 = scalar_lea.vmem [#allocation28], %s4514
          %4516 = dma.done %s4512, 128
        $region208: #{tpu_custom_call.1} parent=203 // pred_fallthru
          _
      $region204: #{tpu_custom_call.1} parent=5 // pred_fallthru
        _
    $region6: #{tpu_custom_call.1} parent=1 // loop_footer
      %s54 = sadd.s32 1, %s50
    $region7: #{tpu_custom_call.1} parent=1 // loop_footer_branch
      %49 = sbr.rel target = $region3
    $region8: #{tpu_custom_call.1} parent=1 // loop_exit
      _
    %4517 = vsyncpa [#allocation3], 1
    %s4518 = scalar_lea.sflag [#allocation3], 1
    %4519 = vsyncpa %s4518, 1
    %4520 = vsyncpa [#allocation6], 1
    %s4521 = scalar_lea.sflag [#allocation6], 1
    %4522 = vsyncpa %s4521, 1
    %4523 = vsyncpa [#allocation9], 1
    %4524 = vsyncpa [#allocation12], 1
    %4525 = vsyncpa [#allocation15], 1
    %4526 = vsyncpa [#allocation18], 1
    %4527 = vsyncpa [#allocation21], 1
    %4528 = vsyncpa [#allocation24], 1
    %4529 = vsyncpa [#allocation27], 1
    %4530 = vsyncpa [#allocation4], 1
    %s4531 = scalar_lea.sflag [#allocation4], 1
    %4532 = vsyncpa %s4531, 1

</llo_original>
